<compile_context>
chip_gen: v5e
topology: v5e:2x2
jax: 0.10.0
libtpu: 0.0.40
codegen_flags: <defaults>
</compile_context>

<pallas_src>
import functools

import jax
import jax.numpy as jnp
from jax.experimental import pallas as pl
from jax.experimental.pallas import tpu as pltpu

NUM_CLASSES = 46
PADDED_CLASSES = 128   # pad class (lane) axis to 128 for vreg/MXU layout
BATCH_TILE = 8         # per-step batch tile: lane-padded bf16 x tile ~4 MiB per
                       # buffer -> double-buffered + reduce intermediates stay
                       # well under 32 MiB scoped VMEM on every generation.


def _head_kernel(num_classes, x_ref, w_ref, b_ref, lbl_ref, logits_ref, loss_ref):
    """One batch tile of GAP + Linear + per-example cross-entropy.

    x_ref      : (TB, C, HW) bf16  backbone features (NCHW, spatial flattened)
    w_ref      : (C, CP)     bf16  fc weight, transposed & class-padded
    b_ref      : (1, CP)     f32   fc bias (zeros in pad columns)
    lbl_ref    : (TB, 1)     i32   labels
    logits_ref : (TB, CP)    bf16  logits (pad columns hold bias only)
    loss_ref   : (TB, 1)     f32   per-example NLL
    """
    hw = x_ref.shape[-1]
    # AdaptiveAvgPool2d(1): f32-accumulating sum over the spatial (lane) axis;
    # no full-tile f32 upcast is materialized in VMEM.
    pooled = jnp.sum(x_ref[...], axis=-1, dtype=jnp.float32) * (1.0 / hw)  # (TB, C)

    # autocast analog: bf16 matmul on the MXU, f32 accumulation.
    logits = jnp.dot(pooled.astype(jnp.bfloat16), w_ref[...],
                     preferred_element_type=jnp.float32) + b_ref[...]      # (TB, CP)
    logits_ref[...] = logits.astype(logits_ref.dtype)

    # CrossEntropyLoss over the real (unpadded) classes only.
    col = jax.lax.broadcasted_iota(jnp.int32, logits.shape, 1)
    masked = jnp.where(col < num_classes, logits, jnp.float32(-1e30))
    m = jnp.max(masked, axis=-1, keepdims=True)                            # (TB, 1)
    lse = m + jnp.log(jnp.sum(jnp.exp(masked - m), axis=-1, keepdims=True))
    tgt = jnp.sum(jnp.where(col == lbl_ref[...], logits, 0.0),
                  axis=-1, keepdims=True)                                  # (TB, 1)
    loss_ref[...] = lse - tgt


def prepare_cls_params(fc_w, fc_b):
    """Pad fc params once (hoisted out of the per-forward path).

    fc_w: (NUM_CLASSES, C) like nn.Linear.weight; fc_b: (NUM_CLASSES,).
    """
    c = fc_w.shape[1]
    w_pad = jnp.zeros((c, PADDED_CLASSES), jnp.bfloat16)
    w_pad = w_pad.at[:, :NUM_CLASSES].set(fc_w.T.astype(jnp.bfloat16))
    b_pad = jnp.zeros((1, PADDED_CLASSES), jnp.float32)
    b_pad = b_pad.at[0, :NUM_CLASSES].set(fc_b.astype(jnp.float32))
    return w_pad, b_pad


def cls_head_forward(feats_nchw, y, w_pad, b_pad, training=True):
    """feats_nchw: (B, C, H, W) backbone output (bf16 preferred, per autocast);
    y: (B,) int labels; (w_pad, b_pad) from prepare_cls_params().
    Returns (logits, loss) in training mode, logits otherwise.
    """
    B, C, H, W = feats_nchw.shape
    HW = H * W

    x = feats_nchw.reshape(B, C, HW)            # free reshape, NO transpose
    if x.dtype != jnp.bfloat16:                 # backbone should already emit bf16
        x = x.astype(jnp.bfloat16)
    labels = y.astype(jnp.int32).reshape(B, 1)

    tb = min(BATCH_TILE, B)
    padded_b = pl.cdiv(B, tb) * tb
    if padded_b != B:                           # pad rows are ignored downstream
        x = jnp.pad(x, ((0, padded_b - B), (0, 0), (0, 0)))
        labels = jnp.pad(labels, ((0, padded_b - B), (0, 0)))

    kernel = functools.partial(_head_kernel, NUM_CLASSES)
    logits_pad, per_ex = pl.pallas_call(
        kernel,
        grid=(padded_b // tb,),
        in_specs=[
            pl.BlockSpec((tb, C, HW), lambda b: (b, 0, 0)),
            pl.BlockSpec((C, PADDED_CLASSES), lambda b: (0, 0)),
            pl.BlockSpec((1, PADDED_CLASSES), lambda b: (0, 0)),
            pl.BlockSpec((tb, 1), lambda b: (b, 0)),
        ],
        out_specs=[
            pl.BlockSpec((tb, PADDED_CLASSES), lambda b: (b, 0)),
            pl.BlockSpec((tb, 1), lambda b: (b, 0)),
        ],
        out_shape=(
            jax.ShapeDtypeStruct((padded_b, PADDED_CLASSES), jnp.bfloat16),
            jax.ShapeDtypeStruct((padded_b, 1), jnp.float32),
        ),
        compiler_params=pltpu.CompilerParams(
            dimension_semantics=("parallel",),
            vmem_limit_bytes=32 * 1024 * 1024),
    )(x, w_pad, b_pad, labels)

    logits = logits_pad[:B, :NUM_CLASSES]
    if training:
        loss = jnp.mean(per_ex[:B, 0])          # mean over the TRUE batch size
        return logits, loss
    return logits


def _reference(feats_nchw, y, fc_w, fc_b):
    """Pure-JAX reference mirroring the kernel's precision choices."""
    B, C, H, W = feats_nchw.shape
    xf = feats_nchw.reshape(B, C, H * W).astype(jnp.float32)
    pooled = jnp.mean(xf, axis=-1)
    logits = jnp.dot(pooled.astype(jnp.bfloat16), fc_w.T.astype(jnp.bfloat16),
                     preferred_element_type=jnp.float32) + fc_b.astype(jnp.float32)
    lse = jax.nn.logsumexp(logits, axis=-1)
    tgt = jnp.take_along_axis(logits, y[:, None], axis=-1)[:, 0]
    return logits, jnp.mean(lse - tgt)


if __name__ == "__main__":
    key = jax.random.PRNGKey(0)
    k_feat, k_w, k_b, k_y = jax.random.split(key, 4)

    B, C, H, W = 2, 512 * 4, 7, 7  # resnet50 branch: fc = Linear(512*4, 46)
    # Backbone output under autocast -> half-precision activations (bf16 on TPU).
    feats = jax.random.normal(k_feat, (B, C, H, W), dtype=jnp.float32).astype(jnp.bfloat16)
    fc_w = jax.random.normal(k_w, (NUM_CLASSES, C), dtype=jnp.float32) * 0.02
    fc_b = jax.random.normal(k_b, (NUM_CLASSES,), dtype=jnp.float32) * 0.02
    y = jax.random.randint(k_y, (B,), 0, NUM_CLASSES)

    w_pad, b_pad = prepare_cls_params(fc_w, fc_b)   # one-time parameter prep
    logits, loss = cls_head_forward(feats, y, w_pad, b_pad, training=True)
    jax.block_until_ready((logits, loss))

    ref_logits, ref_loss = _reference(feats, y, fc_w, fc_b)
    assert logits.shape == (B, NUM_CLASSES)
    assert jnp.allclose(logits.astype(jnp.float32), ref_logits, atol=5e-2, rtol=5e-2)
    assert jnp.allclose(loss, ref_loss, atol=5e-2, rtol=5e-2)

    print("KERNEL_OK")
</pallas_src>

<mosaic_0001>
module attributes {stable_mosaic.version = 11 : i64} {
  func.func @_head_kernel(%arg0: i32, %arg1: memref<2x2048x49xbf16, #tpu.memory_space<vmem>>, %arg2: memref<2048x128xbf16, #tpu.memory_space<vmem>>, %arg3: memref<1x128xf32, #tpu.memory_space<vmem>>, %arg4: memref<2x1xi32, #tpu.memory_space<vmem>>, %arg5: memref<2x128xbf16, #tpu.memory_space<vmem>>, %arg6: memref<2x1xf32, #tpu.memory_space<vmem>>) attributes {dimension_semantics = [#tpu.dimension_semantics<parallel>], iteration_bounds = array<i64: 1>, scalar_prefetch = 0 : i64, scratch_operands = 0 : i64, tpu.core_type = #tpu.core_type<tc>, window_params = [{transform_indices = @transform_0, window_bounds = array<i64: 2, 2048, 49>}, {pipeline_mode = #tpu.pipeline_mode<synchronous>, transform_indices = @transform_1, window_bounds = array<i64: 2048, 128>}, {pipeline_mode = #tpu.pipeline_mode<synchronous>, transform_indices = @transform_2, window_bounds = array<i64: 1, 128>}, {transform_indices = @transform_3, window_bounds = array<i64: 2, 1>}, {transform_indices = @transform_4, window_bounds = array<i64: 2, 128>}, {transform_indices = @transform_5, window_bounds = array<i64: 2, 1>}]} {
    %c0 = arith.constant 0 : index
    %c0_0 = arith.constant 0 : index
    %c0_1 = arith.constant 0 : index
    %0 = vector.load %arg1[%c0, %c0_0, %c0_1] : memref<2x2048x49xbf16, #tpu.memory_space<vmem>>, vector<2x2048x49xbf16>
    %1 = arith.extf %0 : vector<2x2048x49xbf16> to vector<2x2048x49xf32>
    %cst = arith.constant dense<0.000000e+00> : vector<2x2048xf32>
    %2 = vector.multi_reduction <add>, %1, %cst [2] : vector<2x2048x49xf32> to vector<2x2048xf32>
    %cst_2 = arith.constant 0.0204081628 : f32
    %3 = vector.broadcast %cst_2 : f32 to vector<2x2048xf32>
    %4 = arith.mulf %2, %3 : vector<2x2048xf32>
    %5 = arith.truncf %4 : vector<2x2048xf32> to vector<2x2048xbf16>
    %c0_3 = arith.constant 0 : index
    %c0_4 = arith.constant 0 : index
    %6 = vector.load %arg2[%c0_3, %c0_4] : memref<2048x128xbf16, #tpu.memory_space<vmem>>, vector<2048x128xbf16>
    %cst_5 = arith.constant dense<0.000000e+00> : vector<2x128xf32>
    %7 = tpu.matmul %5, %6, %cst_5 {dimension_numbers = #tpu.dot_dimension_numbers<[1], [0], [0], [1], [0, 0, 1, 1], [], []>} : vector<2x2048xbf16>, vector<2048x128xbf16>, vector<2x128xf32> -> vector<2x128xf32>
    %c0_6 = arith.constant 0 : index
    %c0_7 = arith.constant 0 : index
    %8 = vector.load %arg3[%c0_6, %c0_7] : memref<1x128xf32, #tpu.memory_space<vmem>>, vector<1x128xf32>
    %9 = vector.broadcast %8 : vector<1x128xf32> to vector<2x128xf32>
    %10 = arith.addf %7, %9 : vector<2x128xf32>
    %11 = arith.truncf %10 : vector<2x128xf32> to vector<2x128xbf16>
    %c0_8 = arith.constant 0 : index
    %c0_9 = arith.constant 0 : index
    %12 = vector.load %arg5[%c0_8, %c0_9] : memref<2x128xbf16, #tpu.memory_space<vmem>>, vector<2x128xbf16>
    tpu.vector_store %arg5[%c0_8, %c0_9], %11 {strides = array<i32>} : memref<2x128xbf16, #tpu.memory_space<vmem>>, vector<2x128xbf16>,
    %13 = tpu.iota {dimensions = array<i32: 1>} : vector<2x128xi32>
    %c46_i32 = arith.constant 46 : i32
    %14 = vector.broadcast %c46_i32 : i32 to vector<2x128xi32>
    %15 = arith.cmpi slt, %13, %14 : vector<2x128xi32>
    %cst_10 = arith.constant -1.000000e+30 : f32
    %16 = vector.broadcast %cst_10 : f32 to vector<2x128xf32>
    %17 = arith.select %15, %10, %16 : vector<2x128xi1>, vector<2x128xf32>
    %cst_11 = arith.constant dense<0xFF800000> : vector<2xf32>
    %18 = vector.multi_reduction <maximumf>, %17, %cst_11 [1] : vector<2x128xf32> to vector<2xf32>
    %19 = vector.shape_cast %18 : vector<2xf32> to vector<2x1xf32>
    %20 = vector.broadcast %19 : vector<2x1xf32> to vector<2x128xf32>
    %21 = arith.subf %17, %20 : vector<2x128xf32>
    %22 = math.exp %21 : vector<2x128xf32>
    %cst_12 = arith.constant dense<0.000000e+00> : vector<2xf32>
    %23 = vector.multi_reduction <add>, %22, %cst_12 [1] : vector<2x128xf32> to vector<2xf32>
    %24 = vector.shape_cast %23 : vector<2xf32> to vector<2x1xf32>
    %25 = math.log %24 : vector<2x1xf32>
    %26 = arith.addf %19, %25 : vector<2x1xf32>
    %c0_13 = arith.constant 0 : index
    %c0_14 = arith.constant 0 : index
    %27 = vector.load %arg4[%c0_13, %c0_14] : memref<2x1xi32, #tpu.memory_space<vmem>>, vector<2x1xi32>
    %28 = vector.broadcast %27 : vector<2x1xi32> to vector<2x128xi32>
    %29 = arith.cmpi eq, %13, %28 : vector<2x128xi32>
    %cst_15 = arith.constant 0.000000e+00 : f32
    %30 = vector.broadcast %cst_15 : f32 to vector<2x128xf32>
    %31 = arith.select %29, %10, %30 : vector<2x128xi1>, vector<2x128xf32>
    %cst_16 = arith.constant dense<0.000000e+00> : vector<2xf32>
    %32 = vector.multi_reduction <add>, %31, %cst_16 [1] : vector<2x128xf32> to vector<2xf32>
    %33 = vector.shape_cast %32 : vector<2xf32> to vector<2x1xf32>
    %34 = arith.subf %26, %33 : vector<2x1xf32>
    %c0_17 = arith.constant 0 : index
    %c0_18 = arith.constant 0 : index
    %35 = vector.load %arg6[%c0_17, %c0_18] : memref<2x1xf32, #tpu.memory_space<vmem>>, vector<2x1xf32>
    tpu.vector_store %arg6[%c0_17, %c0_18], %34 {strides = array<i32>} : memref<2x1xf32, #tpu.memory_space<vmem>>, vector<2x1xf32>,
    return
  }
  func.func @transform_0(%arg0: i32) -> (i32, i32, i32) {
    %c0_i32 = arith.constant 0 : i32
    %c0_i32_0 = arith.constant 0 : i32
    %c0_i32_1 = arith.constant 0 : i32
    return %arg0, %c0_i32, %c0_i32_0 : i32, i32, i32
  }
  func.func @transform_1(%arg0: i32) -> (i32, i32) {
    %c0_i32 = arith.constant 0 : i32
    %c0_i32_0 = arith.constant 0 : i32
    %c0_i32_1 = arith.constant 0 : i32
    return %c0_i32, %c0_i32_0 : i32, i32
  }
  func.func @transform_2(%arg0: i32) -> (i32, i32) {
    %c0_i32 = arith.constant 0 : i32
    %c0_i32_0 = arith.constant 0 : i32
    %c0_i32_1 = arith.constant 0 : i32
    return %c0_i32, %c0_i32_0 : i32, i32
  }
  func.func @transform_3(%arg0: i32) -> (i32, i32) {
    %c0_i32 = arith.constant 0 : i32
    %c0_i32_0 = arith.constant 0 : i32
    return %arg0, %c0_i32 : i32, i32
  }
  func.func @transform_4(%arg0: i32) -> (i32, i32) {
    %c0_i32 = arith.constant 0 : i32
    %c0_i32_0 = arith.constant 0 : i32
    return %arg0, %c0_i32 : i32, i32
  }
  func.func @transform_5(%arg0: i32) -> (i32, i32) {
    %c0_i32 = arith.constant 0 : i32
    %c0_i32_0 = arith.constant 0 : i32
    return %arg0, %c0_i32 : i32, i32
  }
}

</mosaic_0001>

<llo_original>
// kernel: tpu_custom_call.1
$region0: #{tpu_custom_call.1}
  #allocation0 [shape = 'u32[]', space=smem, size = 0x4, offset = 0x4, fixed_abs, tag = 'smem constant byte address 0x4 - core index']
  #allocation1 [shape = 'u32[72,128]{1,0:T(1,128)}', space=vmem, size = 0x9000, scoped, tag = 'internal scratch']
  %s0 = inlined_call_operand.vmem [shape: bf16[2,2048,49], index: 0, kind: input, shape index: {}]
  %s1 = inlined_call_operand.vmem [shape: bf16[2048,128], index: 1, kind: input, shape index: {}]
  %s2 = inlined_call_operand.vmem [shape: f32[1,128], index: 2, kind: input, shape index: {}]
  %s3 = inlined_call_operand.vmem [shape: s32[2,1], index: 3, kind: input, shape index: {}]
  %s4 = inlined_call_operand.hbm [shape: bf16[2,128], index: 4, kind: output, shape index: {0}]
  %s5 = inlined_call_operand.vmem [shape: f32[2,1], index: 5, kind: output, shape index: {1}]
  %6 = xla_tuple %s4, %s5
  %s7 = sld [smem:[#allocation0]]
  $region34: #{tpu_custom_call.1} parent=0
    _
  %s9 = ssub.s32 1, %s7
  %s10 = scalar_select 0, %s9, %s7
  $region1: #{tpu_custom_call.1} parent=0
    #allocation2 [shape = 'u8[512]{0}', space=vmem, size = 0x400, scoped, tag = 'output window, operand 0, single buffered']
    #allocation3 [shape = 's32[1]{0}', space=sflag, size = 0x4, scoped, tag = 'scoped memory for tpu_custom_call.1']
    %11 = vsyncpa [#allocation3], 0
    // Predicated region
    $region2: #{tpu_custom_call.1} parent=1 // pred_check
      _
    $region3: #{tpu_custom_call.1} parent=1 // pred_check_branch
      %13 = sbr.rel (0) target = $region5
    $region4: #{tpu_custom_call.1} parent=1 // pred_region
      _
    $region5: #{tpu_custom_call.1} parent=1 // pred_fallthru
      _
    // Predicated region
    $region6: #{tpu_custom_call.1} parent=1 // pred_check
      _
    $region7: #{tpu_custom_call.1} parent=1 // pred_check_branch
      %15 = sbr.rel (0) target = $region9
    $region8: #{tpu_custom_call.1} parent=1 // pred_region
      _
    $region9: #{tpu_custom_call.1} parent=1 // pred_fallthru
      _
    // Predicated region
    $region10: #{tpu_custom_call.1} parent=1 // pred_check
      _
    $region11: #{tpu_custom_call.1} parent=1 // pred_check_branch
      %17 = sbr.rel (0) target = $region13
    $region12: #{tpu_custom_call.1} parent=1 // pred_region
      _
    $region13: #{tpu_custom_call.1} parent=1 // pred_fallthru
      _
    // Predicated region
    $region14: #{tpu_custom_call.1} parent=1 // pred_check
      _
    $region15: #{tpu_custom_call.1} parent=1 // pred_check_branch
      %19 = sbr.rel (0) target = $region17
    $region16: #{tpu_custom_call.1} parent=1 // pred_region
      _
    $region17: #{tpu_custom_call.1} parent=1 // pred_fallthru
      _
    %v20 = vld [vmem:[%s0] sm:$0xf]
    %v21 = vld [vmem:[%s0 + $0x4] sm:$0xf]
    %v22 = vld [vmem:[%s0 + $0x8] sm:$0xf]
    %v23 = vld [vmem:[%s0 + $0xc] sm:$0xf]
    %v24 = vld [vmem:[%s0 + $0x10] sm:$0xf]
    %v25 = vld [vmem:[%s0 + $0x14] sm:$0xf]
    %v26 = vld [vmem:[%s0 + $0x18] sm:$0xf]
    %v27 = vld [vmem:[%s0 + $0x1c] sm:$0xf]
    %v28 = vld [vmem:[%s0 + $0x20] sm:$0xf]
    %v29 = vld [vmem:[%s0 + $0x24] sm:$0xf]
    %v30 = vld [vmem:[%s0 + $0x28] sm:$0xf]
    %v31 = vld [vmem:[%s0 + $0x2c] sm:$0xf]
    %v32 = vld [vmem:[%s0 + $0x30] sm:$0xf]
    %v33 = vld [vmem:[%s0 + $0x34] sm:$0xf]
    %v34 = vld [vmem:[%s0 + $0x38] sm:$0xf]
    %v35 = vld [vmem:[%s0 + $0x3c] sm:$0xf]
    %v36 = vld [vmem:[%s0 + $0x40] sm:$0xf]
    %v37 = vld [vmem:[%s0 + $0x44] sm:$0xf]
    %v38 = vld [vmem:[%s0 + $0x48] sm:$0xf]
    %v39 = vld [vmem:[%s0 + $0x4c] sm:$0xf]
    %v40 = vld [vmem:[%s0 + $0x50] sm:$0xf]
    %v41 = vld [vmem:[%s0 + $0x54] sm:$0xf]
    %v42 = vld [vmem:[%s0 + $0x58] sm:$0xf]
    %v43 = vld [vmem:[%s0 + $0x5c] sm:$0xf]
    %v44 = vld [vmem:[%s0 + $0x60] sm:$0xf]
    %v45 = vld [vmem:[%s0 + $0x64] sm:$0xf]
    %v46 = vld [vmem:[%s0 + $0x68] sm:$0xf]
    %v47 = vld [vmem:[%s0 + $0x6c] sm:$0xf]
    %v48 = vld [vmem:[%s0 + $0x70] sm:$0xf]
    %v49 = vld [vmem:[%s0 + $0x74] sm:$0xf]
    %v50 = vld [vmem:[%s0 + $0x78] sm:$0xf]
    %v51 = vld [vmem:[%s0 + $0x7c] sm:$0xf]
    %v52 = vld [vmem:[%s0 + $0x80] sm:$0xf]
    %v53 = vld [vmem:[%s0 + $0x84] sm:$0xf]
    %v54 = vld [vmem:[%s0 + $0x88] sm:$0xf]
    %v55 = vld [vmem:[%s0 + $0x8c] sm:$0xf]
    %v56 = vld [vmem:[%s0 + $0x90] sm:$0xf]
    %v57 = vld [vmem:[%s0 + $0x94] sm:$0xf]
    %v58 = vld [vmem:[%s0 + $0x98] sm:$0xf]
    %v59 = vld [vmem:[%s0 + $0x9c] sm:$0xf]
    %v60 = vld [vmem:[%s0 + $0xa0] sm:$0xf]
    %v61 = vld [vmem:[%s0 + $0xa4] sm:$0xf]
    %v62 = vld [vmem:[%s0 + $0xa8] sm:$0xf]
    %v63 = vld [vmem:[%s0 + $0xac] sm:$0xf]
    %v64 = vld [vmem:[%s0 + $0xb0] sm:$0xf]
    %v65 = vld [vmem:[%s0 + $0xb4] sm:$0xf]
    %v66 = vld [vmem:[%s0 + $0xb8] sm:$0xf]
    %v67 = vld [vmem:[%s0 + $0xbc] sm:$0xf]
    %v68 = vld [vmem:[%s0 + $0xc0] sm:$0xf]
    %v69 = vld [vmem:[%s0 + $0xc4] sm:$0xf]
    %v70 = vld [vmem:[%s0 + $0xc8] sm:$0xf]
    %v71 = vld [vmem:[%s0 + $0xcc] sm:$0xf]
    %v72 = vld [vmem:[%s0 + $0xd0] sm:$0xf]
    %v73 = vld [vmem:[%s0 + $0xd4] sm:$0xf]
    %v74 = vld [vmem:[%s0 + $0xd8] sm:$0xf]
    %v75 = vld [vmem:[%s0 + $0xdc] sm:$0xf]
    %v76 = vld [vmem:[%s0 + $0xe0] sm:$0xf]
    %v77 = vld [vmem:[%s0 + $0xe4] sm:$0xf]
    %v78 = vld [vmem:[%s0 + $0xe8] sm:$0xf]
    %v79 = vld [vmem:[%s0 + $0xec] sm:$0xf]
    %v80 = vld [vmem:[%s0 + $0xf0] sm:$0xf]
    %v81 = vld [vmem:[%s0 + $0xf4] sm:$0xf]
    %v82 = vld [vmem:[%s0 + $0xf8] sm:$0xf]
    %v83 = vld [vmem:[%s0 + $0xfc] sm:$0xf]
    %v84 = vld [vmem:[%s0 + $0x100] sm:$0xf]
    %v85 = vld [vmem:[%s0 + $0x104] sm:$0xf]
    %v86 = vld [vmem:[%s0 + $0x108] sm:$0xf]
    %v87 = vld [vmem:[%s0 + $0x10c] sm:$0xf]
    %v88 = vld [vmem:[%s0 + $0x110] sm:$0xf]
    %v89 = vld [vmem:[%s0 + $0x114] sm:$0xf]
    %v90 = vld [vmem:[%s0 + $0x118] sm:$0xf]
    %v91 = vld [vmem:[%s0 + $0x11c] sm:$0xf]
    %v92 = vld [vmem:[%s0 + $0x120] sm:$0xf]
    %v93 = vld [vmem:[%s0 + $0x124] sm:$0xf]
    %v94 = vld [vmem:[%s0 + $0x128] sm:$0xf]
    %v95 = vld [vmem:[%s0 + $0x12c] sm:$0xf]
    %v96 = vld [vmem:[%s0 + $0x130] sm:$0xf]
    %v97 = vld [vmem:[%s0 + $0x134] sm:$0xf]
    %v98 = vld [vmem:[%s0 + $0x138] sm:$0xf]
    %v99 = vld [vmem:[%s0 + $0x13c] sm:$0xf]
    %v100 = vld [vmem:[%s0 + $0x140] sm:$0xf]
    %v101 = vld [vmem:[%s0 + $0x144] sm:$0xf]
    %v102 = vld [vmem:[%s0 + $0x148] sm:$0xf]
    %v103 = vld [vmem:[%s0 + $0x14c] sm:$0xf]
    %v104 = vld [vmem:[%s0 + $0x150] sm:$0xf]
    %v105 = vld [vmem:[%s0 + $0x154] sm:$0xf]
    %v106 = vld [vmem:[%s0 + $0x158] sm:$0xf]
    %v107 = vld [vmem:[%s0 + $0x15c] sm:$0xf]
    %v108 = vld [vmem:[%s0 + $0x160] sm:$0xf]
    %v109 = vld [vmem:[%s0 + $0x164] sm:$0xf]
    %v110 = vld [vmem:[%s0 + $0x168] sm:$0xf]
    %v111 = vld [vmem:[%s0 + $0x16c] sm:$0xf]
    %v112 = vld [vmem:[%s0 + $0x170] sm:$0xf]
    %v113 = vld [vmem:[%s0 + $0x174] sm:$0xf]
    %v114 = vld [vmem:[%s0 + $0x178] sm:$0xf]
    %v115 = vld [vmem:[%s0 + $0x17c] sm:$0xf]
    %v116 = vld [vmem:[%s0 + $0x180] sm:$0xf]
    %v117 = vld [vmem:[%s0 + $0x184] sm:$0xf]
    %v118 = vld [vmem:[%s0 + $0x188] sm:$0xf]
    %v119 = vld [vmem:[%s0 + $0x18c] sm:$0xf]
    %v120 = vld [vmem:[%s0 + $0x190] sm:$0xf]
    %v121 = vld [vmem:[%s0 + $0x194] sm:$0xf]
    %v122 = vld [vmem:[%s0 + $0x198] sm:$0xf]
    %v123 = vld [vmem:[%s0 + $0x19c] sm:$0xf]
    %v124 = vld [vmem:[%s0 + $0x1a0] sm:$0xf]
    %v125 = vld [vmem:[%s0 + $0x1a4] sm:$0xf]
    %v126 = vld [vmem:[%s0 + $0x1a8] sm:$0xf]
    %v127 = vld [vmem:[%s0 + $0x1ac] sm:$0xf]
    %v128 = vld [vmem:[%s0 + $0x1b0] sm:$0xf]
    %v129 = vld [vmem:[%s0 + $0x1b4] sm:$0xf]
    %v130 = vld [vmem:[%s0 + $0x1b8] sm:$0xf]
    %v131 = vld [vmem:[%s0 + $0x1bc] sm:$0xf]
    %v132 = vld [vmem:[%s0 + $0x1c0] sm:$0xf]
    %v133 = vld [vmem:[%s0 + $0x1c4] sm:$0xf]
    %v134 = vld [vmem:[%s0 + $0x1c8] sm:$0xf]
    %v135 = vld [vmem:[%s0 + $0x1cc] sm:$0xf]
    %v136 = vld [vmem:[%s0 + $0x1d0] sm:$0xf]
    %v137 = vld [vmem:[%s0 + $0x1d4] sm:$0xf]
    %v138 = vld [vmem:[%s0 + $0x1d8] sm:$0xf]
    %v139 = vld [vmem:[%s0 + $0x1dc] sm:$0xf]
    %v140 = vld [vmem:[%s0 + $0x1e0] sm:$0xf]
    %v141 = vld [vmem:[%s0 + $0x1e4] sm:$0xf]
    %v142 = vld [vmem:[%s0 + $0x1e8] sm:$0xf]
    %v143 = vld [vmem:[%s0 + $0x1ec] sm:$0xf]
    %v144 = vld [vmem:[%s0 + $0x1f0] sm:$0xf]
    %v145 = vld [vmem:[%s0 + $0x1f4] sm:$0xf]
    %v146 = vld [vmem:[%s0 + $0x1f8] sm:$0xf]
    %v147 = vld [vmem:[%s0 + $0x1fc] sm:$0xf]
    %v148 = vld [vmem:[%s0 + $0x200] sm:$0xf]
    %v149 = vld [vmem:[%s0 + $0x204] sm:$0xf]
    %v150 = vld [vmem:[%s0 + $0x208] sm:$0xf]
    %v151 = vld [vmem:[%s0 + $0x20c] sm:$0xf]
    %v152 = vld [vmem:[%s0 + $0x210] sm:$0xf]
    %v153 = vld [vmem:[%s0 + $0x214] sm:$0xf]
    %v154 = vld [vmem:[%s0 + $0x218] sm:$0xf]
    %v155 = vld [vmem:[%s0 + $0x21c] sm:$0xf]
    %v156 = vld [vmem:[%s0 + $0x220] sm:$0xf]
    %v157 = vld [vmem:[%s0 + $0x224] sm:$0xf]
    %v158 = vld [vmem:[%s0 + $0x228] sm:$0xf]
    %v159 = vld [vmem:[%s0 + $0x22c] sm:$0xf]
    %v160 = vld [vmem:[%s0 + $0x230] sm:$0xf]
    %v161 = vld [vmem:[%s0 + $0x234] sm:$0xf]
    %v162 = vld [vmem:[%s0 + $0x238] sm:$0xf]
    %v163 = vld [vmem:[%s0 + $0x23c] sm:$0xf]
    %v164 = vld [vmem:[%s0 + $0x240] sm:$0xf]
    %v165 = vld [vmem:[%s0 + $0x244] sm:$0xf]
    %v166 = vld [vmem:[%s0 + $0x248] sm:$0xf]
    %v167 = vld [vmem:[%s0 + $0x24c] sm:$0xf]
    %v168 = vld [vmem:[%s0 + $0x250] sm:$0xf]
    %v169 = vld [vmem:[%s0 + $0x254] sm:$0xf]
    %v170 = vld [vmem:[%s0 + $0x258] sm:$0xf]
    %v171 = vld [vmem:[%s0 + $0x25c] sm:$0xf]
    %v172 = vld [vmem:[%s0 + $0x260] sm:$0xf]
    %v173 = vld [vmem:[%s0 + $0x264] sm:$0xf]
    %v174 = vld [vmem:[%s0 + $0x268] sm:$0xf]
    %v175 = vld [vmem:[%s0 + $0x26c] sm:$0xf]
    %v176 = vld [vmem:[%s0 + $0x270] sm:$0xf]
    %v177 = vld [vmem:[%s0 + $0x274] sm:$0xf]
    %v178 = vld [vmem:[%s0 + $0x278] sm:$0xf]
    %v179 = vld [vmem:[%s0 + $0x27c] sm:$0xf]
    %v180 = vld [vmem:[%s0 + $0x280] sm:$0xf]
    %v181 = vld [vmem:[%s0 + $0x284] sm:$0xf]
    %v182 = vld [vmem:[%s0 + $0x288] sm:$0xf]
    %v183 = vld [vmem:[%s0 + $0x28c] sm:$0xf]
    %v184 = vld [vmem:[%s0 + $0x290] sm:$0xf]
    %v185 = vld [vmem:[%s0 + $0x294] sm:$0xf]
    %v186 = vld [vmem:[%s0 + $0x298] sm:$0xf]
    %v187 = vld [vmem:[%s0 + $0x29c] sm:$0xf]
    %v188 = vld [vmem:[%s0 + $0x2a0] sm:$0xf]
    %v189 = vld [vmem:[%s0 + $0x2a4] sm:$0xf]
    %v190 = vld [vmem:[%s0 + $0x2a8] sm:$0xf]
    %v191 = vld [vmem:[%s0 + $0x2ac] sm:$0xf]
    %v192 = vld [vmem:[%s0 + $0x2b0] sm:$0xf]
    %v193 = vld [vmem:[%s0 + $0x2b4] sm:$0xf]
    %v194 = vld [vmem:[%s0 + $0x2b8] sm:$0xf]
    %v195 = vld [vmem:[%s0 + $0x2bc] sm:$0xf]
    %v196 = vld [vmem:[%s0 + $0x2c0] sm:$0xf]
    %v197 = vld [vmem:[%s0 + $0x2c4] sm:$0xf]
    %v198 = vld [vmem:[%s0 + $0x2c8] sm:$0xf]
    %v199 = vld [vmem:[%s0 + $0x2cc] sm:$0xf]
    %v200 = vld [vmem:[%s0 + $0x2d0] sm:$0xf]
    %v201 = vld [vmem:[%s0 + $0x2d4] sm:$0xf]
    %v202 = vld [vmem:[%s0 + $0x2d8] sm:$0xf]
    %v203 = vld [vmem:[%s0 + $0x2dc] sm:$0xf]
    %v204 = vld [vmem:[%s0 + $0x2e0] sm:$0xf]
    %v205 = vld [vmem:[%s0 + $0x2e4] sm:$0xf]
    %v206 = vld [vmem:[%s0 + $0x2e8] sm:$0xf]
    %v207 = vld [vmem:[%s0 + $0x2ec] sm:$0xf]
    %v208 = vld [vmem:[%s0 + $0x2f0] sm:$0xf]
    %v209 = vld [vmem:[%s0 + $0x2f4] sm:$0xf]
    %v210 = vld [vmem:[%s0 + $0x2f8] sm:$0xf]
    %v211 = vld [vmem:[%s0 + $0x2fc] sm:$0xf]
    %v212 = vld [vmem:[%s0 + $0x300] sm:$0xf]
    %v213 = vld [vmem:[%s0 + $0x304] sm:$0xf]
    %v214 = vld [vmem:[%s0 + $0x308] sm:$0xf]
    %v215 = vld [vmem:[%s0 + $0x30c] sm:$0xf]
    %v216 = vld [vmem:[%s0 + $0x310] sm:$0xf]
    %v217 = vld [vmem:[%s0 + $0x314] sm:$0xf]
    %v218 = vld [vmem:[%s0 + $0x318] sm:$0xf]
    %v219 = vld [vmem:[%s0 + $0x31c] sm:$0xf]
    %v220 = vld [vmem:[%s0 + $0x320] sm:$0xf]
    %v221 = vld [vmem:[%s0 + $0x324] sm:$0xf]
    %v222 = vld [vmem:[%s0 + $0x328] sm:$0xf]
    %v223 = vld [vmem:[%s0 + $0x32c] sm:$0xf]
    %v224 = vld [vmem:[%s0 + $0x330] sm:$0xf]
    %v225 = vld [vmem:[%s0 + $0x334] sm:$0xf]
    %v226 = vld [vmem:[%s0 + $0x338] sm:$0xf]
    %v227 = vld [vmem:[%s0 + $0x33c] sm:$0xf]
    %v228 = vld [vmem:[%s0 + $0x340] sm:$0xf]
    %v229 = vld [vmem:[%s0 + $0x344] sm:$0xf]
    %v230 = vld [vmem:[%s0 + $0x348] sm:$0xf]
    %v231 = vld [vmem:[%s0 + $0x34c] sm:$0xf]
    %v232 = vld [vmem:[%s0 + $0x350] sm:$0xf]
    %v233 = vld [vmem:[%s0 + $0x354] sm:$0xf]
    %v234 = vld [vmem:[%s0 + $0x358] sm:$0xf]
    %v235 = vld [vmem:[%s0 + $0x35c] sm:$0xf]
    %v236 = vld [vmem:[%s0 + $0x360] sm:$0xf]
    %v237 = vld [vmem:[%s0 + $0x364] sm:$0xf]
    %v238 = vld [vmem:[%s0 + $0x368] sm:$0xf]
    %v239 = vld [vmem:[%s0 + $0x36c] sm:$0xf]
    %v240 = vld [vmem:[%s0 + $0x370] sm:$0xf]
    %v241 = vld [vmem:[%s0 + $0x374] sm:$0xf]
    %v242 = vld [vmem:[%s0 + $0x378] sm:$0xf]
    %v243 = vld [vmem:[%s0 + $0x37c] sm:$0xf]
    %v244 = vld [vmem:[%s0 + $0x380] sm:$0xf]
    %v245 = vld [vmem:[%s0 + $0x384] sm:$0xf]
    %v246 = vld [vmem:[%s0 + $0x388] sm:$0xf]
    %v247 = vld [vmem:[%s0 + $0x38c] sm:$0xf]
    %v248 = vld [vmem:[%s0 + $0x390] sm:$0xf]
    %v249 = vld [vmem:[%s0 + $0x394] sm:$0xf]
    %v250 = vld [vmem:[%s0 + $0x398] sm:$0xf]
    %v251 = vld [vmem:[%s0 + $0x39c] sm:$0xf]
    %v252 = vld [vmem:[%s0 + $0x3a0] sm:$0xf]
    %v253 = vld [vmem:[%s0 + $0x3a4] sm:$0xf]
    %v254 = vld [vmem:[%s0 + $0x3a8] sm:$0xf]
    %v255 = vld [vmem:[%s0 + $0x3ac] sm:$0xf]
    %v256 = vld [vmem:[%s0 + $0x3b0] sm:$0xf]
    %v257 = vld [vmem:[%s0 + $0x3b4] sm:$0xf]
    %v258 = vld [vmem:[%s0 + $0x3b8] sm:$0xf]
    %v259 = vld [vmem:[%s0 + $0x3bc] sm:$0xf]
    %v260 = vld [vmem:[%s0 + $0x3c0] sm:$0xf]
    %v261 = vld [vmem:[%s0 + $0x3c4] sm:$0xf]
    %v262 = vld [vmem:[%s0 + $0x3c8] sm:$0xf]
    %v263 = vld [vmem:[%s0 + $0x3cc] sm:$0xf]
    %v264 = vld [vmem:[%s0 + $0x3d0] sm:$0xf]
    %v265 = vld [vmem:[%s0 + $0x3d4] sm:$0xf]
    %v266 = vld [vmem:[%s0 + $0x3d8] sm:$0xf]
    %v267 = vld [vmem:[%s0 + $0x3dc] sm:$0xf]
    %v268 = vld [vmem:[%s0 + $0x3e0] sm:$0xf]
    %v269 = vld [vmem:[%s0 + $0x3e4] sm:$0xf]
    %v270 = vld [vmem:[%s0 + $0x3e8] sm:$0xf]
    %v271 = vld [vmem:[%s0 + $0x3ec] sm:$0xf]
    %v272 = vld [vmem:[%s0 + $0x3f0] sm:$0xf]
    %v273 = vld [vmem:[%s0 + $0x3f4] sm:$0xf]
    %v274 = vld [vmem:[%s0 + $0x3f8] sm:$0xf]
    %v275 = vld [vmem:[%s0 + $0x3fc] sm:$0xf]
    %v276 = vld [vmem:[%s0 + $0x400] sm:$0xf]
    %v277 = vld [vmem:[%s0 + $0x404] sm:$0xf]
    %v278 = vld [vmem:[%s0 + $0x408] sm:$0xf]
    %v279 = vld [vmem:[%s0 + $0x40c] sm:$0xf]
    %v280 = vld [vmem:[%s0 + $0x410] sm:$0xf]
    %v281 = vld [vmem:[%s0 + $0x414] sm:$0xf]
    %v282 = vld [vmem:[%s0 + $0x418] sm:$0xf]
    %v283 = vld [vmem:[%s0 + $0x41c] sm:$0xf]
    %v284 = vld [vmem:[%s0 + $0x420] sm:$0xf]
    %v285 = vld [vmem:[%s0 + $0x424] sm:$0xf]
    %v286 = vld [vmem:[%s0 + $0x428] sm:$0xf]
    %v287 = vld [vmem:[%s0 + $0x42c] sm:$0xf]
    %v288 = vld [vmem:[%s0 + $0x430] sm:$0xf]
    %v289 = vld [vmem:[%s0 + $0x434] sm:$0xf]
    %v290 = vld [vmem:[%s0 + $0x438] sm:$0xf]
    %v291 = vld [vmem:[%s0 + $0x43c] sm:$0xf]
    %v292 = vld [vmem:[%s0 + $0x440] sm:$0xf]
    %v293 = vld [vmem:[%s0 + $0x444] sm:$0xf]
    %v294 = vld [vmem:[%s0 + $0x448] sm:$0xf]
    %v295 = vld [vmem:[%s0 + $0x44c] sm:$0xf]
    %v296 = vld [vmem:[%s0 + $0x450] sm:$0xf]
    %v297 = vld [vmem:[%s0 + $0x454] sm:$0xf]
    %v298 = vld [vmem:[%s0 + $0x458] sm:$0xf]
    %v299 = vld [vmem:[%s0 + $0x45c] sm:$0xf]
    %v300 = vld [vmem:[%s0 + $0x460] sm:$0xf]
    %v301 = vld [vmem:[%s0 + $0x464] sm:$0xf]
    %v302 = vld [vmem:[%s0 + $0x468] sm:$0xf]
    %v303 = vld [vmem:[%s0 + $0x46c] sm:$0xf]
    %v304 = vld [vmem:[%s0 + $0x470] sm:$0xf]
    %v305 = vld [vmem:[%s0 + $0x474] sm:$0xf]
    %v306 = vld [vmem:[%s0 + $0x478] sm:$0xf]
    %v307 = vld [vmem:[%s0 + $0x47c] sm:$0xf]
    %v308 = vld [vmem:[%s0 + $0x480] sm:$0xf]
    %v309 = vld [vmem:[%s0 + $0x484] sm:$0xf]
    %v310 = vld [vmem:[%s0 + $0x488] sm:$0xf]
    %v311 = vld [vmem:[%s0 + $0x48c] sm:$0xf]
    %v312 = vld [vmem:[%s0 + $0x490] sm:$0xf]
    %v313 = vld [vmem:[%s0 + $0x494] sm:$0xf]
    %v314 = vld [vmem:[%s0 + $0x498] sm:$0xf]
    %v315 = vld [vmem:[%s0 + $0x49c] sm:$0xf]
    %v316 = vld [vmem:[%s0 + $0x4a0] sm:$0xf]
    %v317 = vld [vmem:[%s0 + $0x4a4] sm:$0xf]
    %v318 = vld [vmem:[%s0 + $0x4a8] sm:$0xf]
    %v319 = vld [vmem:[%s0 + $0x4ac] sm:$0xf]
    %v320 = vld [vmem:[%s0 + $0x4b0] sm:$0xf]
    %v321 = vld [vmem:[%s0 + $0x4b4] sm:$0xf]
    %v322 = vld [vmem:[%s0 + $0x4b8] sm:$0xf]
    %v323 = vld [vmem:[%s0 + $0x4bc] sm:$0xf]
    %v324 = vld [vmem:[%s0 + $0x4c0] sm:$0xf]
    %v325 = vld [vmem:[%s0 + $0x4c4] sm:$0xf]
    %v326 = vld [vmem:[%s0 + $0x4c8] sm:$0xf]
    %v327 = vld [vmem:[%s0 + $0x4cc] sm:$0xf]
    %v328 = vld [vmem:[%s0 + $0x4d0] sm:$0xf]
    %v329 = vld [vmem:[%s0 + $0x4d4] sm:$0xf]
    %v330 = vld [vmem:[%s0 + $0x4d8] sm:$0xf]
    %v331 = vld [vmem:[%s0 + $0x4dc] sm:$0xf]
    %v332 = vld [vmem:[%s0 + $0x4e0] sm:$0xf]
    %v333 = vld [vmem:[%s0 + $0x4e4] sm:$0xf]
    %v334 = vld [vmem:[%s0 + $0x4e8] sm:$0xf]
    %v335 = vld [vmem:[%s0 + $0x4ec] sm:$0xf]
    %v336 = vld [vmem:[%s0 + $0x4f0] sm:$0xf]
    %v337 = vld [vmem:[%s0 + $0x4f4] sm:$0xf]
    %v338 = vld [vmem:[%s0 + $0x4f8] sm:$0xf]
    %v339 = vld [vmem:[%s0 + $0x4fc] sm:$0xf]
    %v340 = vld [vmem:[%s0 + $0x500] sm:$0xf]
    %v341 = vld [vmem:[%s0 + $0x504] sm:$0xf]
    %v342 = vld [vmem:[%s0 + $0x508] sm:$0xf]
    %v343 = vld [vmem:[%s0 + $0x50c] sm:$0xf]
    %v344 = vld [vmem:[%s0 + $0x510] sm:$0xf]
    %v345 = vld [vmem:[%s0 + $0x514] sm:$0xf]
    %v346 = vld [vmem:[%s0 + $0x518] sm:$0xf]
    %v347 = vld [vmem:[%s0 + $0x51c] sm:$0xf]
    %v348 = vld [vmem:[%s0 + $0x520] sm:$0xf]
    %v349 = vld [vmem:[%s0 + $0x524] sm:$0xf]
    %v350 = vld [vmem:[%s0 + $0x528] sm:$0xf]
    %v351 = vld [vmem:[%s0 + $0x52c] sm:$0xf]
    %v352 = vld [vmem:[%s0 + $0x530] sm:$0xf]
    %v353 = vld [vmem:[%s0 + $0x534] sm:$0xf]
    %v354 = vld [vmem:[%s0 + $0x538] sm:$0xf]
    %v355 = vld [vmem:[%s0 + $0x53c] sm:$0xf]
    %v356 = vld [vmem:[%s0 + $0x540] sm:$0xf]
    %v357 = vld [vmem:[%s0 + $0x544] sm:$0xf]
    %v358 = vld [vmem:[%s0 + $0x548] sm:$0xf]
    %v359 = vld [vmem:[%s0 + $0x54c] sm:$0xf]
    %v360 = vld [vmem:[%s0 + $0x550] sm:$0xf]
    %v361 = vld [vmem:[%s0 + $0x554] sm:$0xf]
    %v362 = vld [vmem:[%s0 + $0x558] sm:$0xf]
    %v363 = vld [vmem:[%s0 + $0x55c] sm:$0xf]
    %v364 = vld [vmem:[%s0 + $0x560] sm:$0xf]
    %v365 = vld [vmem:[%s0 + $0x564] sm:$0xf]
    %v366 = vld [vmem:[%s0 + $0x568] sm:$0xf]
    %v367 = vld [vmem:[%s0 + $0x56c] sm:$0xf]
    %v368 = vld [vmem:[%s0 + $0x570] sm:$0xf]
    %v369 = vld [vmem:[%s0 + $0x574] sm:$0xf]
    %v370 = vld [vmem:[%s0 + $0x578] sm:$0xf]
    %v371 = vld [vmem:[%s0 + $0x57c] sm:$0xf]
    %v372 = vld [vmem:[%s0 + $0x580] sm:$0xf]
    %v373 = vld [vmem:[%s0 + $0x584] sm:$0xf]
    %v374 = vld [vmem:[%s0 + $0x588] sm:$0xf]
    %v375 = vld [vmem:[%s0 + $0x58c] sm:$0xf]
    %v376 = vld [vmem:[%s0 + $0x590] sm:$0xf]
    %v377 = vld [vmem:[%s0 + $0x594] sm:$0xf]
    %v378 = vld [vmem:[%s0 + $0x598] sm:$0xf]
    %v379 = vld [vmem:[%s0 + $0x59c] sm:$0xf]
    %v380 = vld [vmem:[%s0 + $0x5a0] sm:$0xf]
    %v381 = vld [vmem:[%s0 + $0x5a4] sm:$0xf]
    %v382 = vld [vmem:[%s0 + $0x5a8] sm:$0xf]
    %v383 = vld [vmem:[%s0 + $0x5ac] sm:$0xf]
    %v384 = vld [vmem:[%s0 + $0x5b0] sm:$0xf]
    %v385 = vld [vmem:[%s0 + $0x5b4] sm:$0xf]
    %v386 = vld [vmem:[%s0 + $0x5b8] sm:$0xf]
    %v387 = vld [vmem:[%s0 + $0x5bc] sm:$0xf]
    %v388 = vld [vmem:[%s0 + $0x5c0] sm:$0xf]
    %v389 = vld [vmem:[%s0 + $0x5c4] sm:$0xf]
    %v390 = vld [vmem:[%s0 + $0x5c8] sm:$0xf]
    %v391 = vld [vmem:[%s0 + $0x5cc] sm:$0xf]
    %v392 = vld [vmem:[%s0 + $0x5d0] sm:$0xf]
    %v393 = vld [vmem:[%s0 + $0x5d4] sm:$0xf]
    %v394 = vld [vmem:[%s0 + $0x5d8] sm:$0xf]
    %v395 = vld [vmem:[%s0 + $0x5dc] sm:$0xf]
    %v396 = vld [vmem:[%s0 + $0x5e0] sm:$0xf]
    %v397 = vld [vmem:[%s0 + $0x5e4] sm:$0xf]
    %v398 = vld [vmem:[%s0 + $0x5e8] sm:$0xf]
    %v399 = vld [vmem:[%s0 + $0x5ec] sm:$0xf]
    %v400 = vld [vmem:[%s0 + $0x5f0] sm:$0xf]
    %v401 = vld [vmem:[%s0 + $0x5f4] sm:$0xf]
    %v402 = vld [vmem:[%s0 + $0x5f8] sm:$0xf]
    %v403 = vld [vmem:[%s0 + $0x5fc] sm:$0xf]
    %v404 = vld [vmem:[%s0 + $0x600] sm:$0xf]
    %v405 = vld [vmem:[%s0 + $0x604] sm:$0xf]
    %v406 = vld [vmem:[%s0 + $0x608] sm:$0xf]
    %v407 = vld [vmem:[%s0 + $0x60c] sm:$0xf]
    %v408 = vld [vmem:[%s0 + $0x610] sm:$0xf]
    %v409 = vld [vmem:[%s0 + $0x614] sm:$0xf]
    %v410 = vld [vmem:[%s0 + $0x618] sm:$0xf]
    %v411 = vld [vmem:[%s0 + $0x61c] sm:$0xf]
    %v412 = vld [vmem:[%s0 + $0x620] sm:$0xf]
    %v413 = vld [vmem:[%s0 + $0x624] sm:$0xf]
    %v414 = vld [vmem:[%s0 + $0x628] sm:$0xf]
    %v415 = vld [vmem:[%s0 + $0x62c] sm:$0xf]
    %v416 = vld [vmem:[%s0 + $0x630] sm:$0xf]
    %v417 = vld [vmem:[%s0 + $0x634] sm:$0xf]
    %v418 = vld [vmem:[%s0 + $0x638] sm:$0xf]
    %v419 = vld [vmem:[%s0 + $0x63c] sm:$0xf]
    %v420 = vld [vmem:[%s0 + $0x640] sm:$0xf]
    %v421 = vld [vmem:[%s0 + $0x644] sm:$0xf]
    %v422 = vld [vmem:[%s0 + $0x648] sm:$0xf]
    %v423 = vld [vmem:[%s0 + $0x64c] sm:$0xf]
    %v424 = vld [vmem:[%s0 + $0x650] sm:$0xf]
    %v425 = vld [vmem:[%s0 + $0x654] sm:$0xf]
    %v426 = vld [vmem:[%s0 + $0x658] sm:$0xf]
    %v427 = vld [vmem:[%s0 + $0x65c] sm:$0xf]
    %v428 = vld [vmem:[%s0 + $0x660] sm:$0xf]
    %v429 = vld [vmem:[%s0 + $0x664] sm:$0xf]
    %v430 = vld [vmem:[%s0 + $0x668] sm:$0xf]
    %v431 = vld [vmem:[%s0 + $0x66c] sm:$0xf]
    %v432 = vld [vmem:[%s0 + $0x670] sm:$0xf]
    %v433 = vld [vmem:[%s0 + $0x674] sm:$0xf]
    %v434 = vld [vmem:[%s0 + $0x678] sm:$0xf]
    %v435 = vld [vmem:[%s0 + $0x67c] sm:$0xf]
    %v436 = vld [vmem:[%s0 + $0x680] sm:$0xf]
    %v437 = vld [vmem:[%s0 + $0x684] sm:$0xf]
    %v438 = vld [vmem:[%s0 + $0x688] sm:$0xf]
    %v439 = vld [vmem:[%s0 + $0x68c] sm:$0xf]
    %v440 = vld [vmem:[%s0 + $0x690] sm:$0xf]
    %v441 = vld [vmem:[%s0 + $0x694] sm:$0xf]
    %v442 = vld [vmem:[%s0 + $0x698] sm:$0xf]
    %v443 = vld [vmem:[%s0 + $0x69c] sm:$0xf]
    %v444 = vld [vmem:[%s0 + $0x6a0] sm:$0xf]
    %v445 = vld [vmem:[%s0 + $0x6a4] sm:$0xf]
    %v446 = vld [vmem:[%s0 + $0x6a8] sm:$0xf]
    %v447 = vld [vmem:[%s0 + $0x6ac] sm:$0xf]
    %v448 = vld [vmem:[%s0 + $0x6b0] sm:$0xf]
    %v449 = vld [vmem:[%s0 + $0x6b4] sm:$0xf]
    %v450 = vld [vmem:[%s0 + $0x6b8] sm:$0xf]
    %v451 = vld [vmem:[%s0 + $0x6bc] sm:$0xf]
    %v452 = vld [vmem:[%s0 + $0x6c0] sm:$0xf]
    %v453 = vld [vmem:[%s0 + $0x6c4] sm:$0xf]
    %v454 = vld [vmem:[%s0 + $0x6c8] sm:$0xf]
    %v455 = vld [vmem:[%s0 + $0x6cc] sm:$0xf]
    %v456 = vld [vmem:[%s0 + $0x6d0] sm:$0xf]
    %v457 = vld [vmem:[%s0 + $0x6d4] sm:$0xf]
    %v458 = vld [vmem:[%s0 + $0x6d8] sm:$0xf]
    %v459 = vld [vmem:[%s0 + $0x6dc] sm:$0xf]
    %v460 = vld [vmem:[%s0 + $0x6e0] sm:$0xf]
    %v461 = vld [vmem:[%s0 + $0x6e4] sm:$0xf]
    %v462 = vld [vmem:[%s0 + $0x6e8] sm:$0xf]
    %v463 = vld [vmem:[%s0 + $0x6ec] sm:$0xf]
    %v464 = vld [vmem:[%s0 + $0x6f0] sm:$0xf]
    %v465 = vld [vmem:[%s0 + $0x6f4] sm:$0xf]
    %v466 = vld [vmem:[%s0 + $0x6f8] sm:$0xf]
    %v467 = vld [vmem:[%s0 + $0x6fc] sm:$0xf]
    %v468 = vld [vmem:[%s0 + $0x700] sm:$0xf]
    %v469 = vld [vmem:[%s0 + $0x704] sm:$0xf]
    %v470 = vld [vmem:[%s0 + $0x708] sm:$0xf]
    %v471 = vld [vmem:[%s0 + $0x70c] sm:$0xf]
    %v472 = vld [vmem:[%s0 + $0x710] sm:$0xf]
    %v473 = vld [vmem:[%s0 + $0x714] sm:$0xf]
    %v474 = vld [vmem:[%s0 + $0x718] sm:$0xf]
    %v475 = vld [vmem:[%s0 + $0x71c] sm:$0xf]
    %v476 = vld [vmem:[%s0 + $0x720] sm:$0xf]
    %v477 = vld [vmem:[%s0 + $0x724] sm:$0xf]
    %v478 = vld [vmem:[%s0 + $0x728] sm:$0xf]
    %v479 = vld [vmem:[%s0 + $0x72c] sm:$0xf]
    %v480 = vld [vmem:[%s0 + $0x730] sm:$0xf]
    %v481 = vld [vmem:[%s0 + $0x734] sm:$0xf]
    %v482 = vld [vmem:[%s0 + $0x738] sm:$0xf]
    %v483 = vld [vmem:[%s0 + $0x73c] sm:$0xf]
    %v484 = vld [vmem:[%s0 + $0x740] sm:$0xf]
    %v485 = vld [vmem:[%s0 + $0x744] sm:$0xf]
    %v486 = vld [vmem:[%s0 + $0x748] sm:$0xf]
    %v487 = vld [vmem:[%s0 + $0x74c] sm:$0xf]
    %v488 = vld [vmem:[%s0 + $0x750] sm:$0xf]
    %v489 = vld [vmem:[%s0 + $0x754] sm:$0xf]
    %v490 = vld [vmem:[%s0 + $0x758] sm:$0xf]
    %v491 = vld [vmem:[%s0 + $0x75c] sm:$0xf]
    %v492 = vld [vmem:[%s0 + $0x760] sm:$0xf]
    %v493 = vld [vmem:[%s0 + $0x764] sm:$0xf]
    %v494 = vld [vmem:[%s0 + $0x768] sm:$0xf]
    %v495 = vld [vmem:[%s0 + $0x76c] sm:$0xf]
    %v496 = vld [vmem:[%s0 + $0x770] sm:$0xf]
    %v497 = vld [vmem:[%s0 + $0x774] sm:$0xf]
    %v498 = vld [vmem:[%s0 + $0x778] sm:$0xf]
    %v499 = vld [vmem:[%s0 + $0x77c] sm:$0xf]
    %v500 = vld [vmem:[%s0 + $0x780] sm:$0xf]
    %v501 = vld [vmem:[%s0 + $0x784] sm:$0xf]
    %v502 = vld [vmem:[%s0 + $0x788] sm:$0xf]
    %v503 = vld [vmem:[%s0 + $0x78c] sm:$0xf]
    %v504 = vld [vmem:[%s0 + $0x790] sm:$0xf]
    %v505 = vld [vmem:[%s0 + $0x794] sm:$0xf]
    %v506 = vld [vmem:[%s0 + $0x798] sm:$0xf]
    %v507 = vld [vmem:[%s0 + $0x79c] sm:$0xf]
    %v508 = vld [vmem:[%s0 + $0x7a0] sm:$0xf]
    %v509 = vld [vmem:[%s0 + $0x7a4] sm:$0xf]
    %v510 = vld [vmem:[%s0 + $0x7a8] sm:$0xf]
    %v511 = vld [vmem:[%s0 + $0x7ac] sm:$0xf]
    %v512 = vld [vmem:[%s0 + $0x7b0] sm:$0xf]
    %v513 = vld [vmem:[%s0 + $0x7b4] sm:$0xf]
    %v514 = vld [vmem:[%s0 + $0x7b8] sm:$0xf]
    %v515 = vld [vmem:[%s0 + $0x7bc] sm:$0xf]
    %v516 = vld [vmem:[%s0 + $0x7c0] sm:$0xf]
    %v517 = vld [vmem:[%s0 + $0x7c4] sm:$0xf]
    %v518 = vld [vmem:[%s0 + $0x7c8] sm:$0xf]
    %v519 = vld [vmem:[%s0 + $0x7cc] sm:$0xf]
    %v520 = vld [vmem:[%s0 + $0x7d0] sm:$0xf]
    %v521 = vld [vmem:[%s0 + $0x7d4] sm:$0xf]
    %v522 = vld [vmem:[%s0 + $0x7d8] sm:$0xf]
    %v523 = vld [vmem:[%s0 + $0x7dc] sm:$0xf]
    %v524 = vld [vmem:[%s0 + $0x7e0] sm:$0xf]
    %v525 = vld [vmem:[%s0 + $0x7e4] sm:$0xf]
    %v526 = vld [vmem:[%s0 + $0x7e8] sm:$0xf]
    %v527 = vld [vmem:[%s0 + $0x7ec] sm:$0xf]
    %v528 = vld [vmem:[%s0 + $0x7f0] sm:$0xf]
    %v529 = vld [vmem:[%s0 + $0x7f4] sm:$0xf]
    %v530 = vld [vmem:[%s0 + $0x7f8] sm:$0xf]
    %v531 = vld [vmem:[%s0 + $0x7fc] sm:$0xf]
    %v532 = vunpack.c.l.bf16 %v20
    %v533 = vunpack.c.l.bf16 %v21
    %v534 = vunpack.c.l.bf16 %v22
    %v535 = vunpack.c.l.bf16 %v23
    %v536 = vunpack.c.l.bf16 %v24
    %v537 = vunpack.c.l.bf16 %v25
    %v538 = vunpack.c.l.bf16 %v26
    %v539 = vunpack.c.l.bf16 %v27
    %v540 = vunpack.c.l.bf16 %v28
    %v541 = vunpack.c.l.bf16 %v29
    %v542 = vunpack.c.l.bf16 %v30
    %v543 = vunpack.c.l.bf16 %v31
    %v544 = vunpack.c.l.bf16 %v32
    %v545 = vunpack.c.l.bf16 %v33
    %v546 = vunpack.c.l.bf16 %v34
    %v547 = vunpack.c.l.bf16 %v35
    %v548 = vunpack.c.l.bf16 %v36
    %v549 = vunpack.c.l.bf16 %v37
    %v550 = vunpack.c.l.bf16 %v38
    %v551 = vunpack.c.l.bf16 %v39
    %v552 = vunpack.c.l.bf16 %v40
    %v553 = vunpack.c.l.bf16 %v41
    %v554 = vunpack.c.l.bf16 %v42
    %v555 = vunpack.c.l.bf16 %v43
    %v556 = vunpack.c.l.bf16 %v44
    %v557 = vunpack.c.l.bf16 %v45
    %v558 = vunpack.c.l.bf16 %v46
    %v559 = vunpack.c.l.bf16 %v47
    %v560 = vunpack.c.l.bf16 %v48
    %v561 = vunpack.c.l.bf16 %v49
    %v562 = vunpack.c.l.bf16 %v50
    %v563 = vunpack.c.l.bf16 %v51
    %v564 = vunpack.c.l.bf16 %v52
    %v565 = vunpack.c.l.bf16 %v53
    %v566 = vunpack.c.l.bf16 %v54
    %v567 = vunpack.c.l.bf16 %v55
    %v568 = vunpack.c.l.bf16 %v56
    %v569 = vunpack.c.l.bf16 %v57
    %v570 = vunpack.c.l.bf16 %v58
    %v571 = vunpack.c.l.bf16 %v59
    %v572 = vunpack.c.l.bf16 %v60
    %v573 = vunpack.c.l.bf16 %v61
    %v574 = vunpack.c.l.bf16 %v62
    %v575 = vunpack.c.l.bf16 %v63
    %v576 = vunpack.c.l.bf16 %v64
    %v577 = vunpack.c.l.bf16 %v65
    %v578 = vunpack.c.l.bf16 %v66
    %v579 = vunpack.c.l.bf16 %v67
    %v580 = vunpack.c.l.bf16 %v68
    %v581 = vunpack.c.l.bf16 %v69
    %v582 = vunpack.c.l.bf16 %v70
    %v583 = vunpack.c.l.bf16 %v71
    %v584 = vunpack.c.l.bf16 %v72
    %v585 = vunpack.c.l.bf16 %v73
    %v586 = vunpack.c.l.bf16 %v74
    %v587 = vunpack.c.l.bf16 %v75
    %v588 = vunpack.c.l.bf16 %v76
    %v589 = vunpack.c.l.bf16 %v77
    %v590 = vunpack.c.l.bf16 %v78
    %v591 = vunpack.c.l.bf16 %v79
    %v592 = vunpack.c.l.bf16 %v80
    %v593 = vunpack.c.l.bf16 %v81
    %v594 = vunpack.c.l.bf16 %v82
    %v595 = vunpack.c.l.bf16 %v83
    %v596 = vunpack.c.l.bf16 %v84
    %v597 = vunpack.c.l.bf16 %v85
    %v598 = vunpack.c.l.bf16 %v86
    %v599 = vunpack.c.l.bf16 %v87
    %v600 = vunpack.c.l.bf16 %v88
    %v601 = vunpack.c.l.bf16 %v89
    %v602 = vunpack.c.l.bf16 %v90
    %v603 = vunpack.c.l.bf16 %v91
    %v604 = vunpack.c.l.bf16 %v92
    %v605 = vunpack.c.l.bf16 %v93
    %v606 = vunpack.c.l.bf16 %v94
    %v607 = vunpack.c.l.bf16 %v95
    %v608 = vunpack.c.l.bf16 %v96
    %v609 = vunpack.c.l.bf16 %v97
    %v610 = vunpack.c.l.bf16 %v98
    %v611 = vunpack.c.l.bf16 %v99
    %v612 = vunpack.c.l.bf16 %v100
    %v613 = vunpack.c.l.bf16 %v101
    %v614 = vunpack.c.l.bf16 %v102
    %v615 = vunpack.c.l.bf16 %v103
    %v616 = vunpack.c.l.bf16 %v104
    %v617 = vunpack.c.l.bf16 %v105
    %v618 = vunpack.c.l.bf16 %v106
    %v619 = vunpack.c.l.bf16 %v107
    %v620 = vunpack.c.l.bf16 %v108
    %v621 = vunpack.c.l.bf16 %v109
    %v622 = vunpack.c.l.bf16 %v110
    %v623 = vunpack.c.l.bf16 %v111
    %v624 = vunpack.c.l.bf16 %v112
    %v625 = vunpack.c.l.bf16 %v113
    %v626 = vunpack.c.l.bf16 %v114
    %v627 = vunpack.c.l.bf16 %v115
    %v628 = vunpack.c.l.bf16 %v116
    %v629 = vunpack.c.l.bf16 %v117
    %v630 = vunpack.c.l.bf16 %v118
    %v631 = vunpack.c.l.bf16 %v119
    %v632 = vunpack.c.l.bf16 %v120
    %v633 = vunpack.c.l.bf16 %v121
    %v634 = vunpack.c.l.bf16 %v122
    %v635 = vunpack.c.l.bf16 %v123
    %v636 = vunpack.c.l.bf16 %v124
    %v637 = vunpack.c.l.bf16 %v125
    %v638 = vunpack.c.l.bf16 %v126
    %v639 = vunpack.c.l.bf16 %v127
    %v640 = vunpack.c.l.bf16 %v128
    %v641 = vunpack.c.l.bf16 %v129
    %v642 = vunpack.c.l.bf16 %v130
    %v643 = vunpack.c.l.bf16 %v131
    %v644 = vunpack.c.l.bf16 %v132
    %v645 = vunpack.c.l.bf16 %v133
    %v646 = vunpack.c.l.bf16 %v134
    %v647 = vunpack.c.l.bf16 %v135
    %v648 = vunpack.c.l.bf16 %v136
    %v649 = vunpack.c.l.bf16 %v137
    %v650 = vunpack.c.l.bf16 %v138
    %v651 = vunpack.c.l.bf16 %v139
    %v652 = vunpack.c.l.bf16 %v140
    %v653 = vunpack.c.l.bf16 %v141
    %v654 = vunpack.c.l.bf16 %v142
    %v655 = vunpack.c.l.bf16 %v143
    %v656 = vunpack.c.l.bf16 %v144
    %v657 = vunpack.c.l.bf16 %v145
    %v658 = vunpack.c.l.bf16 %v146
    %v659 = vunpack.c.l.bf16 %v147
    %v660 = vunpack.c.l.bf16 %v148
    %v661 = vunpack.c.l.bf16 %v149
    %v662 = vunpack.c.l.bf16 %v150
    %v663 = vunpack.c.l.bf16 %v151
    %v664 = vunpack.c.l.bf16 %v152
    %v665 = vunpack.c.l.bf16 %v153
    %v666 = vunpack.c.l.bf16 %v154
    %v667 = vunpack.c.l.bf16 %v155
    %v668 = vunpack.c.l.bf16 %v156
    %v669 = vunpack.c.l.bf16 %v157
    %v670 = vunpack.c.l.bf16 %v158
    %v671 = vunpack.c.l.bf16 %v159
    %v672 = vunpack.c.l.bf16 %v160
    %v673 = vunpack.c.l.bf16 %v161
    %v674 = vunpack.c.l.bf16 %v162
    %v675 = vunpack.c.l.bf16 %v163
    %v676 = vunpack.c.l.bf16 %v164
    %v677 = vunpack.c.l.bf16 %v165
    %v678 = vunpack.c.l.bf16 %v166
    %v679 = vunpack.c.l.bf16 %v167
    %v680 = vunpack.c.l.bf16 %v168
    %v681 = vunpack.c.l.bf16 %v169
    %v682 = vunpack.c.l.bf16 %v170
    %v683 = vunpack.c.l.bf16 %v171
    %v684 = vunpack.c.l.bf16 %v172
    %v685 = vunpack.c.l.bf16 %v173
    %v686 = vunpack.c.l.bf16 %v174
    %v687 = vunpack.c.l.bf16 %v175
    %v688 = vunpack.c.l.bf16 %v176
    %v689 = vunpack.c.l.bf16 %v177
    %v690 = vunpack.c.l.bf16 %v178
    %v691 = vunpack.c.l.bf16 %v179
    %v692 = vunpack.c.l.bf16 %v180
    %v693 = vunpack.c.l.bf16 %v181
    %v694 = vunpack.c.l.bf16 %v182
    %v695 = vunpack.c.l.bf16 %v183
    %v696 = vunpack.c.l.bf16 %v184
    %v697 = vunpack.c.l.bf16 %v185
    %v698 = vunpack.c.l.bf16 %v186
    %v699 = vunpack.c.l.bf16 %v187
    %v700 = vunpack.c.l.bf16 %v188
    %v701 = vunpack.c.l.bf16 %v189
    %v702 = vunpack.c.l.bf16 %v190
    %v703 = vunpack.c.l.bf16 %v191
    %v704 = vunpack.c.l.bf16 %v192
    %v705 = vunpack.c.l.bf16 %v193
    %v706 = vunpack.c.l.bf16 %v194
    %v707 = vunpack.c.l.bf16 %v195
    %v708 = vunpack.c.l.bf16 %v196
    %v709 = vunpack.c.l.bf16 %v197
    %v710 = vunpack.c.l.bf16 %v198
    %v711 = vunpack.c.l.bf16 %v199
    %v712 = vunpack.c.l.bf16 %v200
    %v713 = vunpack.c.l.bf16 %v201
    %v714 = vunpack.c.l.bf16 %v202
    %v715 = vunpack.c.l.bf16 %v203
    %v716 = vunpack.c.l.bf16 %v204
    %v717 = vunpack.c.l.bf16 %v205
    %v718 = vunpack.c.l.bf16 %v206
    %v719 = vunpack.c.l.bf16 %v207
    %v720 = vunpack.c.l.bf16 %v208
    %v721 = vunpack.c.l.bf16 %v209
    %v722 = vunpack.c.l.bf16 %v210
    %v723 = vunpack.c.l.bf16 %v211
    %v724 = vunpack.c.l.bf16 %v212
    %v725 = vunpack.c.l.bf16 %v213
    %v726 = vunpack.c.l.bf16 %v214
    %v727 = vunpack.c.l.bf16 %v215
    %v728 = vunpack.c.l.bf16 %v216
    %v729 = vunpack.c.l.bf16 %v217
    %v730 = vunpack.c.l.bf16 %v218
    %v731 = vunpack.c.l.bf16 %v219
    %v732 = vunpack.c.l.bf16 %v220
    %v733 = vunpack.c.l.bf16 %v221
    %v734 = vunpack.c.l.bf16 %v222
    %v735 = vunpack.c.l.bf16 %v223
    %v736 = vunpack.c.l.bf16 %v224
    %v737 = vunpack.c.l.bf16 %v225
    %v738 = vunpack.c.l.bf16 %v226
    %v739 = vunpack.c.l.bf16 %v227
    %v740 = vunpack.c.l.bf16 %v228
    %v741 = vunpack.c.l.bf16 %v229
    %v742 = vunpack.c.l.bf16 %v230
    %v743 = vunpack.c.l.bf16 %v231
    %v744 = vunpack.c.l.bf16 %v232
    %v745 = vunpack.c.l.bf16 %v233
    %v746 = vunpack.c.l.bf16 %v234
    %v747 = vunpack.c.l.bf16 %v235
    %v748 = vunpack.c.l.bf16 %v236
    %v749 = vunpack.c.l.bf16 %v237
    %v750 = vunpack.c.l.bf16 %v238
    %v751 = vunpack.c.l.bf16 %v239
    %v752 = vunpack.c.l.bf16 %v240
    %v753 = vunpack.c.l.bf16 %v241
    %v754 = vunpack.c.l.bf16 %v242
    %v755 = vunpack.c.l.bf16 %v243
    %v756 = vunpack.c.l.bf16 %v244
    %v757 = vunpack.c.l.bf16 %v245
    %v758 = vunpack.c.l.bf16 %v246
    %v759 = vunpack.c.l.bf16 %v247
    %v760 = vunpack.c.l.bf16 %v248
    %v761 = vunpack.c.l.bf16 %v249
    %v762 = vunpack.c.l.bf16 %v250
    %v763 = vunpack.c.l.bf16 %v251
    %v764 = vunpack.c.l.bf16 %v252
    %v765 = vunpack.c.l.bf16 %v253
    %v766 = vunpack.c.l.bf16 %v254
    %v767 = vunpack.c.l.bf16 %v255
    %v768 = vunpack.c.l.bf16 %v256
    %v769 = vunpack.c.l.bf16 %v257
    %v770 = vunpack.c.l.bf16 %v258
    %v771 = vunpack.c.l.bf16 %v259
    %v772 = vunpack.c.l.bf16 %v260
    %v773 = vunpack.c.l.bf16 %v261
    %v774 = vunpack.c.l.bf16 %v262
    %v775 = vunpack.c.l.bf16 %v263
    %v776 = vunpack.c.l.bf16 %v264
    %v777 = vunpack.c.l.bf16 %v265
    %v778 = vunpack.c.l.bf16 %v266
    %v779 = vunpack.c.l.bf16 %v267
    %v780 = vunpack.c.l.bf16 %v268
    %v781 = vunpack.c.l.bf16 %v269
    %v782 = vunpack.c.l.bf16 %v270
    %v783 = vunpack.c.l.bf16 %v271
    %v784 = vunpack.c.l.bf16 %v272
    %v785 = vunpack.c.l.bf16 %v273
    %v786 = vunpack.c.l.bf16 %v274
    %v787 = vunpack.c.l.bf16 %v275
    %v788 = vunpack.c.l.bf16 %v276
    %v789 = vunpack.c.l.bf16 %v277
    %v790 = vunpack.c.l.bf16 %v278
    %v791 = vunpack.c.l.bf16 %v279
    %v792 = vunpack.c.l.bf16 %v280
    %v793 = vunpack.c.l.bf16 %v281
    %v794 = vunpack.c.l.bf16 %v282
    %v795 = vunpack.c.l.bf16 %v283
    %v796 = vunpack.c.l.bf16 %v284
    %v797 = vunpack.c.l.bf16 %v285
    %v798 = vunpack.c.l.bf16 %v286
    %v799 = vunpack.c.l.bf16 %v287
    %v800 = vunpack.c.l.bf16 %v288
    %v801 = vunpack.c.l.bf16 %v289
    %v802 = vunpack.c.l.bf16 %v290
    %v803 = vunpack.c.l.bf16 %v291
    %v804 = vunpack.c.l.bf16 %v292
    %v805 = vunpack.c.l.bf16 %v293
    %v806 = vunpack.c.l.bf16 %v294
    %v807 = vunpack.c.l.bf16 %v295
    %v808 = vunpack.c.l.bf16 %v296
    %v809 = vunpack.c.l.bf16 %v297
    %v810 = vunpack.c.l.bf16 %v298
    %v811 = vunpack.c.l.bf16 %v299
    %v812 = vunpack.c.l.bf16 %v300
    %v813 = vunpack.c.l.bf16 %v301
    %v814 = vunpack.c.l.bf16 %v302
    %v815 = vunpack.c.l.bf16 %v303
    %v816 = vunpack.c.l.bf16 %v304
    %v817 = vunpack.c.l.bf16 %v305
    %v818 = vunpack.c.l.bf16 %v306
    %v819 = vunpack.c.l.bf16 %v307
    %v820 = vunpack.c.l.bf16 %v308
    %v821 = vunpack.c.l.bf16 %v309
    %v822 = vunpack.c.l.bf16 %v310
    %v823 = vunpack.c.l.bf16 %v311
    %v824 = vunpack.c.l.bf16 %v312
    %v825 = vunpack.c.l.bf16 %v313
    %v826 = vunpack.c.l.bf16 %v314
    %v827 = vunpack.c.l.bf16 %v315
    %v828 = vunpack.c.l.bf16 %v316
    %v829 = vunpack.c.l.bf16 %v317
    %v830 = vunpack.c.l.bf16 %v318
    %v831 = vunpack.c.l.bf16 %v319
    %v832 = vunpack.c.l.bf16 %v320
    %v833 = vunpack.c.l.bf16 %v321
    %v834 = vunpack.c.l.bf16 %v322
    %v835 = vunpack.c.l.bf16 %v323
    %v836 = vunpack.c.l.bf16 %v324
    %v837 = vunpack.c.l.bf16 %v325
    %v838 = vunpack.c.l.bf16 %v326
    %v839 = vunpack.c.l.bf16 %v327
    %v840 = vunpack.c.l.bf16 %v328
    %v841 = vunpack.c.l.bf16 %v329
    %v842 = vunpack.c.l.bf16 %v330
    %v843 = vunpack.c.l.bf16 %v331
    %v844 = vunpack.c.l.bf16 %v332
    %v845 = vunpack.c.l.bf16 %v333
    %v846 = vunpack.c.l.bf16 %v334
    %v847 = vunpack.c.l.bf16 %v335
    %v848 = vunpack.c.l.bf16 %v336
    %v849 = vunpack.c.l.bf16 %v337
    %v850 = vunpack.c.l.bf16 %v338
    %v851 = vunpack.c.l.bf16 %v339
    %v852 = vunpack.c.l.bf16 %v340
    %v853 = vunpack.c.l.bf16 %v341
    %v854 = vunpack.c.l.bf16 %v342
    %v855 = vunpack.c.l.bf16 %v343
    %v856 = vunpack.c.l.bf16 %v344
    %v857 = vunpack.c.l.bf16 %v345
    %v858 = vunpack.c.l.bf16 %v346
    %v859 = vunpack.c.l.bf16 %v347
    %v860 = vunpack.c.l.bf16 %v348
    %v861 = vunpack.c.l.bf16 %v349
    %v862 = vunpack.c.l.bf16 %v350
    %v863 = vunpack.c.l.bf16 %v351
    %v864 = vunpack.c.l.bf16 %v352
    %v865 = vunpack.c.l.bf16 %v353
    %v866 = vunpack.c.l.bf16 %v354
    %v867 = vunpack.c.l.bf16 %v355
    %v868 = vunpack.c.l.bf16 %v356
    %v869 = vunpack.c.l.bf16 %v357
    %v870 = vunpack.c.l.bf16 %v358
    %v871 = vunpack.c.l.bf16 %v359
    %v872 = vunpack.c.l.bf16 %v360
    %v873 = vunpack.c.l.bf16 %v361
    %v874 = vunpack.c.l.bf16 %v362
    %v875 = vunpack.c.l.bf16 %v363
    %v876 = vunpack.c.l.bf16 %v364
    %v877 = vunpack.c.l.bf16 %v365
    %v878 = vunpack.c.l.bf16 %v366
    %v879 = vunpack.c.l.bf16 %v367
    %v880 = vunpack.c.l.bf16 %v368
    %v881 = vunpack.c.l.bf16 %v369
    %v882 = vunpack.c.l.bf16 %v370
    %v883 = vunpack.c.l.bf16 %v371
    %v884 = vunpack.c.l.bf16 %v372
    %v885 = vunpack.c.l.bf16 %v373
    %v886 = vunpack.c.l.bf16 %v374
    %v887 = vunpack.c.l.bf16 %v375
    %v888 = vunpack.c.l.bf16 %v376
    %v889 = vunpack.c.l.bf16 %v377
    %v890 = vunpack.c.l.bf16 %v378
    %v891 = vunpack.c.l.bf16 %v379
    %v892 = vunpack.c.l.bf16 %v380
    %v893 = vunpack.c.l.bf16 %v381
    %v894 = vunpack.c.l.bf16 %v382
    %v895 = vunpack.c.l.bf16 %v383
    %v896 = vunpack.c.l.bf16 %v384
    %v897 = vunpack.c.l.bf16 %v385
    %v898 = vunpack.c.l.bf16 %v386
    %v899 = vunpack.c.l.bf16 %v387
    %v900 = vunpack.c.l.bf16 %v388
    %v901 = vunpack.c.l.bf16 %v389
    %v902 = vunpack.c.l.bf16 %v390
    %v903 = vunpack.c.l.bf16 %v391
    %v904 = vunpack.c.l.bf16 %v392
    %v905 = vunpack.c.l.bf16 %v393
    %v906 = vunpack.c.l.bf16 %v394
    %v907 = vunpack.c.l.bf16 %v395
    %v908 = vunpack.c.l.bf16 %v396
    %v909 = vunpack.c.l.bf16 %v397
    %v910 = vunpack.c.l.bf16 %v398
    %v911 = vunpack.c.l.bf16 %v399
    %v912 = vunpack.c.l.bf16 %v400
    %v913 = vunpack.c.l.bf16 %v401
    %v914 = vunpack.c.l.bf16 %v402
    %v915 = vunpack.c.l.bf16 %v403
    %v916 = vunpack.c.l.bf16 %v404
    %v917 = vunpack.c.l.bf16 %v405
    %v918 = vunpack.c.l.bf16 %v406
    %v919 = vunpack.c.l.bf16 %v407
    %v920 = vunpack.c.l.bf16 %v408
    %v921 = vunpack.c.l.bf16 %v409
    %v922 = vunpack.c.l.bf16 %v410
    %v923 = vunpack.c.l.bf16 %v411
    %v924 = vunpack.c.l.bf16 %v412
    %v925 = vunpack.c.l.bf16 %v413
    %v926 = vunpack.c.l.bf16 %v414
    %v927 = vunpack.c.l.bf16 %v415
    %v928 = vunpack.c.l.bf16 %v416
    %v929 = vunpack.c.l.bf16 %v417
    %v930 = vunpack.c.l.bf16 %v418
    %v931 = vunpack.c.l.bf16 %v419
    %v932 = vunpack.c.l.bf16 %v420
    %v933 = vunpack.c.l.bf16 %v421
    %v934 = vunpack.c.l.bf16 %v422
    %v935 = vunpack.c.l.bf16 %v423
    %v936 = vunpack.c.l.bf16 %v424
    %v937 = vunpack.c.l.bf16 %v425
    %v938 = vunpack.c.l.bf16 %v426
    %v939 = vunpack.c.l.bf16 %v427
    %v940 = vunpack.c.l.bf16 %v428
    %v941 = vunpack.c.l.bf16 %v429
    %v942 = vunpack.c.l.bf16 %v430
    %v943 = vunpack.c.l.bf16 %v431
    %v944 = vunpack.c.l.bf16 %v432
    %v945 = vunpack.c.l.bf16 %v433
    %v946 = vunpack.c.l.bf16 %v434
    %v947 = vunpack.c.l.bf16 %v435
    %v948 = vunpack.c.l.bf16 %v436
    %v949 = vunpack.c.l.bf16 %v437
    %v950 = vunpack.c.l.bf16 %v438
    %v951 = vunpack.c.l.bf16 %v439
    %v952 = vunpack.c.l.bf16 %v440
    %v953 = vunpack.c.l.bf16 %v441
    %v954 = vunpack.c.l.bf16 %v442
    %v955 = vunpack.c.l.bf16 %v443
    %v956 = vunpack.c.l.bf16 %v444
    %v957 = vunpack.c.l.bf16 %v445
    %v958 = vunpack.c.l.bf16 %v446
    %v959 = vunpack.c.l.bf16 %v447
    %v960 = vunpack.c.l.bf16 %v448
    %v961 = vunpack.c.l.bf16 %v449
    %v962 = vunpack.c.l.bf16 %v450
    %v963 = vunpack.c.l.bf16 %v451
    %v964 = vunpack.c.l.bf16 %v452
    %v965 = vunpack.c.l.bf16 %v453
    %v966 = vunpack.c.l.bf16 %v454
    %v967 = vunpack.c.l.bf16 %v455
    %v968 = vunpack.c.l.bf16 %v456
    %v969 = vunpack.c.l.bf16 %v457
    %v970 = vunpack.c.l.bf16 %v458
    %v971 = vunpack.c.l.bf16 %v459
    %v972 = vunpack.c.l.bf16 %v460
    %v973 = vunpack.c.l.bf16 %v461
    %v974 = vunpack.c.l.bf16 %v462
    %v975 = vunpack.c.l.bf16 %v463
    %v976 = vunpack.c.l.bf16 %v464
    %v977 = vunpack.c.l.bf16 %v465
    %v978 = vunpack.c.l.bf16 %v466
    %v979 = vunpack.c.l.bf16 %v467
    %v980 = vunpack.c.l.bf16 %v468
    %v981 = vunpack.c.l.bf16 %v469
    %v982 = vunpack.c.l.bf16 %v470
    %v983 = vunpack.c.l.bf16 %v471
    %v984 = vunpack.c.l.bf16 %v472
    %v985 = vunpack.c.l.bf16 %v473
    %v986 = vunpack.c.l.bf16 %v474
    %v987 = vunpack.c.l.bf16 %v475
    %v988 = vunpack.c.l.bf16 %v476
    %v989 = vunpack.c.l.bf16 %v477
    %v990 = vunpack.c.l.bf16 %v478
    %v991 = vunpack.c.l.bf16 %v479
    %v992 = vunpack.c.l.bf16 %v480
    %v993 = vunpack.c.l.bf16 %v481
    %v994 = vunpack.c.l.bf16 %v482
    %v995 = vunpack.c.l.bf16 %v483
    %v996 = vunpack.c.l.bf16 %v484
    %v997 = vunpack.c.l.bf16 %v485
    %v998 = vunpack.c.l.bf16 %v486
    %v999 = vunpack.c.l.bf16 %v487
    %v1000 = vunpack.c.l.bf16 %v488
    %v1001 = vunpack.c.l.bf16 %v489
    %v1002 = vunpack.c.l.bf16 %v490
    %v1003 = vunpack.c.l.bf16 %v491
    %v1004 = vunpack.c.l.bf16 %v492
    %v1005 = vunpack.c.l.bf16 %v493
    %v1006 = vunpack.c.l.bf16 %v494
    %v1007 = vunpack.c.l.bf16 %v495
    %v1008 = vunpack.c.l.bf16 %v496
    %v1009 = vunpack.c.l.bf16 %v497
    %v1010 = vunpack.c.l.bf16 %v498
    %v1011 = vunpack.c.l.bf16 %v499
    %v1012 = vunpack.c.l.bf16 %v500
    %v1013 = vunpack.c.l.bf16 %v501
    %v1014 = vunpack.c.l.bf16 %v502
    %v1015 = vunpack.c.l.bf16 %v503
    %v1016 = vunpack.c.l.bf16 %v504
    %v1017 = vunpack.c.l.bf16 %v505
    %v1018 = vunpack.c.l.bf16 %v506
    %v1019 = vunpack.c.l.bf16 %v507
    %v1020 = vunpack.c.l.bf16 %v508
    %v1021 = vunpack.c.l.bf16 %v509
    %v1022 = vunpack.c.l.bf16 %v510
    %v1023 = vunpack.c.l.bf16 %v511
    %v1024 = vunpack.c.l.bf16 %v512
    %v1025 = vunpack.c.l.bf16 %v513
    %v1026 = vunpack.c.l.bf16 %v514
    %v1027 = vunpack.c.l.bf16 %v515
    %v1028 = vunpack.c.l.bf16 %v516
    %v1029 = vunpack.c.l.bf16 %v517
    %v1030 = vunpack.c.l.bf16 %v518
    %v1031 = vunpack.c.l.bf16 %v519
    %v1032 = vunpack.c.l.bf16 %v520
    %v1033 = vunpack.c.l.bf16 %v521
    %v1034 = vunpack.c.l.bf16 %v522
    %v1035 = vunpack.c.l.bf16 %v523
    %v1036 = vunpack.c.l.bf16 %v524
    %v1037 = vunpack.c.l.bf16 %v525
    %v1038 = vunpack.c.l.bf16 %v526
    %v1039 = vunpack.c.l.bf16 %v527
    %v1040 = vunpack.c.l.bf16 %v528
    %v1041 = vunpack.c.l.bf16 %v529
    %v1042 = vunpack.c.l.bf16 %v530
    %v1043 = vunpack.c.l.bf16 %v531
    %vm1044 = vcmask 400384
    %v1045 = vsel %vm1044, %v532, 0.0
    %1046 = vadd.xlane.f32.xlu0 %v1045
    %v1047 = vpop.xlane.xlu0 %1046
    %v1048 = vsel %vm1044, %v533, 0.0
    %1049 = vadd.xlane.f32.xlu0 %v1048
    %v1050 = vpop.xlane.xlu0 %1049
    %v1051 = vsel %vm1044, %v534, 0.0
    %1052 = vadd.xlane.f32.xlu0 %v1051
    %v1053 = vpop.xlane.xlu0 %1052
    %v1054 = vsel %vm1044, %v535, 0.0
    %1055 = vadd.xlane.f32.xlu0 %v1054
    %v1056 = vpop.xlane.xlu0 %1055
    %v1057 = vsel %vm1044, %v536, 0.0
    %1058 = vadd.xlane.f32.xlu0 %v1057
    %v1059 = vpop.xlane.xlu0 %1058
    %v1060 = vsel %vm1044, %v537, 0.0
    %1061 = vadd.xlane.f32.xlu0 %v1060
    %v1062 = vpop.xlane.xlu0 %1061
    %v1063 = vsel %vm1044, %v538, 0.0
    %1064 = vadd.xlane.f32.xlu0 %v1063
    %v1065 = vpop.xlane.xlu0 %1064
    %v1066 = vsel %vm1044, %v539, 0.0
    %1067 = vadd.xlane.f32.xlu0 %v1066
    %v1068 = vpop.xlane.xlu0 %1067
    %v1069 = vsel %vm1044, %v540, 0.0
    %1070 = vadd.xlane.f32.xlu0 %v1069
    %v1071 = vpop.xlane.xlu0 %1070
    %v1072 = vsel %vm1044, %v541, 0.0
    %1073 = vadd.xlane.f32.xlu0 %v1072
    %v1074 = vpop.xlane.xlu0 %1073
    %v1075 = vsel %vm1044, %v542, 0.0
    %1076 = vadd.xlane.f32.xlu0 %v1075
    %v1077 = vpop.xlane.xlu0 %1076
    %v1078 = vsel %vm1044, %v543, 0.0
    %1079 = vadd.xlane.f32.xlu0 %v1078
    %v1080 = vpop.xlane.xlu0 %1079
    %v1081 = vsel %vm1044, %v544, 0.0
    %1082 = vadd.xlane.f32.xlu0 %v1081
    %v1083 = vpop.xlane.xlu0 %1082
    %v1084 = vsel %vm1044, %v545, 0.0
    %1085 = vadd.xlane.f32.xlu0 %v1084
    %v1086 = vpop.xlane.xlu0 %1085
    %v1087 = vsel %vm1044, %v546, 0.0
    %1088 = vadd.xlane.f32.xlu0 %v1087
    %v1089 = vpop.xlane.xlu0 %1088
    %v1090 = vsel %vm1044, %v547, 0.0
    %1091 = vadd.xlane.f32.xlu0 %v1090
    %v1092 = vpop.xlane.xlu0 %1091
    %v1093 = vsel %vm1044, %v548, 0.0
    %1094 = vadd.xlane.f32.xlu0 %v1093
    %v1095 = vpop.xlane.xlu0 %1094
    %v1096 = vsel %vm1044, %v549, 0.0
    %1097 = vadd.xlane.f32.xlu0 %v1096
    %v1098 = vpop.xlane.xlu0 %1097
    %v1099 = vsel %vm1044, %v550, 0.0
    %1100 = vadd.xlane.f32.xlu0 %v1099
    %v1101 = vpop.xlane.xlu0 %1100
    %v1102 = vsel %vm1044, %v551, 0.0
    %1103 = vadd.xlane.f32.xlu0 %v1102
    %v1104 = vpop.xlane.xlu0 %1103
    %v1105 = vsel %vm1044, %v552, 0.0
    %1106 = vadd.xlane.f32.xlu0 %v1105
    %v1107 = vpop.xlane.xlu0 %1106
    %v1108 = vsel %vm1044, %v553, 0.0
    %1109 = vadd.xlane.f32.xlu0 %v1108
    %v1110 = vpop.xlane.xlu0 %1109
    %v1111 = vsel %vm1044, %v554, 0.0
    %1112 = vadd.xlane.f32.xlu0 %v1111
    %v1113 = vpop.xlane.xlu0 %1112
    %v1114 = vsel %vm1044, %v555, 0.0
    %1115 = vadd.xlane.f32.xlu0 %v1114
    %v1116 = vpop.xlane.xlu0 %1115
    %v1117 = vsel %vm1044, %v556, 0.0
    %1118 = vadd.xlane.f32.xlu0 %v1117
    %v1119 = vpop.xlane.xlu0 %1118
    %v1120 = vsel %vm1044, %v557, 0.0
    %1121 = vadd.xlane.f32.xlu0 %v1120
    %v1122 = vpop.xlane.xlu0 %1121
    %v1123 = vsel %vm1044, %v558, 0.0
    %1124 = vadd.xlane.f32.xlu0 %v1123
    %v1125 = vpop.xlane.xlu0 %1124
    %v1126 = vsel %vm1044, %v559, 0.0
    %1127 = vadd.xlane.f32.xlu0 %v1126
    %v1128 = vpop.xlane.xlu0 %1127
    %v1129 = vsel %vm1044, %v560, 0.0
    %1130 = vadd.xlane.f32.xlu0 %v1129
    %v1131 = vpop.xlane.xlu0 %1130
    %v1132 = vsel %vm1044, %v561, 0.0
    %1133 = vadd.xlane.f32.xlu0 %v1132
    %v1134 = vpop.xlane.xlu0 %1133
    %v1135 = vsel %vm1044, %v562, 0.0
    %1136 = vadd.xlane.f32.xlu0 %v1135
    %v1137 = vpop.xlane.xlu0 %1136
    %v1138 = vsel %vm1044, %v563, 0.0
    %1139 = vadd.xlane.f32.xlu0 %v1138
    %v1140 = vpop.xlane.xlu0 %1139
    %v1141 = vsel %vm1044, %v564, 0.0
    %1142 = vadd.xlane.f32.xlu0 %v1141
    %v1143 = vpop.xlane.xlu0 %1142
    %v1144 = vsel %vm1044, %v565, 0.0
    %1145 = vadd.xlane.f32.xlu0 %v1144
    %v1146 = vpop.xlane.xlu0 %1145
    %v1147 = vsel %vm1044, %v566, 0.0
    %1148 = vadd.xlane.f32.xlu0 %v1147
    %v1149 = vpop.xlane.xlu0 %1148
    %v1150 = vsel %vm1044, %v567, 0.0
    %1151 = vadd.xlane.f32.xlu0 %v1150
    %v1152 = vpop.xlane.xlu0 %1151
    %v1153 = vsel %vm1044, %v568, 0.0
    %1154 = vadd.xlane.f32.xlu0 %v1153
    %v1155 = vpop.xlane.xlu0 %1154
    %v1156 = vsel %vm1044, %v569, 0.0
    %1157 = vadd.xlane.f32.xlu0 %v1156
    %v1158 = vpop.xlane.xlu0 %1157
    %v1159 = vsel %vm1044, %v570, 0.0
    %1160 = vadd.xlane.f32.xlu0 %v1159
    %v1161 = vpop.xlane.xlu0 %1160
    %v1162 = vsel %vm1044, %v571, 0.0
    %1163 = vadd.xlane.f32.xlu0 %v1162
    %v1164 = vpop.xlane.xlu0 %1163
    %v1165 = vsel %vm1044, %v572, 0.0
    %1166 = vadd.xlane.f32.xlu0 %v1165
    %v1167 = vpop.xlane.xlu0 %1166
    %v1168 = vsel %vm1044, %v573, 0.0
    %1169 = vadd.xlane.f32.xlu0 %v1168
    %v1170 = vpop.xlane.xlu0 %1169
    %v1171 = vsel %vm1044, %v574, 0.0
    %1172 = vadd.xlane.f32.xlu0 %v1171
    %v1173 = vpop.xlane.xlu0 %1172
    %v1174 = vsel %vm1044, %v575, 0.0
    %1175 = vadd.xlane.f32.xlu0 %v1174
    %v1176 = vpop.xlane.xlu0 %1175
    %v1177 = vsel %vm1044, %v576, 0.0
    %1178 = vadd.xlane.f32.xlu0 %v1177
    %v1179 = vpop.xlane.xlu0 %1178
    %v1180 = vsel %vm1044, %v577, 0.0
    %1181 = vadd.xlane.f32.xlu0 %v1180
    %v1182 = vpop.xlane.xlu0 %1181
    %v1183 = vsel %vm1044, %v578, 0.0
    %1184 = vadd.xlane.f32.xlu0 %v1183
    %v1185 = vpop.xlane.xlu0 %1184
    %v1186 = vsel %vm1044, %v579, 0.0
    %1187 = vadd.xlane.f32.xlu0 %v1186
    %v1188 = vpop.xlane.xlu0 %1187
    %v1189 = vsel %vm1044, %v580, 0.0
    %1190 = vadd.xlane.f32.xlu0 %v1189
    %v1191 = vpop.xlane.xlu0 %1190
    %v1192 = vsel %vm1044, %v581, 0.0
    %1193 = vadd.xlane.f32.xlu0 %v1192
    %v1194 = vpop.xlane.xlu0 %1193
    %v1195 = vsel %vm1044, %v582, 0.0
    %1196 = vadd.xlane.f32.xlu0 %v1195
    %v1197 = vpop.xlane.xlu0 %1196
    %v1198 = vsel %vm1044, %v583, 0.0
    %1199 = vadd.xlane.f32.xlu0 %v1198
    %v1200 = vpop.xlane.xlu0 %1199
    %v1201 = vsel %vm1044, %v584, 0.0
    %1202 = vadd.xlane.f32.xlu0 %v1201
    %v1203 = vpop.xlane.xlu0 %1202
    %v1204 = vsel %vm1044, %v585, 0.0
    %1205 = vadd.xlane.f32.xlu0 %v1204
    %v1206 = vpop.xlane.xlu0 %1205
    %v1207 = vsel %vm1044, %v586, 0.0
    %1208 = vadd.xlane.f32.xlu0 %v1207
    %v1209 = vpop.xlane.xlu0 %1208
    %v1210 = vsel %vm1044, %v587, 0.0
    %1211 = vadd.xlane.f32.xlu0 %v1210
    %v1212 = vpop.xlane.xlu0 %1211
    %v1213 = vsel %vm1044, %v588, 0.0
    %1214 = vadd.xlane.f32.xlu0 %v1213
    %v1215 = vpop.xlane.xlu0 %1214
    %v1216 = vsel %vm1044, %v589, 0.0
    %1217 = vadd.xlane.f32.xlu0 %v1216
    %v1218 = vpop.xlane.xlu0 %1217
    %v1219 = vsel %vm1044, %v590, 0.0
    %1220 = vadd.xlane.f32.xlu0 %v1219
    %v1221 = vpop.xlane.xlu0 %1220
    %v1222 = vsel %vm1044, %v591, 0.0
    %1223 = vadd.xlane.f32.xlu0 %v1222
    %v1224 = vpop.xlane.xlu0 %1223
    %v1225 = vsel %vm1044, %v592, 0.0
    %1226 = vadd.xlane.f32.xlu0 %v1225
    %v1227 = vpop.xlane.xlu0 %1226
    %v1228 = vsel %vm1044, %v593, 0.0
    %1229 = vadd.xlane.f32.xlu0 %v1228
    %v1230 = vpop.xlane.xlu0 %1229
    %v1231 = vsel %vm1044, %v594, 0.0
    %1232 = vadd.xlane.f32.xlu0 %v1231
    %v1233 = vpop.xlane.xlu0 %1232
    %v1234 = vsel %vm1044, %v595, 0.0
    %1235 = vadd.xlane.f32.xlu0 %v1234
    %v1236 = vpop.xlane.xlu0 %1235
    %v1237 = vsel %vm1044, %v596, 0.0
    %1238 = vadd.xlane.f32.xlu0 %v1237
    %v1239 = vpop.xlane.xlu0 %1238
    %v1240 = vsel %vm1044, %v597, 0.0
    %1241 = vadd.xlane.f32.xlu0 %v1240
    %v1242 = vpop.xlane.xlu0 %1241
    %v1243 = vsel %vm1044, %v598, 0.0
    %1244 = vadd.xlane.f32.xlu0 %v1243
    %v1245 = vpop.xlane.xlu0 %1244
    %v1246 = vsel %vm1044, %v599, 0.0
    %1247 = vadd.xlane.f32.xlu0 %v1246
    %v1248 = vpop.xlane.xlu0 %1247
    %v1249 = vsel %vm1044, %v600, 0.0
    %1250 = vadd.xlane.f32.xlu0 %v1249
    %v1251 = vpop.xlane.xlu0 %1250
    %v1252 = vsel %vm1044, %v601, 0.0
    %1253 = vadd.xlane.f32.xlu0 %v1252
    %v1254 = vpop.xlane.xlu0 %1253
    %v1255 = vsel %vm1044, %v602, 0.0
    %1256 = vadd.xlane.f32.xlu0 %v1255
    %v1257 = vpop.xlane.xlu0 %1256
    %v1258 = vsel %vm1044, %v603, 0.0
    %1259 = vadd.xlane.f32.xlu0 %v1258
    %v1260 = vpop.xlane.xlu0 %1259
    %v1261 = vsel %vm1044, %v604, 0.0
    %1262 = vadd.xlane.f32.xlu0 %v1261
    %v1263 = vpop.xlane.xlu0 %1262
    %v1264 = vsel %vm1044, %v605, 0.0
    %1265 = vadd.xlane.f32.xlu0 %v1264
    %v1266 = vpop.xlane.xlu0 %1265
    %v1267 = vsel %vm1044, %v606, 0.0
    %1268 = vadd.xlane.f32.xlu0 %v1267
    %v1269 = vpop.xlane.xlu0 %1268
    %v1270 = vsel %vm1044, %v607, 0.0
    %1271 = vadd.xlane.f32.xlu0 %v1270
    %v1272 = vpop.xlane.xlu0 %1271
    %v1273 = vsel %vm1044, %v608, 0.0
    %1274 = vadd.xlane.f32.xlu0 %v1273
    %v1275 = vpop.xlane.xlu0 %1274
    %v1276 = vsel %vm1044, %v609, 0.0
    %1277 = vadd.xlane.f32.xlu0 %v1276
    %v1278 = vpop.xlane.xlu0 %1277
    %v1279 = vsel %vm1044, %v610, 0.0
    %1280 = vadd.xlane.f32.xlu0 %v1279
    %v1281 = vpop.xlane.xlu0 %1280
    %v1282 = vsel %vm1044, %v611, 0.0
    %1283 = vadd.xlane.f32.xlu0 %v1282
    %v1284 = vpop.xlane.xlu0 %1283
    %v1285 = vsel %vm1044, %v612, 0.0
    %1286 = vadd.xlane.f32.xlu0 %v1285
    %v1287 = vpop.xlane.xlu0 %1286
    %v1288 = vsel %vm1044, %v613, 0.0
    %1289 = vadd.xlane.f32.xlu0 %v1288
    %v1290 = vpop.xlane.xlu0 %1289
    %v1291 = vsel %vm1044, %v614, 0.0
    %1292 = vadd.xlane.f32.xlu0 %v1291
    %v1293 = vpop.xlane.xlu0 %1292
    %v1294 = vsel %vm1044, %v615, 0.0
    %1295 = vadd.xlane.f32.xlu0 %v1294
    %v1296 = vpop.xlane.xlu0 %1295
    %v1297 = vsel %vm1044, %v616, 0.0
    %1298 = vadd.xlane.f32.xlu0 %v1297
    %v1299 = vpop.xlane.xlu0 %1298
    %v1300 = vsel %vm1044, %v617, 0.0
    %1301 = vadd.xlane.f32.xlu0 %v1300
    %v1302 = vpop.xlane.xlu0 %1301
    %v1303 = vsel %vm1044, %v618, 0.0
    %1304 = vadd.xlane.f32.xlu0 %v1303
    %v1305 = vpop.xlane.xlu0 %1304
    %v1306 = vsel %vm1044, %v619, 0.0
    %1307 = vadd.xlane.f32.xlu0 %v1306
    %v1308 = vpop.xlane.xlu0 %1307
    %v1309 = vsel %vm1044, %v620, 0.0
    %1310 = vadd.xlane.f32.xlu0 %v1309
    %v1311 = vpop.xlane.xlu0 %1310
    %v1312 = vsel %vm1044, %v621, 0.0
    %1313 = vadd.xlane.f32.xlu0 %v1312
    %v1314 = vpop.xlane.xlu0 %1313
    %v1315 = vsel %vm1044, %v622, 0.0
    %1316 = vadd.xlane.f32.xlu0 %v1315
    %v1317 = vpop.xlane.xlu0 %1316
    %v1318 = vsel %vm1044, %v623, 0.0
    %1319 = vadd.xlane.f32.xlu0 %v1318
    %v1320 = vpop.xlane.xlu0 %1319
    %v1321 = vsel %vm1044, %v624, 0.0
    %1322 = vadd.xlane.f32.xlu0 %v1321
    %v1323 = vpop.xlane.xlu0 %1322
    %v1324 = vsel %vm1044, %v625, 0.0
    %1325 = vadd.xlane.f32.xlu0 %v1324
    %v1326 = vpop.xlane.xlu0 %1325
    %v1327 = vsel %vm1044, %v626, 0.0
    %1328 = vadd.xlane.f32.xlu0 %v1327
    %v1329 = vpop.xlane.xlu0 %1328
    %v1330 = vsel %vm1044, %v627, 0.0
    %1331 = vadd.xlane.f32.xlu0 %v1330
    %v1332 = vpop.xlane.xlu0 %1331
    %v1333 = vsel %vm1044, %v628, 0.0
    %1334 = vadd.xlane.f32.xlu0 %v1333
    %v1335 = vpop.xlane.xlu0 %1334
    %v1336 = vsel %vm1044, %v629, 0.0
    %1337 = vadd.xlane.f32.xlu0 %v1336
    %v1338 = vpop.xlane.xlu0 %1337
    %v1339 = vsel %vm1044, %v630, 0.0
    %1340 = vadd.xlane.f32.xlu0 %v1339
    %v1341 = vpop.xlane.xlu0 %1340
    %v1342 = vsel %vm1044, %v631, 0.0
    %1343 = vadd.xlane.f32.xlu0 %v1342
    %v1344 = vpop.xlane.xlu0 %1343
    %v1345 = vsel %vm1044, %v632, 0.0
    %1346 = vadd.xlane.f32.xlu0 %v1345
    %v1347 = vpop.xlane.xlu0 %1346
    %v1348 = vsel %vm1044, %v633, 0.0
    %1349 = vadd.xlane.f32.xlu0 %v1348
    %v1350 = vpop.xlane.xlu0 %1349
    %v1351 = vsel %vm1044, %v634, 0.0
    %1352 = vadd.xlane.f32.xlu0 %v1351
    %v1353 = vpop.xlane.xlu0 %1352
    %v1354 = vsel %vm1044, %v635, 0.0
    %1355 = vadd.xlane.f32.xlu0 %v1354
    %v1356 = vpop.xlane.xlu0 %1355
    %v1357 = vsel %vm1044, %v636, 0.0
    %1358 = vadd.xlane.f32.xlu0 %v1357
    %v1359 = vpop.xlane.xlu0 %1358
    %v1360 = vsel %vm1044, %v637, 0.0
    %1361 = vadd.xlane.f32.xlu0 %v1360
    %v1362 = vpop.xlane.xlu0 %1361
    %v1363 = vsel %vm1044, %v638, 0.0
    %1364 = vadd.xlane.f32.xlu0 %v1363
    %v1365 = vpop.xlane.xlu0 %1364
    %v1366 = vsel %vm1044, %v639, 0.0
    %1367 = vadd.xlane.f32.xlu0 %v1366
    %v1368 = vpop.xlane.xlu0 %1367
    %v1369 = vsel %vm1044, %v640, 0.0
    %1370 = vadd.xlane.f32.xlu0 %v1369
    %v1371 = vpop.xlane.xlu0 %1370
    %v1372 = vsel %vm1044, %v641, 0.0
    %1373 = vadd.xlane.f32.xlu0 %v1372
    %v1374 = vpop.xlane.xlu0 %1373
    %v1375 = vsel %vm1044, %v642, 0.0
    %1376 = vadd.xlane.f32.xlu0 %v1375
    %v1377 = vpop.xlane.xlu0 %1376
    %v1378 = vsel %vm1044, %v643, 0.0
    %1379 = vadd.xlane.f32.xlu0 %v1378
    %v1380 = vpop.xlane.xlu0 %1379
    %v1381 = vsel %vm1044, %v644, 0.0
    %1382 = vadd.xlane.f32.xlu0 %v1381
    %v1383 = vpop.xlane.xlu0 %1382
    %v1384 = vsel %vm1044, %v645, 0.0
    %1385 = vadd.xlane.f32.xlu0 %v1384
    %v1386 = vpop.xlane.xlu0 %1385
    %v1387 = vsel %vm1044, %v646, 0.0
    %1388 = vadd.xlane.f32.xlu0 %v1387
    %v1389 = vpop.xlane.xlu0 %1388
    %v1390 = vsel %vm1044, %v647, 0.0
    %1391 = vadd.xlane.f32.xlu0 %v1390
    %v1392 = vpop.xlane.xlu0 %1391
    %v1393 = vsel %vm1044, %v648, 0.0
    %1394 = vadd.xlane.f32.xlu0 %v1393
    %v1395 = vpop.xlane.xlu0 %1394
    %v1396 = vsel %vm1044, %v649, 0.0
    %1397 = vadd.xlane.f32.xlu0 %v1396
    %v1398 = vpop.xlane.xlu0 %1397
    %v1399 = vsel %vm1044, %v650, 0.0
    %1400 = vadd.xlane.f32.xlu0 %v1399
    %v1401 = vpop.xlane.xlu0 %1400
    %v1402 = vsel %vm1044, %v651, 0.0
    %1403 = vadd.xlane.f32.xlu0 %v1402
    %v1404 = vpop.xlane.xlu0 %1403
    %v1405 = vsel %vm1044, %v652, 0.0
    %1406 = vadd.xlane.f32.xlu0 %v1405
    %v1407 = vpop.xlane.xlu0 %1406
    %v1408 = vsel %vm1044, %v653, 0.0
    %1409 = vadd.xlane.f32.xlu0 %v1408
    %v1410 = vpop.xlane.xlu0 %1409
    %v1411 = vsel %vm1044, %v654, 0.0
    %1412 = vadd.xlane.f32.xlu0 %v1411
    %v1413 = vpop.xlane.xlu0 %1412
    %v1414 = vsel %vm1044, %v655, 0.0
    %1415 = vadd.xlane.f32.xlu0 %v1414
    %v1416 = vpop.xlane.xlu0 %1415
    %v1417 = vsel %vm1044, %v656, 0.0
    %1418 = vadd.xlane.f32.xlu0 %v1417
    %v1419 = vpop.xlane.xlu0 %1418
    %v1420 = vsel %vm1044, %v657, 0.0
    %1421 = vadd.xlane.f32.xlu0 %v1420
    %v1422 = vpop.xlane.xlu0 %1421
    %v1423 = vsel %vm1044, %v658, 0.0
    %1424 = vadd.xlane.f32.xlu0 %v1423
    %v1425 = vpop.xlane.xlu0 %1424
    %v1426 = vsel %vm1044, %v659, 0.0
    %1427 = vadd.xlane.f32.xlu0 %v1426
    %v1428 = vpop.xlane.xlu0 %1427
    %v1429 = vsel %vm1044, %v660, 0.0
    %1430 = vadd.xlane.f32.xlu0 %v1429
    %v1431 = vpop.xlane.xlu0 %1430
    %v1432 = vsel %vm1044, %v661, 0.0
    %1433 = vadd.xlane.f32.xlu0 %v1432
    %v1434 = vpop.xlane.xlu0 %1433
    %v1435 = vsel %vm1044, %v662, 0.0
    %1436 = vadd.xlane.f32.xlu0 %v1435
    %v1437 = vpop.xlane.xlu0 %1436
    %v1438 = vsel %vm1044, %v663, 0.0
    %1439 = vadd.xlane.f32.xlu0 %v1438
    %v1440 = vpop.xlane.xlu0 %1439
    %v1441 = vsel %vm1044, %v664, 0.0
    %1442 = vadd.xlane.f32.xlu0 %v1441
    %v1443 = vpop.xlane.xlu0 %1442
    %v1444 = vsel %vm1044, %v665, 0.0
    %1445 = vadd.xlane.f32.xlu0 %v1444
    %v1446 = vpop.xlane.xlu0 %1445
    %v1447 = vsel %vm1044, %v666, 0.0
    %1448 = vadd.xlane.f32.xlu0 %v1447
    %v1449 = vpop.xlane.xlu0 %1448
    %v1450 = vsel %vm1044, %v667, 0.0
    %1451 = vadd.xlane.f32.xlu0 %v1450
    %v1452 = vpop.xlane.xlu0 %1451
    %v1453 = vsel %vm1044, %v668, 0.0
    %1454 = vadd.xlane.f32.xlu0 %v1453
    %v1455 = vpop.xlane.xlu0 %1454
    %v1456 = vsel %vm1044, %v669, 0.0
    %1457 = vadd.xlane.f32.xlu0 %v1456
    %v1458 = vpop.xlane.xlu0 %1457
    %v1459 = vsel %vm1044, %v670, 0.0
    %1460 = vadd.xlane.f32.xlu0 %v1459
    %v1461 = vpop.xlane.xlu0 %1460
    %v1462 = vsel %vm1044, %v671, 0.0
    %1463 = vadd.xlane.f32.xlu0 %v1462
    %v1464 = vpop.xlane.xlu0 %1463
    %v1465 = vsel %vm1044, %v672, 0.0
    %1466 = vadd.xlane.f32.xlu0 %v1465
    %v1467 = vpop.xlane.xlu0 %1466
    %v1468 = vsel %vm1044, %v673, 0.0
    %1469 = vadd.xlane.f32.xlu0 %v1468
    %v1470 = vpop.xlane.xlu0 %1469
    %v1471 = vsel %vm1044, %v674, 0.0
    %1472 = vadd.xlane.f32.xlu0 %v1471
    %v1473 = vpop.xlane.xlu0 %1472
    %v1474 = vsel %vm1044, %v675, 0.0
    %1475 = vadd.xlane.f32.xlu0 %v1474
    %v1476 = vpop.xlane.xlu0 %1475
    %v1477 = vsel %vm1044, %v676, 0.0
    %1478 = vadd.xlane.f32.xlu0 %v1477
    %v1479 = vpop.xlane.xlu0 %1478
    %v1480 = vsel %vm1044, %v677, 0.0
    %1481 = vadd.xlane.f32.xlu0 %v1480
    %v1482 = vpop.xlane.xlu0 %1481
    %v1483 = vsel %vm1044, %v678, 0.0
    %1484 = vadd.xlane.f32.xlu0 %v1483
    %v1485 = vpop.xlane.xlu0 %1484
    %v1486 = vsel %vm1044, %v679, 0.0
    %1487 = vadd.xlane.f32.xlu0 %v1486
    %v1488 = vpop.xlane.xlu0 %1487
    %v1489 = vsel %vm1044, %v680, 0.0
    %1490 = vadd.xlane.f32.xlu0 %v1489
    %v1491 = vpop.xlane.xlu0 %1490
    %v1492 = vsel %vm1044, %v681, 0.0
    %1493 = vadd.xlane.f32.xlu0 %v1492
    %v1494 = vpop.xlane.xlu0 %1493
    %v1495 = vsel %vm1044, %v682, 0.0
    %1496 = vadd.xlane.f32.xlu0 %v1495
    %v1497 = vpop.xlane.xlu0 %1496
    %v1498 = vsel %vm1044, %v683, 0.0
    %1499 = vadd.xlane.f32.xlu0 %v1498
    %v1500 = vpop.xlane.xlu0 %1499
    %v1501 = vsel %vm1044, %v684, 0.0
    %1502 = vadd.xlane.f32.xlu0 %v1501
    %v1503 = vpop.xlane.xlu0 %1502
    %v1504 = vsel %vm1044, %v685, 0.0
    %1505 = vadd.xlane.f32.xlu0 %v1504
    %v1506 = vpop.xlane.xlu0 %1505
    %v1507 = vsel %vm1044, %v686, 0.0
    %1508 = vadd.xlane.f32.xlu0 %v1507
    %v1509 = vpop.xlane.xlu0 %1508
    %v1510 = vsel %vm1044, %v687, 0.0
    %1511 = vadd.xlane.f32.xlu0 %v1510
    %v1512 = vpop.xlane.xlu0 %1511
    %v1513 = vsel %vm1044, %v688, 0.0
    %1514 = vadd.xlane.f32.xlu0 %v1513
    %v1515 = vpop.xlane.xlu0 %1514
    %v1516 = vsel %vm1044, %v689, 0.0
    %1517 = vadd.xlane.f32.xlu0 %v1516
    %v1518 = vpop.xlane.xlu0 %1517
    %v1519 = vsel %vm1044, %v690, 0.0
    %1520 = vadd.xlane.f32.xlu0 %v1519
    %v1521 = vpop.xlane.xlu0 %1520
    %v1522 = vsel %vm1044, %v691, 0.0
    %1523 = vadd.xlane.f32.xlu0 %v1522
    %v1524 = vpop.xlane.xlu0 %1523
    %v1525 = vsel %vm1044, %v692, 0.0
    %1526 = vadd.xlane.f32.xlu0 %v1525
    %v1527 = vpop.xlane.xlu0 %1526
    %v1528 = vsel %vm1044, %v693, 0.0
    %1529 = vadd.xlane.f32.xlu0 %v1528
    %v1530 = vpop.xlane.xlu0 %1529
    %v1531 = vsel %vm1044, %v694, 0.0
    %1532 = vadd.xlane.f32.xlu0 %v1531
    %v1533 = vpop.xlane.xlu0 %1532
    %v1534 = vsel %vm1044, %v695, 0.0
    %1535 = vadd.xlane.f32.xlu0 %v1534
    %v1536 = vpop.xlane.xlu0 %1535
    %v1537 = vsel %vm1044, %v696, 0.0
    %1538 = vadd.xlane.f32.xlu0 %v1537
    %v1539 = vpop.xlane.xlu0 %1538
    %v1540 = vsel %vm1044, %v697, 0.0
    %1541 = vadd.xlane.f32.xlu0 %v1540
    %v1542 = vpop.xlane.xlu0 %1541
    %v1543 = vsel %vm1044, %v698, 0.0
    %1544 = vadd.xlane.f32.xlu0 %v1543
    %v1545 = vpop.xlane.xlu0 %1544
    %v1546 = vsel %vm1044, %v699, 0.0
    %1547 = vadd.xlane.f32.xlu0 %v1546
    %v1548 = vpop.xlane.xlu0 %1547
    %v1549 = vsel %vm1044, %v700, 0.0
    %1550 = vadd.xlane.f32.xlu0 %v1549
    %v1551 = vpop.xlane.xlu0 %1550
    %v1552 = vsel %vm1044, %v701, 0.0
    %1553 = vadd.xlane.f32.xlu0 %v1552
    %v1554 = vpop.xlane.xlu0 %1553
    %v1555 = vsel %vm1044, %v702, 0.0
    %1556 = vadd.xlane.f32.xlu0 %v1555
    %v1557 = vpop.xlane.xlu0 %1556
    %v1558 = vsel %vm1044, %v703, 0.0
    %1559 = vadd.xlane.f32.xlu0 %v1558
    %v1560 = vpop.xlane.xlu0 %1559
    %v1561 = vsel %vm1044, %v704, 0.0
    %1562 = vadd.xlane.f32.xlu0 %v1561
    %v1563 = vpop.xlane.xlu0 %1562
    %v1564 = vsel %vm1044, %v705, 0.0
    %1565 = vadd.xlane.f32.xlu0 %v1564
    %v1566 = vpop.xlane.xlu0 %1565
    %v1567 = vsel %vm1044, %v706, 0.0
    %1568 = vadd.xlane.f32.xlu0 %v1567
    %v1569 = vpop.xlane.xlu0 %1568
    %v1570 = vsel %vm1044, %v707, 0.0
    %1571 = vadd.xlane.f32.xlu0 %v1570
    %v1572 = vpop.xlane.xlu0 %1571
    %v1573 = vsel %vm1044, %v708, 0.0
    %1574 = vadd.xlane.f32.xlu0 %v1573
    %v1575 = vpop.xlane.xlu0 %1574
    %v1576 = vsel %vm1044, %v709, 0.0
    %1577 = vadd.xlane.f32.xlu0 %v1576
    %v1578 = vpop.xlane.xlu0 %1577
    %v1579 = vsel %vm1044, %v710, 0.0
    %1580 = vadd.xlane.f32.xlu0 %v1579
    %v1581 = vpop.xlane.xlu0 %1580
    %v1582 = vsel %vm1044, %v711, 0.0
    %1583 = vadd.xlane.f32.xlu0 %v1582
    %v1584 = vpop.xlane.xlu0 %1583
    %v1585 = vsel %vm1044, %v712, 0.0
    %1586 = vadd.xlane.f32.xlu0 %v1585
    %v1587 = vpop.xlane.xlu0 %1586
    %v1588 = vsel %vm1044, %v713, 0.0
    %1589 = vadd.xlane.f32.xlu0 %v1588
    %v1590 = vpop.xlane.xlu0 %1589
    %v1591 = vsel %vm1044, %v714, 0.0
    %1592 = vadd.xlane.f32.xlu0 %v1591
    %v1593 = vpop.xlane.xlu0 %1592
    %v1594 = vsel %vm1044, %v715, 0.0
    %1595 = vadd.xlane.f32.xlu0 %v1594
    %v1596 = vpop.xlane.xlu0 %1595
    %v1597 = vsel %vm1044, %v716, 0.0
    %1598 = vadd.xlane.f32.xlu0 %v1597
    %v1599 = vpop.xlane.xlu0 %1598
    %v1600 = vsel %vm1044, %v717, 0.0
    %1601 = vadd.xlane.f32.xlu0 %v1600
    %v1602 = vpop.xlane.xlu0 %1601
    %v1603 = vsel %vm1044, %v718, 0.0
    %1604 = vadd.xlane.f32.xlu0 %v1603
    %v1605 = vpop.xlane.xlu0 %1604
    %v1606 = vsel %vm1044, %v719, 0.0
    %1607 = vadd.xlane.f32.xlu0 %v1606
    %v1608 = vpop.xlane.xlu0 %1607
    %v1609 = vsel %vm1044, %v720, 0.0
    %1610 = vadd.xlane.f32.xlu0 %v1609
    %v1611 = vpop.xlane.xlu0 %1610
    %v1612 = vsel %vm1044, %v721, 0.0
    %1613 = vadd.xlane.f32.xlu0 %v1612
    %v1614 = vpop.xlane.xlu0 %1613
    %v1615 = vsel %vm1044, %v722, 0.0
    %1616 = vadd.xlane.f32.xlu0 %v1615
    %v1617 = vpop.xlane.xlu0 %1616
    %v1618 = vsel %vm1044, %v723, 0.0
    %1619 = vadd.xlane.f32.xlu0 %v1618
    %v1620 = vpop.xlane.xlu0 %1619
    %v1621 = vsel %vm1044, %v724, 0.0
    %1622 = vadd.xlane.f32.xlu0 %v1621
    %v1623 = vpop.xlane.xlu0 %1622
    %v1624 = vsel %vm1044, %v725, 0.0
    %1625 = vadd.xlane.f32.xlu0 %v1624
    %v1626 = vpop.xlane.xlu0 %1625
    %v1627 = vsel %vm1044, %v726, 0.0
    %1628 = vadd.xlane.f32.xlu0 %v1627
    %v1629 = vpop.xlane.xlu0 %1628
    %v1630 = vsel %vm1044, %v727, 0.0
    %1631 = vadd.xlane.f32.xlu0 %v1630
    %v1632 = vpop.xlane.xlu0 %1631
    %v1633 = vsel %vm1044, %v728, 0.0
    %1634 = vadd.xlane.f32.xlu0 %v1633
    %v1635 = vpop.xlane.xlu0 %1634
    %v1636 = vsel %vm1044, %v729, 0.0
    %1637 = vadd.xlane.f32.xlu0 %v1636
    %v1638 = vpop.xlane.xlu0 %1637
    %v1639 = vsel %vm1044, %v730, 0.0
    %1640 = vadd.xlane.f32.xlu0 %v1639
    %v1641 = vpop.xlane.xlu0 %1640
    %v1642 = vsel %vm1044, %v731, 0.0
    %1643 = vadd.xlane.f32.xlu0 %v1642
    %v1644 = vpop.xlane.xlu0 %1643
    %v1645 = vsel %vm1044, %v732, 0.0
    %1646 = vadd.xlane.f32.xlu0 %v1645
    %v1647 = vpop.xlane.xlu0 %1646
    %v1648 = vsel %vm1044, %v733, 0.0
    %1649 = vadd.xlane.f32.xlu0 %v1648
    %v1650 = vpop.xlane.xlu0 %1649
    %v1651 = vsel %vm1044, %v734, 0.0
    %1652 = vadd.xlane.f32.xlu0 %v1651
    %v1653 = vpop.xlane.xlu0 %1652
    %v1654 = vsel %vm1044, %v735, 0.0
    %1655 = vadd.xlane.f32.xlu0 %v1654
    %v1656 = vpop.xlane.xlu0 %1655
    %v1657 = vsel %vm1044, %v736, 0.0
    %1658 = vadd.xlane.f32.xlu0 %v1657
    %v1659 = vpop.xlane.xlu0 %1658
    %v1660 = vsel %vm1044, %v737, 0.0
    %1661 = vadd.xlane.f32.xlu0 %v1660
    %v1662 = vpop.xlane.xlu0 %1661
    %v1663 = vsel %vm1044, %v738, 0.0
    %1664 = vadd.xlane.f32.xlu0 %v1663
    %v1665 = vpop.xlane.xlu0 %1664
    %v1666 = vsel %vm1044, %v739, 0.0
    %1667 = vadd.xlane.f32.xlu0 %v1666
    %v1668 = vpop.xlane.xlu0 %1667
    %v1669 = vsel %vm1044, %v740, 0.0
    %1670 = vadd.xlane.f32.xlu0 %v1669
    %v1671 = vpop.xlane.xlu0 %1670
    %v1672 = vsel %vm1044, %v741, 0.0
    %1673 = vadd.xlane.f32.xlu0 %v1672
    %v1674 = vpop.xlane.xlu0 %1673
    %v1675 = vsel %vm1044, %v742, 0.0
    %1676 = vadd.xlane.f32.xlu0 %v1675
    %v1677 = vpop.xlane.xlu0 %1676
    %v1678 = vsel %vm1044, %v743, 0.0
    %1679 = vadd.xlane.f32.xlu0 %v1678
    %v1680 = vpop.xlane.xlu0 %1679
    %v1681 = vsel %vm1044, %v744, 0.0
    %1682 = vadd.xlane.f32.xlu0 %v1681
    %v1683 = vpop.xlane.xlu0 %1682
    %v1684 = vsel %vm1044, %v745, 0.0
    %1685 = vadd.xlane.f32.xlu0 %v1684
    %v1686 = vpop.xlane.xlu0 %1685
    %v1687 = vsel %vm1044, %v746, 0.0
    %1688 = vadd.xlane.f32.xlu0 %v1687
    %v1689 = vpop.xlane.xlu0 %1688
    %v1690 = vsel %vm1044, %v747, 0.0
    %1691 = vadd.xlane.f32.xlu0 %v1690
    %v1692 = vpop.xlane.xlu0 %1691
    %v1693 = vsel %vm1044, %v748, 0.0
    %1694 = vadd.xlane.f32.xlu0 %v1693
    %v1695 = vpop.xlane.xlu0 %1694
    %v1696 = vsel %vm1044, %v749, 0.0
    %1697 = vadd.xlane.f32.xlu0 %v1696
    %v1698 = vpop.xlane.xlu0 %1697
    %v1699 = vsel %vm1044, %v750, 0.0
    %1700 = vadd.xlane.f32.xlu0 %v1699
    %v1701 = vpop.xlane.xlu0 %1700
    %v1702 = vsel %vm1044, %v751, 0.0
    %1703 = vadd.xlane.f32.xlu0 %v1702
    %v1704 = vpop.xlane.xlu0 %1703
    %v1705 = vsel %vm1044, %v752, 0.0
    %1706 = vadd.xlane.f32.xlu0 %v1705
    %v1707 = vpop.xlane.xlu0 %1706
    %v1708 = vsel %vm1044, %v753, 0.0
    %1709 = vadd.xlane.f32.xlu0 %v1708
    %v1710 = vpop.xlane.xlu0 %1709
    %v1711 = vsel %vm1044, %v754, 0.0
    %1712 = vadd.xlane.f32.xlu0 %v1711
    %v1713 = vpop.xlane.xlu0 %1712
    %v1714 = vsel %vm1044, %v755, 0.0
    %1715 = vadd.xlane.f32.xlu0 %v1714
    %v1716 = vpop.xlane.xlu0 %1715
    %v1717 = vsel %vm1044, %v756, 0.0
    %1718 = vadd.xlane.f32.xlu0 %v1717
    %v1719 = vpop.xlane.xlu0 %1718
    %v1720 = vsel %vm1044, %v757, 0.0
    %1721 = vadd.xlane.f32.xlu0 %v1720
    %v1722 = vpop.xlane.xlu0 %1721
    %v1723 = vsel %vm1044, %v758, 0.0
    %1724 = vadd.xlane.f32.xlu0 %v1723
    %v1725 = vpop.xlane.xlu0 %1724
    %v1726 = vsel %vm1044, %v759, 0.0
    %1727 = vadd.xlane.f32.xlu0 %v1726
    %v1728 = vpop.xlane.xlu0 %1727
    %v1729 = vsel %vm1044, %v760, 0.0
    %1730 = vadd.xlane.f32.xlu0 %v1729
    %v1731 = vpop.xlane.xlu0 %1730
    %v1732 = vsel %vm1044, %v761, 0.0
    %1733 = vadd.xlane.f32.xlu0 %v1732
    %v1734 = vpop.xlane.xlu0 %1733
    %v1735 = vsel %vm1044, %v762, 0.0
    %1736 = vadd.xlane.f32.xlu0 %v1735
    %v1737 = vpop.xlane.xlu0 %1736
    %v1738 = vsel %vm1044, %v763, 0.0
    %1739 = vadd.xlane.f32.xlu0 %v1738
    %v1740 = vpop.xlane.xlu0 %1739
    %v1741 = vsel %vm1044, %v764, 0.0
    %1742 = vadd.xlane.f32.xlu0 %v1741
    %v1743 = vpop.xlane.xlu0 %1742
    %v1744 = vsel %vm1044, %v765, 0.0
    %1745 = vadd.xlane.f32.xlu0 %v1744
    %v1746 = vpop.xlane.xlu0 %1745
    %v1747 = vsel %vm1044, %v766, 0.0
    %1748 = vadd.xlane.f32.xlu0 %v1747
    %v1749 = vpop.xlane.xlu0 %1748
    %v1750 = vsel %vm1044, %v767, 0.0
    %1751 = vadd.xlane.f32.xlu0 %v1750
    %v1752 = vpop.xlane.xlu0 %1751
    %v1753 = vsel %vm1044, %v768, 0.0
    %1754 = vadd.xlane.f32.xlu0 %v1753
    %v1755 = vpop.xlane.xlu0 %1754
    %v1756 = vsel %vm1044, %v769, 0.0
    %1757 = vadd.xlane.f32.xlu0 %v1756
    %v1758 = vpop.xlane.xlu0 %1757
    %v1759 = vsel %vm1044, %v770, 0.0
    %1760 = vadd.xlane.f32.xlu0 %v1759
    %v1761 = vpop.xlane.xlu0 %1760
    %v1762 = vsel %vm1044, %v771, 0.0
    %1763 = vadd.xlane.f32.xlu0 %v1762
    %v1764 = vpop.xlane.xlu0 %1763
    %v1765 = vsel %vm1044, %v772, 0.0
    %1766 = vadd.xlane.f32.xlu0 %v1765
    %v1767 = vpop.xlane.xlu0 %1766
    %v1768 = vsel %vm1044, %v773, 0.0
    %1769 = vadd.xlane.f32.xlu0 %v1768
    %v1770 = vpop.xlane.xlu0 %1769
    %v1771 = vsel %vm1044, %v774, 0.0
    %1772 = vadd.xlane.f32.xlu0 %v1771
    %v1773 = vpop.xlane.xlu0 %1772
    %v1774 = vsel %vm1044, %v775, 0.0
    %1775 = vadd.xlane.f32.xlu0 %v1774
    %v1776 = vpop.xlane.xlu0 %1775
    %v1777 = vsel %vm1044, %v776, 0.0
    %1778 = vadd.xlane.f32.xlu0 %v1777
    %v1779 = vpop.xlane.xlu0 %1778
    %v1780 = vsel %vm1044, %v777, 0.0
    %1781 = vadd.xlane.f32.xlu0 %v1780
    %v1782 = vpop.xlane.xlu0 %1781
    %v1783 = vsel %vm1044, %v778, 0.0
    %1784 = vadd.xlane.f32.xlu0 %v1783
    %v1785 = vpop.xlane.xlu0 %1784
    %v1786 = vsel %vm1044, %v779, 0.0
    %1787 = vadd.xlane.f32.xlu0 %v1786
    %v1788 = vpop.xlane.xlu0 %1787
    %v1789 = vsel %vm1044, %v780, 0.0
    %1790 = vadd.xlane.f32.xlu0 %v1789
    %v1791 = vpop.xlane.xlu0 %1790
    %v1792 = vsel %vm1044, %v781, 0.0
    %1793 = vadd.xlane.f32.xlu0 %v1792
    %v1794 = vpop.xlane.xlu0 %1793
    %v1795 = vsel %vm1044, %v782, 0.0
    %1796 = vadd.xlane.f32.xlu0 %v1795
    %v1797 = vpop.xlane.xlu0 %1796
    %v1798 = vsel %vm1044, %v783, 0.0
    %1799 = vadd.xlane.f32.xlu0 %v1798
    %v1800 = vpop.xlane.xlu0 %1799
    %v1801 = vsel %vm1044, %v784, 0.0
    %1802 = vadd.xlane.f32.xlu0 %v1801
    %v1803 = vpop.xlane.xlu0 %1802
    %v1804 = vsel %vm1044, %v785, 0.0
    %1805 = vadd.xlane.f32.xlu0 %v1804
    %v1806 = vpop.xlane.xlu0 %1805
    %v1807 = vsel %vm1044, %v786, 0.0
    %1808 = vadd.xlane.f32.xlu0 %v1807
    %v1809 = vpop.xlane.xlu0 %1808
    %v1810 = vsel %vm1044, %v787, 0.0
    %1811 = vadd.xlane.f32.xlu0 %v1810
    %v1812 = vpop.xlane.xlu0 %1811
    %v1813 = vsel %vm1044, %v788, 0.0
    %1814 = vadd.xlane.f32.xlu0 %v1813
    %v1815 = vpop.xlane.xlu0 %1814
    %v1816 = vsel %vm1044, %v789, 0.0
    %1817 = vadd.xlane.f32.xlu0 %v1816
    %v1818 = vpop.xlane.xlu0 %1817
    %v1819 = vsel %vm1044, %v790, 0.0
    %1820 = vadd.xlane.f32.xlu0 %v1819
    %v1821 = vpop.xlane.xlu0 %1820
    %v1822 = vsel %vm1044, %v791, 0.0
    %1823 = vadd.xlane.f32.xlu0 %v1822
    %v1824 = vpop.xlane.xlu0 %1823
    %v1825 = vsel %vm1044, %v792, 0.0
    %1826 = vadd.xlane.f32.xlu0 %v1825
    %v1827 = vpop.xlane.xlu0 %1826
    %v1828 = vsel %vm1044, %v793, 0.0
    %1829 = vadd.xlane.f32.xlu0 %v1828
    %v1830 = vpop.xlane.xlu0 %1829
    %v1831 = vsel %vm1044, %v794, 0.0
    %1832 = vadd.xlane.f32.xlu0 %v1831
    %v1833 = vpop.xlane.xlu0 %1832
    %v1834 = vsel %vm1044, %v795, 0.0
    %1835 = vadd.xlane.f32.xlu0 %v1834
    %v1836 = vpop.xlane.xlu0 %1835
    %v1837 = vsel %vm1044, %v796, 0.0
    %1838 = vadd.xlane.f32.xlu0 %v1837
    %v1839 = vpop.xlane.xlu0 %1838
    %v1840 = vsel %vm1044, %v797, 0.0
    %1841 = vadd.xlane.f32.xlu0 %v1840
    %v1842 = vpop.xlane.xlu0 %1841
    %v1843 = vsel %vm1044, %v798, 0.0
    %1844 = vadd.xlane.f32.xlu0 %v1843
    %v1845 = vpop.xlane.xlu0 %1844
    %v1846 = vsel %vm1044, %v799, 0.0
    %1847 = vadd.xlane.f32.xlu0 %v1846
    %v1848 = vpop.xlane.xlu0 %1847
    %v1849 = vsel %vm1044, %v800, 0.0
    %1850 = vadd.xlane.f32.xlu0 %v1849
    %v1851 = vpop.xlane.xlu0 %1850
    %v1852 = vsel %vm1044, %v801, 0.0
    %1853 = vadd.xlane.f32.xlu0 %v1852
    %v1854 = vpop.xlane.xlu0 %1853
    %v1855 = vsel %vm1044, %v802, 0.0
    %1856 = vadd.xlane.f32.xlu0 %v1855
    %v1857 = vpop.xlane.xlu0 %1856
    %v1858 = vsel %vm1044, %v803, 0.0
    %1859 = vadd.xlane.f32.xlu0 %v1858
    %v1860 = vpop.xlane.xlu0 %1859
    %v1861 = vsel %vm1044, %v804, 0.0
    %1862 = vadd.xlane.f32.xlu0 %v1861
    %v1863 = vpop.xlane.xlu0 %1862
    %v1864 = vsel %vm1044, %v805, 0.0
    %1865 = vadd.xlane.f32.xlu0 %v1864
    %v1866 = vpop.xlane.xlu0 %1865
    %v1867 = vsel %vm1044, %v806, 0.0
    %1868 = vadd.xlane.f32.xlu0 %v1867
    %v1869 = vpop.xlane.xlu0 %1868
    %v1870 = vsel %vm1044, %v807, 0.0
    %1871 = vadd.xlane.f32.xlu0 %v1870
    %v1872 = vpop.xlane.xlu0 %1871
    %v1873 = vsel %vm1044, %v808, 0.0
    %1874 = vadd.xlane.f32.xlu0 %v1873
    %v1875 = vpop.xlane.xlu0 %1874
    %v1876 = vsel %vm1044, %v809, 0.0
    %1877 = vadd.xlane.f32.xlu0 %v1876
    %v1878 = vpop.xlane.xlu0 %1877
    %v1879 = vsel %vm1044, %v810, 0.0
    %1880 = vadd.xlane.f32.xlu0 %v1879
    %v1881 = vpop.xlane.xlu0 %1880
    %v1882 = vsel %vm1044, %v811, 0.0
    %1883 = vadd.xlane.f32.xlu0 %v1882
    %v1884 = vpop.xlane.xlu0 %1883
    %v1885 = vsel %vm1044, %v812, 0.0
    %1886 = vadd.xlane.f32.xlu0 %v1885
    %v1887 = vpop.xlane.xlu0 %1886
    %v1888 = vsel %vm1044, %v813, 0.0
    %1889 = vadd.xlane.f32.xlu0 %v1888
    %v1890 = vpop.xlane.xlu0 %1889
    %v1891 = vsel %vm1044, %v814, 0.0
    %1892 = vadd.xlane.f32.xlu0 %v1891
    %v1893 = vpop.xlane.xlu0 %1892
    %v1894 = vsel %vm1044, %v815, 0.0
    %1895 = vadd.xlane.f32.xlu0 %v1894
    %v1896 = vpop.xlane.xlu0 %1895
    %v1897 = vsel %vm1044, %v816, 0.0
    %1898 = vadd.xlane.f32.xlu0 %v1897
    %v1899 = vpop.xlane.xlu0 %1898
    %v1900 = vsel %vm1044, %v817, 0.0
    %1901 = vadd.xlane.f32.xlu0 %v1900
    %v1902 = vpop.xlane.xlu0 %1901
    %v1903 = vsel %vm1044, %v818, 0.0
    %1904 = vadd.xlane.f32.xlu0 %v1903
    %v1905 = vpop.xlane.xlu0 %1904
    %v1906 = vsel %vm1044, %v819, 0.0
    %1907 = vadd.xlane.f32.xlu0 %v1906
    %v1908 = vpop.xlane.xlu0 %1907
    %v1909 = vsel %vm1044, %v820, 0.0
    %1910 = vadd.xlane.f32.xlu0 %v1909
    %v1911 = vpop.xlane.xlu0 %1910
    %v1912 = vsel %vm1044, %v821, 0.0
    %1913 = vadd.xlane.f32.xlu0 %v1912
    %v1914 = vpop.xlane.xlu0 %1913
    %v1915 = vsel %vm1044, %v822, 0.0
    %1916 = vadd.xlane.f32.xlu0 %v1915
    %v1917 = vpop.xlane.xlu0 %1916
    %v1918 = vsel %vm1044, %v823, 0.0
    %1919 = vadd.xlane.f32.xlu0 %v1918
    %v1920 = vpop.xlane.xlu0 %1919
    %v1921 = vsel %vm1044, %v824, 0.0
    %1922 = vadd.xlane.f32.xlu0 %v1921
    %v1923 = vpop.xlane.xlu0 %1922
    %v1924 = vsel %vm1044, %v825, 0.0
    %1925 = vadd.xlane.f32.xlu0 %v1924
    %v1926 = vpop.xlane.xlu0 %1925
    %v1927 = vsel %vm1044, %v826, 0.0
    %1928 = vadd.xlane.f32.xlu0 %v1927
    %v1929 = vpop.xlane.xlu0 %1928
    %v1930 = vsel %vm1044, %v827, 0.0
    %1931 = vadd.xlane.f32.xlu0 %v1930
    %v1932 = vpop.xlane.xlu0 %1931
    %v1933 = vsel %vm1044, %v828, 0.0
    %1934 = vadd.xlane.f32.xlu0 %v1933
    %v1935 = vpop.xlane.xlu0 %1934
    %v1936 = vsel %vm1044, %v829, 0.0
    %1937 = vadd.xlane.f32.xlu0 %v1936
    %v1938 = vpop.xlane.xlu0 %1937
    %v1939 = vsel %vm1044, %v830, 0.0
    %1940 = vadd.xlane.f32.xlu0 %v1939
    %v1941 = vpop.xlane.xlu0 %1940
    %v1942 = vsel %vm1044, %v831, 0.0
    %1943 = vadd.xlane.f32.xlu0 %v1942
    %v1944 = vpop.xlane.xlu0 %1943
    %v1945 = vsel %vm1044, %v832, 0.0
    %1946 = vadd.xlane.f32.xlu0 %v1945
    %v1947 = vpop.xlane.xlu0 %1946
    %v1948 = vsel %vm1044, %v833, 0.0
    %1949 = vadd.xlane.f32.xlu0 %v1948
    %v1950 = vpop.xlane.xlu0 %1949
    %v1951 = vsel %vm1044, %v834, 0.0
    %1952 = vadd.xlane.f32.xlu0 %v1951
    %v1953 = vpop.xlane.xlu0 %1952
    %v1954 = vsel %vm1044, %v835, 0.0
    %1955 = vadd.xlane.f32.xlu0 %v1954
    %v1956 = vpop.xlane.xlu0 %1955
    %v1957 = vsel %vm1044, %v836, 0.0
    %1958 = vadd.xlane.f32.xlu0 %v1957
    %v1959 = vpop.xlane.xlu0 %1958
    %v1960 = vsel %vm1044, %v837, 0.0
    %1961 = vadd.xlane.f32.xlu0 %v1960
    %v1962 = vpop.xlane.xlu0 %1961
    %v1963 = vsel %vm1044, %v838, 0.0
    %1964 = vadd.xlane.f32.xlu0 %v1963
    %v1965 = vpop.xlane.xlu0 %1964
    %v1966 = vsel %vm1044, %v839, 0.0
    %1967 = vadd.xlane.f32.xlu0 %v1966
    %v1968 = vpop.xlane.xlu0 %1967
    %v1969 = vsel %vm1044, %v840, 0.0
    %1970 = vadd.xlane.f32.xlu0 %v1969
    %v1971 = vpop.xlane.xlu0 %1970
    %v1972 = vsel %vm1044, %v841, 0.0
    %1973 = vadd.xlane.f32.xlu0 %v1972
    %v1974 = vpop.xlane.xlu0 %1973
    %v1975 = vsel %vm1044, %v842, 0.0
    %1976 = vadd.xlane.f32.xlu0 %v1975
    %v1977 = vpop.xlane.xlu0 %1976
    %v1978 = vsel %vm1044, %v843, 0.0
    %1979 = vadd.xlane.f32.xlu0 %v1978
    %v1980 = vpop.xlane.xlu0 %1979
    %v1981 = vsel %vm1044, %v844, 0.0
    %1982 = vadd.xlane.f32.xlu0 %v1981
    %v1983 = vpop.xlane.xlu0 %1982
    %v1984 = vsel %vm1044, %v845, 0.0
    %1985 = vadd.xlane.f32.xlu0 %v1984
    %v1986 = vpop.xlane.xlu0 %1985
    %v1987 = vsel %vm1044, %v846, 0.0
    %1988 = vadd.xlane.f32.xlu0 %v1987
    %v1989 = vpop.xlane.xlu0 %1988
    %v1990 = vsel %vm1044, %v847, 0.0
    %1991 = vadd.xlane.f32.xlu0 %v1990
    %v1992 = vpop.xlane.xlu0 %1991
    %v1993 = vsel %vm1044, %v848, 0.0
    %1994 = vadd.xlane.f32.xlu0 %v1993
    %v1995 = vpop.xlane.xlu0 %1994
    %v1996 = vsel %vm1044, %v849, 0.0
    %1997 = vadd.xlane.f32.xlu0 %v1996
    %v1998 = vpop.xlane.xlu0 %1997
    %v1999 = vsel %vm1044, %v850, 0.0
    %2000 = vadd.xlane.f32.xlu0 %v1999
    %v2001 = vpop.xlane.xlu0 %2000
    %v2002 = vsel %vm1044, %v851, 0.0
    %2003 = vadd.xlane.f32.xlu0 %v2002
    %v2004 = vpop.xlane.xlu0 %2003
    %v2005 = vsel %vm1044, %v852, 0.0
    %2006 = vadd.xlane.f32.xlu0 %v2005
    %v2007 = vpop.xlane.xlu0 %2006
    %v2008 = vsel %vm1044, %v853, 0.0
    %2009 = vadd.xlane.f32.xlu0 %v2008
    %v2010 = vpop.xlane.xlu0 %2009
    %v2011 = vsel %vm1044, %v854, 0.0
    %2012 = vadd.xlane.f32.xlu0 %v2011
    %v2013 = vpop.xlane.xlu0 %2012
    %v2014 = vsel %vm1044, %v855, 0.0
    %2015 = vadd.xlane.f32.xlu0 %v2014
    %v2016 = vpop.xlane.xlu0 %2015
    %v2017 = vsel %vm1044, %v856, 0.0
    %2018 = vadd.xlane.f32.xlu0 %v2017
    %v2019 = vpop.xlane.xlu0 %2018
    %v2020 = vsel %vm1044, %v857, 0.0
    %2021 = vadd.xlane.f32.xlu0 %v2020
    %v2022 = vpop.xlane.xlu0 %2021
    %v2023 = vsel %vm1044, %v858, 0.0
    %2024 = vadd.xlane.f32.xlu0 %v2023
    %v2025 = vpop.xlane.xlu0 %2024
    %v2026 = vsel %vm1044, %v859, 0.0
    %2027 = vadd.xlane.f32.xlu0 %v2026
    %v2028 = vpop.xlane.xlu0 %2027
    %v2029 = vsel %vm1044, %v860, 0.0
    %2030 = vadd.xlane.f32.xlu0 %v2029
    %v2031 = vpop.xlane.xlu0 %2030
    %v2032 = vsel %vm1044, %v861, 0.0
    %2033 = vadd.xlane.f32.xlu0 %v2032
    %v2034 = vpop.xlane.xlu0 %2033
    %v2035 = vsel %vm1044, %v862, 0.0
    %2036 = vadd.xlane.f32.xlu0 %v2035
    %v2037 = vpop.xlane.xlu0 %2036
    %v2038 = vsel %vm1044, %v863, 0.0
    %2039 = vadd.xlane.f32.xlu0 %v2038
    %v2040 = vpop.xlane.xlu0 %2039
    %v2041 = vsel %vm1044, %v864, 0.0
    %2042 = vadd.xlane.f32.xlu0 %v2041
    %v2043 = vpop.xlane.xlu0 %2042
    %v2044 = vsel %vm1044, %v865, 0.0
    %2045 = vadd.xlane.f32.xlu0 %v2044
    %v2046 = vpop.xlane.xlu0 %2045
    %v2047 = vsel %vm1044, %v866, 0.0
    %2048 = vadd.xlane.f32.xlu0 %v2047
    %v2049 = vpop.xlane.xlu0 %2048
    %v2050 = vsel %vm1044, %v867, 0.0
    %2051 = vadd.xlane.f32.xlu0 %v2050
    %v2052 = vpop.xlane.xlu0 %2051
    %v2053 = vsel %vm1044, %v868, 0.0
    %2054 = vadd.xlane.f32.xlu0 %v2053
    %v2055 = vpop.xlane.xlu0 %2054
    %v2056 = vsel %vm1044, %v869, 0.0
    %2057 = vadd.xlane.f32.xlu0 %v2056
    %v2058 = vpop.xlane.xlu0 %2057
    %v2059 = vsel %vm1044, %v870, 0.0
    %2060 = vadd.xlane.f32.xlu0 %v2059
    %v2061 = vpop.xlane.xlu0 %2060
    %v2062 = vsel %vm1044, %v871, 0.0
    %2063 = vadd.xlane.f32.xlu0 %v2062
    %v2064 = vpop.xlane.xlu0 %2063
    %v2065 = vsel %vm1044, %v872, 0.0
    %2066 = vadd.xlane.f32.xlu0 %v2065
    %v2067 = vpop.xlane.xlu0 %2066
    %v2068 = vsel %vm1044, %v873, 0.0
    %2069 = vadd.xlane.f32.xlu0 %v2068
    %v2070 = vpop.xlane.xlu0 %2069
    %v2071 = vsel %vm1044, %v874, 0.0
    %2072 = vadd.xlane.f32.xlu0 %v2071
    %v2073 = vpop.xlane.xlu0 %2072
    %v2074 = vsel %vm1044, %v875, 0.0
    %2075 = vadd.xlane.f32.xlu0 %v2074
    %v2076 = vpop.xlane.xlu0 %2075
    %v2077 = vsel %vm1044, %v876, 0.0
    %2078 = vadd.xlane.f32.xlu0 %v2077
    %v2079 = vpop.xlane.xlu0 %2078
    %v2080 = vsel %vm1044, %v877, 0.0
    %2081 = vadd.xlane.f32.xlu0 %v2080
    %v2082 = vpop.xlane.xlu0 %2081
    %v2083 = vsel %vm1044, %v878, 0.0
    %2084 = vadd.xlane.f32.xlu0 %v2083
    %v2085 = vpop.xlane.xlu0 %2084
    %v2086 = vsel %vm1044, %v879, 0.0
    %2087 = vadd.xlane.f32.xlu0 %v2086
    %v2088 = vpop.xlane.xlu0 %2087
    %v2089 = vsel %vm1044, %v880, 0.0
    %2090 = vadd.xlane.f32.xlu0 %v2089
    %v2091 = vpop.xlane.xlu0 %2090
    %v2092 = vsel %vm1044, %v881, 0.0
    %2093 = vadd.xlane.f32.xlu0 %v2092
    %v2094 = vpop.xlane.xlu0 %2093
    %v2095 = vsel %vm1044, %v882, 0.0
    %2096 = vadd.xlane.f32.xlu0 %v2095
    %v2097 = vpop.xlane.xlu0 %2096
    %v2098 = vsel %vm1044, %v883, 0.0
    %2099 = vadd.xlane.f32.xlu0 %v2098
    %v2100 = vpop.xlane.xlu0 %2099
    %v2101 = vsel %vm1044, %v884, 0.0
    %2102 = vadd.xlane.f32.xlu0 %v2101
    %v2103 = vpop.xlane.xlu0 %2102
    %v2104 = vsel %vm1044, %v885, 0.0
    %2105 = vadd.xlane.f32.xlu0 %v2104
    %v2106 = vpop.xlane.xlu0 %2105
    %v2107 = vsel %vm1044, %v886, 0.0
    %2108 = vadd.xlane.f32.xlu0 %v2107
    %v2109 = vpop.xlane.xlu0 %2108
    %v2110 = vsel %vm1044, %v887, 0.0
    %2111 = vadd.xlane.f32.xlu0 %v2110
    %v2112 = vpop.xlane.xlu0 %2111
    %v2113 = vsel %vm1044, %v888, 0.0
    %2114 = vadd.xlane.f32.xlu0 %v2113
    %v2115 = vpop.xlane.xlu0 %2114
    %v2116 = vsel %vm1044, %v889, 0.0
    %2117 = vadd.xlane.f32.xlu0 %v2116
    %v2118 = vpop.xlane.xlu0 %2117
    %v2119 = vsel %vm1044, %v890, 0.0
    %2120 = vadd.xlane.f32.xlu0 %v2119
    %v2121 = vpop.xlane.xlu0 %2120
    %v2122 = vsel %vm1044, %v891, 0.0
    %2123 = vadd.xlane.f32.xlu0 %v2122
    %v2124 = vpop.xlane.xlu0 %2123
    %v2125 = vsel %vm1044, %v892, 0.0
    %2126 = vadd.xlane.f32.xlu0 %v2125
    %v2127 = vpop.xlane.xlu0 %2126
    %v2128 = vsel %vm1044, %v893, 0.0
    %2129 = vadd.xlane.f32.xlu0 %v2128
    %v2130 = vpop.xlane.xlu0 %2129
    %v2131 = vsel %vm1044, %v894, 0.0
    %2132 = vadd.xlane.f32.xlu0 %v2131
    %v2133 = vpop.xlane.xlu0 %2132
    %v2134 = vsel %vm1044, %v895, 0.0
    %2135 = vadd.xlane.f32.xlu0 %v2134
    %v2136 = vpop.xlane.xlu0 %2135
    %v2137 = vsel %vm1044, %v896, 0.0
    %2138 = vadd.xlane.f32.xlu0 %v2137
    %v2139 = vpop.xlane.xlu0 %2138
    %v2140 = vsel %vm1044, %v897, 0.0
    %2141 = vadd.xlane.f32.xlu0 %v2140
    %v2142 = vpop.xlane.xlu0 %2141
    %v2143 = vsel %vm1044, %v898, 0.0
    %2144 = vadd.xlane.f32.xlu0 %v2143
    %v2145 = vpop.xlane.xlu0 %2144
    %v2146 = vsel %vm1044, %v899, 0.0
    %2147 = vadd.xlane.f32.xlu0 %v2146
    %v2148 = vpop.xlane.xlu0 %2147
    %v2149 = vsel %vm1044, %v900, 0.0
    %2150 = vadd.xlane.f32.xlu0 %v2149
    %v2151 = vpop.xlane.xlu0 %2150
    %v2152 = vsel %vm1044, %v901, 0.0
    %2153 = vadd.xlane.f32.xlu0 %v2152
    %v2154 = vpop.xlane.xlu0 %2153
    %v2155 = vsel %vm1044, %v902, 0.0
    %2156 = vadd.xlane.f32.xlu0 %v2155
    %v2157 = vpop.xlane.xlu0 %2156
    %v2158 = vsel %vm1044, %v903, 0.0
    %2159 = vadd.xlane.f32.xlu0 %v2158
    %v2160 = vpop.xlane.xlu0 %2159
    %v2161 = vsel %vm1044, %v904, 0.0
    %2162 = vadd.xlane.f32.xlu0 %v2161
    %v2163 = vpop.xlane.xlu0 %2162
    %v2164 = vsel %vm1044, %v905, 0.0
    %2165 = vadd.xlane.f32.xlu0 %v2164
    %v2166 = vpop.xlane.xlu0 %2165
    %v2167 = vsel %vm1044, %v906, 0.0
    %2168 = vadd.xlane.f32.xlu0 %v2167
    %v2169 = vpop.xlane.xlu0 %2168
    %v2170 = vsel %vm1044, %v907, 0.0
    %2171 = vadd.xlane.f32.xlu0 %v2170
    %v2172 = vpop.xlane.xlu0 %2171
    %v2173 = vsel %vm1044, %v908, 0.0
    %2174 = vadd.xlane.f32.xlu0 %v2173
    %v2175 = vpop.xlane.xlu0 %2174
    %v2176 = vsel %vm1044, %v909, 0.0
    %2177 = vadd.xlane.f32.xlu0 %v2176
    %v2178 = vpop.xlane.xlu0 %2177
    %v2179 = vsel %vm1044, %v910, 0.0
    %2180 = vadd.xlane.f32.xlu0 %v2179
    %v2181 = vpop.xlane.xlu0 %2180
    %v2182 = vsel %vm1044, %v911, 0.0
    %2183 = vadd.xlane.f32.xlu0 %v2182
    %v2184 = vpop.xlane.xlu0 %2183
    %v2185 = vsel %vm1044, %v912, 0.0
    %2186 = vadd.xlane.f32.xlu0 %v2185
    %v2187 = vpop.xlane.xlu0 %2186
    %v2188 = vsel %vm1044, %v913, 0.0
    %2189 = vadd.xlane.f32.xlu0 %v2188
    %v2190 = vpop.xlane.xlu0 %2189
    %v2191 = vsel %vm1044, %v914, 0.0
    %2192 = vadd.xlane.f32.xlu0 %v2191
    %v2193 = vpop.xlane.xlu0 %2192
    %v2194 = vsel %vm1044, %v915, 0.0
    %2195 = vadd.xlane.f32.xlu0 %v2194
    %v2196 = vpop.xlane.xlu0 %2195
    %v2197 = vsel %vm1044, %v916, 0.0
    %2198 = vadd.xlane.f32.xlu0 %v2197
    %v2199 = vpop.xlane.xlu0 %2198
    %v2200 = vsel %vm1044, %v917, 0.0
    %2201 = vadd.xlane.f32.xlu0 %v2200
    %v2202 = vpop.xlane.xlu0 %2201
    %v2203 = vsel %vm1044, %v918, 0.0
    %2204 = vadd.xlane.f32.xlu0 %v2203
    %v2205 = vpop.xlane.xlu0 %2204
    %v2206 = vsel %vm1044, %v919, 0.0
    %2207 = vadd.xlane.f32.xlu0 %v2206
    %v2208 = vpop.xlane.xlu0 %2207
    %v2209 = vsel %vm1044, %v920, 0.0
    %2210 = vadd.xlane.f32.xlu0 %v2209
    %v2211 = vpop.xlane.xlu0 %2210
    %v2212 = vsel %vm1044, %v921, 0.0
    %2213 = vadd.xlane.f32.xlu0 %v2212
    %v2214 = vpop.xlane.xlu0 %2213
    %v2215 = vsel %vm1044, %v922, 0.0
    %2216 = vadd.xlane.f32.xlu0 %v2215
    %v2217 = vpop.xlane.xlu0 %2216
    %v2218 = vsel %vm1044, %v923, 0.0
    %2219 = vadd.xlane.f32.xlu0 %v2218
    %v2220 = vpop.xlane.xlu0 %2219
    %v2221 = vsel %vm1044, %v924, 0.0
    %2222 = vadd.xlane.f32.xlu0 %v2221
    %v2223 = vpop.xlane.xlu0 %2222
    %v2224 = vsel %vm1044, %v925, 0.0
    %2225 = vadd.xlane.f32.xlu0 %v2224
    %v2226 = vpop.xlane.xlu0 %2225
    %v2227 = vsel %vm1044, %v926, 0.0
    %2228 = vadd.xlane.f32.xlu0 %v2227
    %v2229 = vpop.xlane.xlu0 %2228
    %v2230 = vsel %vm1044, %v927, 0.0
    %2231 = vadd.xlane.f32.xlu0 %v2230
    %v2232 = vpop.xlane.xlu0 %2231
    %v2233 = vsel %vm1044, %v928, 0.0
    %2234 = vadd.xlane.f32.xlu0 %v2233
    %v2235 = vpop.xlane.xlu0 %2234
    %v2236 = vsel %vm1044, %v929, 0.0
    %2237 = vadd.xlane.f32.xlu0 %v2236
    %v2238 = vpop.xlane.xlu0 %2237
    %v2239 = vsel %vm1044, %v930, 0.0
    %2240 = vadd.xlane.f32.xlu0 %v2239
    %v2241 = vpop.xlane.xlu0 %2240
    %v2242 = vsel %vm1044, %v931, 0.0
    %2243 = vadd.xlane.f32.xlu0 %v2242
    %v2244 = vpop.xlane.xlu0 %2243
    %v2245 = vsel %vm1044, %v932, 0.0
    %2246 = vadd.xlane.f32.xlu0 %v2245
    %v2247 = vpop.xlane.xlu0 %2246
    %v2248 = vsel %vm1044, %v933, 0.0
    %2249 = vadd.xlane.f32.xlu0 %v2248
    %v2250 = vpop.xlane.xlu0 %2249
    %v2251 = vsel %vm1044, %v934, 0.0
    %2252 = vadd.xlane.f32.xlu0 %v2251
    %v2253 = vpop.xlane.xlu0 %2252
    %v2254 = vsel %vm1044, %v935, 0.0
    %2255 = vadd.xlane.f32.xlu0 %v2254
    %v2256 = vpop.xlane.xlu0 %2255
    %v2257 = vsel %vm1044, %v936, 0.0
    %2258 = vadd.xlane.f32.xlu0 %v2257
    %v2259 = vpop.xlane.xlu0 %2258
    %v2260 = vsel %vm1044, %v937, 0.0
    %2261 = vadd.xlane.f32.xlu0 %v2260
    %v2262 = vpop.xlane.xlu0 %2261
    %v2263 = vsel %vm1044, %v938, 0.0
    %2264 = vadd.xlane.f32.xlu0 %v2263
    %v2265 = vpop.xlane.xlu0 %2264
    %v2266 = vsel %vm1044, %v939, 0.0
    %2267 = vadd.xlane.f32.xlu0 %v2266
    %v2268 = vpop.xlane.xlu0 %2267
    %v2269 = vsel %vm1044, %v940, 0.0
    %2270 = vadd.xlane.f32.xlu0 %v2269
    %v2271 = vpop.xlane.xlu0 %2270
    %v2272 = vsel %vm1044, %v941, 0.0
    %2273 = vadd.xlane.f32.xlu0 %v2272
    %v2274 = vpop.xlane.xlu0 %2273
    %v2275 = vsel %vm1044, %v942, 0.0
    %2276 = vadd.xlane.f32.xlu0 %v2275
    %v2277 = vpop.xlane.xlu0 %2276
    %v2278 = vsel %vm1044, %v943, 0.0
    %2279 = vadd.xlane.f32.xlu0 %v2278
    %v2280 = vpop.xlane.xlu0 %2279
    %v2281 = vsel %vm1044, %v944, 0.0
    %2282 = vadd.xlane.f32.xlu0 %v2281
    %v2283 = vpop.xlane.xlu0 %2282
    %v2284 = vsel %vm1044, %v945, 0.0
    %2285 = vadd.xlane.f32.xlu0 %v2284
    %v2286 = vpop.xlane.xlu0 %2285
    %v2287 = vsel %vm1044, %v946, 0.0
    %2288 = vadd.xlane.f32.xlu0 %v2287
    %v2289 = vpop.xlane.xlu0 %2288
    %v2290 = vsel %vm1044, %v947, 0.0
    %2291 = vadd.xlane.f32.xlu0 %v2290
    %v2292 = vpop.xlane.xlu0 %2291
    %v2293 = vsel %vm1044, %v948, 0.0
    %2294 = vadd.xlane.f32.xlu0 %v2293
    %v2295 = vpop.xlane.xlu0 %2294
    %v2296 = vsel %vm1044, %v949, 0.0
    %2297 = vadd.xlane.f32.xlu0 %v2296
    %v2298 = vpop.xlane.xlu0 %2297
    %v2299 = vsel %vm1044, %v950, 0.0
    %2300 = vadd.xlane.f32.xlu0 %v2299
    %v2301 = vpop.xlane.xlu0 %2300
    %v2302 = vsel %vm1044, %v951, 0.0
    %2303 = vadd.xlane.f32.xlu0 %v2302
    %v2304 = vpop.xlane.xlu0 %2303
    %v2305 = vsel %vm1044, %v952, 0.0
    %2306 = vadd.xlane.f32.xlu0 %v2305
    %v2307 = vpop.xlane.xlu0 %2306
    %v2308 = vsel %vm1044, %v953, 0.0
    %2309 = vadd.xlane.f32.xlu0 %v2308
    %v2310 = vpop.xlane.xlu0 %2309
    %v2311 = vsel %vm1044, %v954, 0.0
    %2312 = vadd.xlane.f32.xlu0 %v2311
    %v2313 = vpop.xlane.xlu0 %2312
    %v2314 = vsel %vm1044, %v955, 0.0
    %2315 = vadd.xlane.f32.xlu0 %v2314
    %v2316 = vpop.xlane.xlu0 %2315
    %v2317 = vsel %vm1044, %v956, 0.0
    %2318 = vadd.xlane.f32.xlu0 %v2317
    %v2319 = vpop.xlane.xlu0 %2318
    %v2320 = vsel %vm1044, %v957, 0.0
    %2321 = vadd.xlane.f32.xlu0 %v2320
    %v2322 = vpop.xlane.xlu0 %2321
    %v2323 = vsel %vm1044, %v958, 0.0
    %2324 = vadd.xlane.f32.xlu0 %v2323
    %v2325 = vpop.xlane.xlu0 %2324
    %v2326 = vsel %vm1044, %v959, 0.0
    %2327 = vadd.xlane.f32.xlu0 %v2326
    %v2328 = vpop.xlane.xlu0 %2327
    %v2329 = vsel %vm1044, %v960, 0.0
    %2330 = vadd.xlane.f32.xlu0 %v2329
    %v2331 = vpop.xlane.xlu0 %2330
    %v2332 = vsel %vm1044, %v961, 0.0
    %2333 = vadd.xlane.f32.xlu0 %v2332
    %v2334 = vpop.xlane.xlu0 %2333
    %v2335 = vsel %vm1044, %v962, 0.0
    %2336 = vadd.xlane.f32.xlu0 %v2335
    %v2337 = vpop.xlane.xlu0 %2336
    %v2338 = vsel %vm1044, %v963, 0.0
    %2339 = vadd.xlane.f32.xlu0 %v2338
    %v2340 = vpop.xlane.xlu0 %2339
    %v2341 = vsel %vm1044, %v964, 0.0
    %2342 = vadd.xlane.f32.xlu0 %v2341
    %v2343 = vpop.xlane.xlu0 %2342
    %v2344 = vsel %vm1044, %v965, 0.0
    %2345 = vadd.xlane.f32.xlu0 %v2344
    %v2346 = vpop.xlane.xlu0 %2345
    %v2347 = vsel %vm1044, %v966, 0.0
    %2348 = vadd.xlane.f32.xlu0 %v2347
    %v2349 = vpop.xlane.xlu0 %2348
    %v2350 = vsel %vm1044, %v967, 0.0
    %2351 = vadd.xlane.f32.xlu0 %v2350
    %v2352 = vpop.xlane.xlu0 %2351
    %v2353 = vsel %vm1044, %v968, 0.0
    %2354 = vadd.xlane.f32.xlu0 %v2353
    %v2355 = vpop.xlane.xlu0 %2354
    %v2356 = vsel %vm1044, %v969, 0.0
    %2357 = vadd.xlane.f32.xlu0 %v2356
    %v2358 = vpop.xlane.xlu0 %2357
    %v2359 = vsel %vm1044, %v970, 0.0
    %2360 = vadd.xlane.f32.xlu0 %v2359
    %v2361 = vpop.xlane.xlu0 %2360
    %v2362 = vsel %vm1044, %v971, 0.0
    %2363 = vadd.xlane.f32.xlu0 %v2362
    %v2364 = vpop.xlane.xlu0 %2363
    %v2365 = vsel %vm1044, %v972, 0.0
    %2366 = vadd.xlane.f32.xlu0 %v2365
    %v2367 = vpop.xlane.xlu0 %2366
    %v2368 = vsel %vm1044, %v973, 0.0
    %2369 = vadd.xlane.f32.xlu0 %v2368
    %v2370 = vpop.xlane.xlu0 %2369
    %v2371 = vsel %vm1044, %v974, 0.0
    %2372 = vadd.xlane.f32.xlu0 %v2371
    %v2373 = vpop.xlane.xlu0 %2372
    %v2374 = vsel %vm1044, %v975, 0.0
    %2375 = vadd.xlane.f32.xlu0 %v2374
    %v2376 = vpop.xlane.xlu0 %2375
    %v2377 = vsel %vm1044, %v976, 0.0
    %2378 = vadd.xlane.f32.xlu0 %v2377
    %v2379 = vpop.xlane.xlu0 %2378
    %v2380 = vsel %vm1044, %v977, 0.0
    %2381 = vadd.xlane.f32.xlu0 %v2380
    %v2382 = vpop.xlane.xlu0 %2381
    %v2383 = vsel %vm1044, %v978, 0.0
    %2384 = vadd.xlane.f32.xlu0 %v2383
    %v2385 = vpop.xlane.xlu0 %2384
    %v2386 = vsel %vm1044, %v979, 0.0
    %2387 = vadd.xlane.f32.xlu0 %v2386
    %v2388 = vpop.xlane.xlu0 %2387
    %v2389 = vsel %vm1044, %v980, 0.0
    %2390 = vadd.xlane.f32.xlu0 %v2389
    %v2391 = vpop.xlane.xlu0 %2390
    %v2392 = vsel %vm1044, %v981, 0.0
    %2393 = vadd.xlane.f32.xlu0 %v2392
    %v2394 = vpop.xlane.xlu0 %2393
    %v2395 = vsel %vm1044, %v982, 0.0
    %2396 = vadd.xlane.f32.xlu0 %v2395
    %v2397 = vpop.xlane.xlu0 %2396
    %v2398 = vsel %vm1044, %v983, 0.0
    %2399 = vadd.xlane.f32.xlu0 %v2398
    %v2400 = vpop.xlane.xlu0 %2399
    %v2401 = vsel %vm1044, %v984, 0.0
    %2402 = vadd.xlane.f32.xlu0 %v2401
    %v2403 = vpop.xlane.xlu0 %2402
    %v2404 = vsel %vm1044, %v985, 0.0
    %2405 = vadd.xlane.f32.xlu0 %v2404
    %v2406 = vpop.xlane.xlu0 %2405
    %v2407 = vsel %vm1044, %v986, 0.0
    %2408 = vadd.xlane.f32.xlu0 %v2407
    %v2409 = vpop.xlane.xlu0 %2408
    %v2410 = vsel %vm1044, %v987, 0.0
    %2411 = vadd.xlane.f32.xlu0 %v2410
    %v2412 = vpop.xlane.xlu0 %2411
    %v2413 = vsel %vm1044, %v988, 0.0
    %2414 = vadd.xlane.f32.xlu0 %v2413
    %v2415 = vpop.xlane.xlu0 %2414
    %v2416 = vsel %vm1044, %v989, 0.0
    %2417 = vadd.xlane.f32.xlu0 %v2416
    %v2418 = vpop.xlane.xlu0 %2417
    %v2419 = vsel %vm1044, %v990, 0.0
    %2420 = vadd.xlane.f32.xlu0 %v2419
    %v2421 = vpop.xlane.xlu0 %2420
    %v2422 = vsel %vm1044, %v991, 0.0
    %2423 = vadd.xlane.f32.xlu0 %v2422
    %v2424 = vpop.xlane.xlu0 %2423
    %v2425 = vsel %vm1044, %v992, 0.0
    %2426 = vadd.xlane.f32.xlu0 %v2425
    %v2427 = vpop.xlane.xlu0 %2426
    %v2428 = vsel %vm1044, %v993, 0.0
    %2429 = vadd.xlane.f32.xlu0 %v2428
    %v2430 = vpop.xlane.xlu0 %2429
    %v2431 = vsel %vm1044, %v994, 0.0
    %2432 = vadd.xlane.f32.xlu0 %v2431
    %v2433 = vpop.xlane.xlu0 %2432
    %v2434 = vsel %vm1044, %v995, 0.0
    %2435 = vadd.xlane.f32.xlu0 %v2434
    %v2436 = vpop.xlane.xlu0 %2435
    %v2437 = vsel %vm1044, %v996, 0.0
    %2438 = vadd.xlane.f32.xlu0 %v2437
    %v2439 = vpop.xlane.xlu0 %2438
    %v2440 = vsel %vm1044, %v997, 0.0
    %2441 = vadd.xlane.f32.xlu0 %v2440
    %v2442 = vpop.xlane.xlu0 %2441
    %v2443 = vsel %vm1044, %v998, 0.0
    %2444 = vadd.xlane.f32.xlu0 %v2443
    %v2445 = vpop.xlane.xlu0 %2444
    %v2446 = vsel %vm1044, %v999, 0.0
    %2447 = vadd.xlane.f32.xlu0 %v2446
    %v2448 = vpop.xlane.xlu0 %2447
    %v2449 = vsel %vm1044, %v1000, 0.0
    %2450 = vadd.xlane.f32.xlu0 %v2449
    %v2451 = vpop.xlane.xlu0 %2450
    %v2452 = vsel %vm1044, %v1001, 0.0
    %2453 = vadd.xlane.f32.xlu0 %v2452
    %v2454 = vpop.xlane.xlu0 %2453
    %v2455 = vsel %vm1044, %v1002, 0.0
    %2456 = vadd.xlane.f32.xlu0 %v2455
    %v2457 = vpop.xlane.xlu0 %2456
    %v2458 = vsel %vm1044, %v1003, 0.0
    %2459 = vadd.xlane.f32.xlu0 %v2458
    %v2460 = vpop.xlane.xlu0 %2459
    %v2461 = vsel %vm1044, %v1004, 0.0
    %2462 = vadd.xlane.f32.xlu0 %v2461
    %v2463 = vpop.xlane.xlu0 %2462
    %v2464 = vsel %vm1044, %v1005, 0.0
    %2465 = vadd.xlane.f32.xlu0 %v2464
    %v2466 = vpop.xlane.xlu0 %2465
    %v2467 = vsel %vm1044, %v1006, 0.0
    %2468 = vadd.xlane.f32.xlu0 %v2467
    %v2469 = vpop.xlane.xlu0 %2468
    %v2470 = vsel %vm1044, %v1007, 0.0
    %2471 = vadd.xlane.f32.xlu0 %v2470
    %v2472 = vpop.xlane.xlu0 %2471
    %v2473 = vsel %vm1044, %v1008, 0.0
    %2474 = vadd.xlane.f32.xlu0 %v2473
    %v2475 = vpop.xlane.xlu0 %2474
    %v2476 = vsel %vm1044, %v1009, 0.0
    %2477 = vadd.xlane.f32.xlu0 %v2476
    %v2478 = vpop.xlane.xlu0 %2477
    %v2479 = vsel %vm1044, %v1010, 0.0
    %2480 = vadd.xlane.f32.xlu0 %v2479
    %v2481 = vpop.xlane.xlu0 %2480
    %v2482 = vsel %vm1044, %v1011, 0.0
    %2483 = vadd.xlane.f32.xlu0 %v2482
    %v2484 = vpop.xlane.xlu0 %2483
    %v2485 = vsel %vm1044, %v1012, 0.0
    %2486 = vadd.xlane.f32.xlu0 %v2485
    %v2487 = vpop.xlane.xlu0 %2486
    %v2488 = vsel %vm1044, %v1013, 0.0
    %2489 = vadd.xlane.f32.xlu0 %v2488
    %v2490 = vpop.xlane.xlu0 %2489
    %v2491 = vsel %vm1044, %v1014, 0.0
    %2492 = vadd.xlane.f32.xlu0 %v2491
    %v2493 = vpop.xlane.xlu0 %2492
    %v2494 = vsel %vm1044, %v1015, 0.0
    %2495 = vadd.xlane.f32.xlu0 %v2494
    %v2496 = vpop.xlane.xlu0 %2495
    %v2497 = vsel %vm1044, %v1016, 0.0
    %2498 = vadd.xlane.f32.xlu0 %v2497
    %v2499 = vpop.xlane.xlu0 %2498
    %v2500 = vsel %vm1044, %v1017, 0.0
    %2501 = vadd.xlane.f32.xlu0 %v2500
    %v2502 = vpop.xlane.xlu0 %2501
    %v2503 = vsel %vm1044, %v1018, 0.0
    %2504 = vadd.xlane.f32.xlu0 %v2503
    %v2505 = vpop.xlane.xlu0 %2504
    %v2506 = vsel %vm1044, %v1019, 0.0
    %2507 = vadd.xlane.f32.xlu0 %v2506
    %v2508 = vpop.xlane.xlu0 %2507
    %v2509 = vsel %vm1044, %v1020, 0.0
    %2510 = vadd.xlane.f32.xlu0 %v2509
    %v2511 = vpop.xlane.xlu0 %2510
    %v2512 = vsel %vm1044, %v1021, 0.0
    %2513 = vadd.xlane.f32.xlu0 %v2512
    %v2514 = vpop.xlane.xlu0 %2513
    %v2515 = vsel %vm1044, %v1022, 0.0
    %2516 = vadd.xlane.f32.xlu0 %v2515
    %v2517 = vpop.xlane.xlu0 %2516
    %v2518 = vsel %vm1044, %v1023, 0.0
    %2519 = vadd.xlane.f32.xlu0 %v2518
    %v2520 = vpop.xlane.xlu0 %2519
    %v2521 = vsel %vm1044, %v1024, 0.0
    %2522 = vadd.xlane.f32.xlu0 %v2521
    %v2523 = vpop.xlane.xlu0 %2522
    %v2524 = vsel %vm1044, %v1025, 0.0
    %2525 = vadd.xlane.f32.xlu0 %v2524
    %v2526 = vpop.xlane.xlu0 %2525
    %v2527 = vsel %vm1044, %v1026, 0.0
    %2528 = vadd.xlane.f32.xlu0 %v2527
    %v2529 = vpop.xlane.xlu0 %2528
    %v2530 = vsel %vm1044, %v1027, 0.0
    %2531 = vadd.xlane.f32.xlu0 %v2530
    %v2532 = vpop.xlane.xlu0 %2531
    %v2533 = vsel %vm1044, %v1028, 0.0
    %2534 = vadd.xlane.f32.xlu0 %v2533
    %v2535 = vpop.xlane.xlu0 %2534
    %v2536 = vsel %vm1044, %v1029, 0.0
    %2537 = vadd.xlane.f32.xlu0 %v2536
    %v2538 = vpop.xlane.xlu0 %2537
    %v2539 = vsel %vm1044, %v1030, 0.0
    %2540 = vadd.xlane.f32.xlu0 %v2539
    %v2541 = vpop.xlane.xlu0 %2540
    %v2542 = vsel %vm1044, %v1031, 0.0
    %2543 = vadd.xlane.f32.xlu0 %v2542
    %v2544 = vpop.xlane.xlu0 %2543
    %v2545 = vsel %vm1044, %v1032, 0.0
    %2546 = vadd.xlane.f32.xlu0 %v2545
    %v2547 = vpop.xlane.xlu0 %2546
    %v2548 = vsel %vm1044, %v1033, 0.0
    %2549 = vadd.xlane.f32.xlu0 %v2548
    %v2550 = vpop.xlane.xlu0 %2549
    %v2551 = vsel %vm1044, %v1034, 0.0
    %2552 = vadd.xlane.f32.xlu0 %v2551
    %v2553 = vpop.xlane.xlu0 %2552
    %v2554 = vsel %vm1044, %v1035, 0.0
    %2555 = vadd.xlane.f32.xlu0 %v2554
    %v2556 = vpop.xlane.xlu0 %2555
    %v2557 = vsel %vm1044, %v1036, 0.0
    %2558 = vadd.xlane.f32.xlu0 %v2557
    %v2559 = vpop.xlane.xlu0 %2558
    %v2560 = vsel %vm1044, %v1037, 0.0
    %2561 = vadd.xlane.f32.xlu0 %v2560
    %v2562 = vpop.xlane.xlu0 %2561
    %v2563 = vsel %vm1044, %v1038, 0.0
    %2564 = vadd.xlane.f32.xlu0 %v2563
    %v2565 = vpop.xlane.xlu0 %2564
    %v2566 = vsel %vm1044, %v1039, 0.0
    %2567 = vadd.xlane.f32.xlu0 %v2566
    %v2568 = vpop.xlane.xlu0 %2567
    %v2569 = vsel %vm1044, %v1040, 0.0
    %2570 = vadd.xlane.f32.xlu0 %v2569
    %v2571 = vpop.xlane.xlu0 %2570
    %v2572 = vsel %vm1044, %v1041, 0.0
    %2573 = vadd.xlane.f32.xlu0 %v2572
    %v2574 = vpop.xlane.xlu0 %2573
    %v2575 = vsel %vm1044, %v1042, 0.0
    %2576 = vadd.xlane.f32.xlu0 %v2575
    %v2577 = vpop.xlane.xlu0 %2576
    %v2578 = vsel %vm1044, %v1043, 0.0
    %2579 = vadd.xlane.f32.xlu0 %v2578
    %v2580 = vpop.xlane.xlu0 %2579
    %v2581 = vmul.f32 %v1047, 0.020408163
    %v2582 = vmul.f32 %v1050, 0.020408163
    %v2583 = vmul.f32 %v1053, 0.020408163
    %v2584 = vmul.f32 %v1056, 0.020408163
    %v2585 = vmul.f32 %v1059, 0.020408163
    %v2586 = vmul.f32 %v1062, 0.020408163
    %v2587 = vmul.f32 %v1065, 0.020408163
    %v2588 = vmul.f32 %v1068, 0.020408163
    %v2589 = vmul.f32 %v1071, 0.020408163
    %v2590 = vmul.f32 %v1074, 0.020408163
    %v2591 = vmul.f32 %v1077, 0.020408163
    %v2592 = vmul.f32 %v1080, 0.020408163
    %v2593 = vmul.f32 %v1083, 0.020408163
    %v2594 = vmul.f32 %v1086, 0.020408163
    %v2595 = vmul.f32 %v1089, 0.020408163
    %v2596 = vmul.f32 %v1092, 0.020408163
    %v2597 = vmul.f32 %v1095, 0.020408163
    %v2598 = vmul.f32 %v1098, 0.020408163
    %v2599 = vmul.f32 %v1101, 0.020408163
    %v2600 = vmul.f32 %v1104, 0.020408163
    %v2601 = vmul.f32 %v1107, 0.020408163
    %v2602 = vmul.f32 %v1110, 0.020408163
    %v2603 = vmul.f32 %v1113, 0.020408163
    %v2604 = vmul.f32 %v1116, 0.020408163
    %v2605 = vmul.f32 %v1119, 0.020408163
    %v2606 = vmul.f32 %v1122, 0.020408163
    %v2607 = vmul.f32 %v1125, 0.020408163
    %v2608 = vmul.f32 %v1128, 0.020408163
    %v2609 = vmul.f32 %v1131, 0.020408163
    %v2610 = vmul.f32 %v1134, 0.020408163
    %v2611 = vmul.f32 %v1137, 0.020408163
    %v2612 = vmul.f32 %v1140, 0.020408163
    %v2613 = vmul.f32 %v1143, 0.020408163
    %v2614 = vmul.f32 %v1146, 0.020408163
    %v2615 = vmul.f32 %v1149, 0.020408163
    %v2616 = vmul.f32 %v1152, 0.020408163
    %v2617 = vmul.f32 %v1155, 0.020408163
    %v2618 = vmul.f32 %v1158, 0.020408163
    %v2619 = vmul.f32 %v1161, 0.020408163
    %v2620 = vmul.f32 %v1164, 0.020408163
    %v2621 = vmul.f32 %v1167, 0.020408163
    %v2622 = vmul.f32 %v1170, 0.020408163
    %v2623 = vmul.f32 %v1173, 0.020408163
    %v2624 = vmul.f32 %v1176, 0.020408163
    %v2625 = vmul.f32 %v1179, 0.020408163
    %v2626 = vmul.f32 %v1182, 0.020408163
    %v2627 = vmul.f32 %v1185, 0.020408163
    %v2628 = vmul.f32 %v1188, 0.020408163
    %v2629 = vmul.f32 %v1191, 0.020408163
    %v2630 = vmul.f32 %v1194, 0.020408163
    %v2631 = vmul.f32 %v1197, 0.020408163
    %v2632 = vmul.f32 %v1200, 0.020408163
    %v2633 = vmul.f32 %v1203, 0.020408163
    %v2634 = vmul.f32 %v1206, 0.020408163
    %v2635 = vmul.f32 %v1209, 0.020408163
    %v2636 = vmul.f32 %v1212, 0.020408163
    %v2637 = vmul.f32 %v1215, 0.020408163
    %v2638 = vmul.f32 %v1218, 0.020408163
    %v2639 = vmul.f32 %v1221, 0.020408163
    %v2640 = vmul.f32 %v1224, 0.020408163
    %v2641 = vmul.f32 %v1227, 0.020408163
    %v2642 = vmul.f32 %v1230, 0.020408163
    %v2643 = vmul.f32 %v1233, 0.020408163
    %v2644 = vmul.f32 %v1236, 0.020408163
    %v2645 = vmul.f32 %v1239, 0.020408163
    %v2646 = vmul.f32 %v1242, 0.020408163
    %v2647 = vmul.f32 %v1245, 0.020408163
    %v2648 = vmul.f32 %v1248, 0.020408163
    %v2649 = vmul.f32 %v1251, 0.020408163
    %v2650 = vmul.f32 %v1254, 0.020408163
    %v2651 = vmul.f32 %v1257, 0.020408163
    %v2652 = vmul.f32 %v1260, 0.020408163
    %v2653 = vmul.f32 %v1263, 0.020408163
    %v2654 = vmul.f32 %v1266, 0.020408163
    %v2655 = vmul.f32 %v1269, 0.020408163
    %v2656 = vmul.f32 %v1272, 0.020408163
    %v2657 = vmul.f32 %v1275, 0.020408163
    %v2658 = vmul.f32 %v1278, 0.020408163
    %v2659 = vmul.f32 %v1281, 0.020408163
    %v2660 = vmul.f32 %v1284, 0.020408163
    %v2661 = vmul.f32 %v1287, 0.020408163
    %v2662 = vmul.f32 %v1290, 0.020408163
    %v2663 = vmul.f32 %v1293, 0.020408163
    %v2664 = vmul.f32 %v1296, 0.020408163
    %v2665 = vmul.f32 %v1299, 0.020408163
    %v2666 = vmul.f32 %v1302, 0.020408163
    %v2667 = vmul.f32 %v1305, 0.020408163
    %v2668 = vmul.f32 %v1308, 0.020408163
    %v2669 = vmul.f32 %v1311, 0.020408163
    %v2670 = vmul.f32 %v1314, 0.020408163
    %v2671 = vmul.f32 %v1317, 0.020408163
    %v2672 = vmul.f32 %v1320, 0.020408163
    %v2673 = vmul.f32 %v1323, 0.020408163
    %v2674 = vmul.f32 %v1326, 0.020408163
    %v2675 = vmul.f32 %v1329, 0.020408163
    %v2676 = vmul.f32 %v1332, 0.020408163
    %v2677 = vmul.f32 %v1335, 0.020408163
    %v2678 = vmul.f32 %v1338, 0.020408163
    %v2679 = vmul.f32 %v1341, 0.020408163
    %v2680 = vmul.f32 %v1344, 0.020408163
    %v2681 = vmul.f32 %v1347, 0.020408163
    %v2682 = vmul.f32 %v1350, 0.020408163
    %v2683 = vmul.f32 %v1353, 0.020408163
    %v2684 = vmul.f32 %v1356, 0.020408163
    %v2685 = vmul.f32 %v1359, 0.020408163
    %v2686 = vmul.f32 %v1362, 0.020408163
    %v2687 = vmul.f32 %v1365, 0.020408163
    %v2688 = vmul.f32 %v1368, 0.020408163
    %v2689 = vmul.f32 %v1371, 0.020408163
    %v2690 = vmul.f32 %v1374, 0.020408163
    %v2691 = vmul.f32 %v1377, 0.020408163
    %v2692 = vmul.f32 %v1380, 0.020408163
    %v2693 = vmul.f32 %v1383, 0.020408163
    %v2694 = vmul.f32 %v1386, 0.020408163
    %v2695 = vmul.f32 %v1389, 0.020408163
    %v2696 = vmul.f32 %v1392, 0.020408163
    %v2697 = vmul.f32 %v1395, 0.020408163
    %v2698 = vmul.f32 %v1398, 0.020408163
    %v2699 = vmul.f32 %v1401, 0.020408163
    %v2700 = vmul.f32 %v1404, 0.020408163
    %v2701 = vmul.f32 %v1407, 0.020408163
    %v2702 = vmul.f32 %v1410, 0.020408163
    %v2703 = vmul.f32 %v1413, 0.020408163
    %v2704 = vmul.f32 %v1416, 0.020408163
    %v2705 = vmul.f32 %v1419, 0.020408163
    %v2706 = vmul.f32 %v1422, 0.020408163
    %v2707 = vmul.f32 %v1425, 0.020408163
    %v2708 = vmul.f32 %v1428, 0.020408163
    %v2709 = vmul.f32 %v1431, 0.020408163
    %v2710 = vmul.f32 %v1434, 0.020408163
    %v2711 = vmul.f32 %v1437, 0.020408163
    %v2712 = vmul.f32 %v1440, 0.020408163
    %v2713 = vmul.f32 %v1443, 0.020408163
    %v2714 = vmul.f32 %v1446, 0.020408163
    %v2715 = vmul.f32 %v1449, 0.020408163
    %v2716 = vmul.f32 %v1452, 0.020408163
    %v2717 = vmul.f32 %v1455, 0.020408163
    %v2718 = vmul.f32 %v1458, 0.020408163
    %v2719 = vmul.f32 %v1461, 0.020408163
    %v2720 = vmul.f32 %v1464, 0.020408163
    %v2721 = vmul.f32 %v1467, 0.020408163
    %v2722 = vmul.f32 %v1470, 0.020408163
    %v2723 = vmul.f32 %v1473, 0.020408163
    %v2724 = vmul.f32 %v1476, 0.020408163
    %v2725 = vmul.f32 %v1479, 0.020408163
    %v2726 = vmul.f32 %v1482, 0.020408163
    %v2727 = vmul.f32 %v1485, 0.020408163
    %v2728 = vmul.f32 %v1488, 0.020408163
    %v2729 = vmul.f32 %v1491, 0.020408163
    %v2730 = vmul.f32 %v1494, 0.020408163
    %v2731 = vmul.f32 %v1497, 0.020408163
    %v2732 = vmul.f32 %v1500, 0.020408163
    %v2733 = vmul.f32 %v1503, 0.020408163
    %v2734 = vmul.f32 %v1506, 0.020408163
    %v2735 = vmul.f32 %v1509, 0.020408163
    %v2736 = vmul.f32 %v1512, 0.020408163
    %v2737 = vmul.f32 %v1515, 0.020408163
    %v2738 = vmul.f32 %v1518, 0.020408163
    %v2739 = vmul.f32 %v1521, 0.020408163
    %v2740 = vmul.f32 %v1524, 0.020408163
    %v2741 = vmul.f32 %v1527, 0.020408163
    %v2742 = vmul.f32 %v1530, 0.020408163
    %v2743 = vmul.f32 %v1533, 0.020408163
    %v2744 = vmul.f32 %v1536, 0.020408163
    %v2745 = vmul.f32 %v1539, 0.020408163
    %v2746 = vmul.f32 %v1542, 0.020408163
    %v2747 = vmul.f32 %v1545, 0.020408163
    %v2748 = vmul.f32 %v1548, 0.020408163
    %v2749 = vmul.f32 %v1551, 0.020408163
    %v2750 = vmul.f32 %v1554, 0.020408163
    %v2751 = vmul.f32 %v1557, 0.020408163
    %v2752 = vmul.f32 %v1560, 0.020408163
    %v2753 = vmul.f32 %v1563, 0.020408163
    %v2754 = vmul.f32 %v1566, 0.020408163
    %v2755 = vmul.f32 %v1569, 0.020408163
    %v2756 = vmul.f32 %v1572, 0.020408163
    %v2757 = vmul.f32 %v1575, 0.020408163
    %v2758 = vmul.f32 %v1578, 0.020408163
    %v2759 = vmul.f32 %v1581, 0.020408163
    %v2760 = vmul.f32 %v1584, 0.020408163
    %v2761 = vmul.f32 %v1587, 0.020408163
    %v2762 = vmul.f32 %v1590, 0.020408163
    %v2763 = vmul.f32 %v1593, 0.020408163
    %v2764 = vmul.f32 %v1596, 0.020408163
    %v2765 = vmul.f32 %v1599, 0.020408163
    %v2766 = vmul.f32 %v1602, 0.020408163
    %v2767 = vmul.f32 %v1605, 0.020408163
    %v2768 = vmul.f32 %v1608, 0.020408163
    %v2769 = vmul.f32 %v1611, 0.020408163
    %v2770 = vmul.f32 %v1614, 0.020408163
    %v2771 = vmul.f32 %v1617, 0.020408163
    %v2772 = vmul.f32 %v1620, 0.020408163
    %v2773 = vmul.f32 %v1623, 0.020408163
    %v2774 = vmul.f32 %v1626, 0.020408163
    %v2775 = vmul.f32 %v1629, 0.020408163
    %v2776 = vmul.f32 %v1632, 0.020408163
    %v2777 = vmul.f32 %v1635, 0.020408163
    %v2778 = vmul.f32 %v1638, 0.020408163
    %v2779 = vmul.f32 %v1641, 0.020408163
    %v2780 = vmul.f32 %v1644, 0.020408163
    %v2781 = vmul.f32 %v1647, 0.020408163
    %v2782 = vmul.f32 %v1650, 0.020408163
    %v2783 = vmul.f32 %v1653, 0.020408163
    %v2784 = vmul.f32 %v1656, 0.020408163
    %v2785 = vmul.f32 %v1659, 0.020408163
    %v2786 = vmul.f32 %v1662, 0.020408163
    %v2787 = vmul.f32 %v1665, 0.020408163
    %v2788 = vmul.f32 %v1668, 0.020408163
    %v2789 = vmul.f32 %v1671, 0.020408163
    %v2790 = vmul.f32 %v1674, 0.020408163
    %v2791 = vmul.f32 %v1677, 0.020408163
    %v2792 = vmul.f32 %v1680, 0.020408163
    %v2793 = vmul.f32 %v1683, 0.020408163
    %v2794 = vmul.f32 %v1686, 0.020408163
    %v2795 = vmul.f32 %v1689, 0.020408163
    %v2796 = vmul.f32 %v1692, 0.020408163
    %v2797 = vmul.f32 %v1695, 0.020408163
    %v2798 = vmul.f32 %v1698, 0.020408163
    %v2799 = vmul.f32 %v1701, 0.020408163
    %v2800 = vmul.f32 %v1704, 0.020408163
    %v2801 = vmul.f32 %v1707, 0.020408163
    %v2802 = vmul.f32 %v1710, 0.020408163
    %v2803 = vmul.f32 %v1713, 0.020408163
    %v2804 = vmul.f32 %v1716, 0.020408163
    %v2805 = vmul.f32 %v1719, 0.020408163
    %v2806 = vmul.f32 %v1722, 0.020408163
    %v2807 = vmul.f32 %v1725, 0.020408163
    %v2808 = vmul.f32 %v1728, 0.020408163
    %v2809 = vmul.f32 %v1731, 0.020408163
    %v2810 = vmul.f32 %v1734, 0.020408163
    %v2811 = vmul.f32 %v1737, 0.020408163
    %v2812 = vmul.f32 %v1740, 0.020408163
    %v2813 = vmul.f32 %v1743, 0.020408163
    %v2814 = vmul.f32 %v1746, 0.020408163
    %v2815 = vmul.f32 %v1749, 0.020408163
    %v2816 = vmul.f32 %v1752, 0.020408163
    %v2817 = vmul.f32 %v1755, 0.020408163
    %v2818 = vmul.f32 %v1758, 0.020408163
    %v2819 = vmul.f32 %v1761, 0.020408163
    %v2820 = vmul.f32 %v1764, 0.020408163
    %v2821 = vmul.f32 %v1767, 0.020408163
    %v2822 = vmul.f32 %v1770, 0.020408163
    %v2823 = vmul.f32 %v1773, 0.020408163
    %v2824 = vmul.f32 %v1776, 0.020408163
    %v2825 = vmul.f32 %v1779, 0.020408163
    %v2826 = vmul.f32 %v1782, 0.020408163
    %v2827 = vmul.f32 %v1785, 0.020408163
    %v2828 = vmul.f32 %v1788, 0.020408163
    %v2829 = vmul.f32 %v1791, 0.020408163
    %v2830 = vmul.f32 %v1794, 0.020408163
    %v2831 = vmul.f32 %v1797, 0.020408163
    %v2832 = vmul.f32 %v1800, 0.020408163
    %v2833 = vmul.f32 %v1803, 0.020408163
    %v2834 = vmul.f32 %v1806, 0.020408163
    %v2835 = vmul.f32 %v1809, 0.020408163
    %v2836 = vmul.f32 %v1812, 0.020408163
    %v2837 = vmul.f32 %v1815, 0.020408163
    %v2838 = vmul.f32 %v1818, 0.020408163
    %v2839 = vmul.f32 %v1821, 0.020408163
    %v2840 = vmul.f32 %v1824, 0.020408163
    %v2841 = vmul.f32 %v1827, 0.020408163
    %v2842 = vmul.f32 %v1830, 0.020408163
    %v2843 = vmul.f32 %v1833, 0.020408163
    %v2844 = vmul.f32 %v1836, 0.020408163
    %v2845 = vmul.f32 %v1839, 0.020408163
    %v2846 = vmul.f32 %v1842, 0.020408163
    %v2847 = vmul.f32 %v1845, 0.020408163
    %v2848 = vmul.f32 %v1848, 0.020408163
    %v2849 = vmul.f32 %v1851, 0.020408163
    %v2850 = vmul.f32 %v1854, 0.020408163
    %v2851 = vmul.f32 %v1857, 0.020408163
    %v2852 = vmul.f32 %v1860, 0.020408163
    %v2853 = vmul.f32 %v1863, 0.020408163
    %v2854 = vmul.f32 %v1866, 0.020408163
    %v2855 = vmul.f32 %v1869, 0.020408163
    %v2856 = vmul.f32 %v1872, 0.020408163
    %v2857 = vmul.f32 %v1875, 0.020408163
    %v2858 = vmul.f32 %v1878, 0.020408163
    %v2859 = vmul.f32 %v1881, 0.020408163
    %v2860 = vmul.f32 %v1884, 0.020408163
    %v2861 = vmul.f32 %v1887, 0.020408163
    %v2862 = vmul.f32 %v1890, 0.020408163
    %v2863 = vmul.f32 %v1893, 0.020408163
    %v2864 = vmul.f32 %v1896, 0.020408163
    %v2865 = vmul.f32 %v1899, 0.020408163
    %v2866 = vmul.f32 %v1902, 0.020408163
    %v2867 = vmul.f32 %v1905, 0.020408163
    %v2868 = vmul.f32 %v1908, 0.020408163
    %v2869 = vmul.f32 %v1911, 0.020408163
    %v2870 = vmul.f32 %v1914, 0.020408163
    %v2871 = vmul.f32 %v1917, 0.020408163
    %v2872 = vmul.f32 %v1920, 0.020408163
    %v2873 = vmul.f32 %v1923, 0.020408163
    %v2874 = vmul.f32 %v1926, 0.020408163
    %v2875 = vmul.f32 %v1929, 0.020408163
    %v2876 = vmul.f32 %v1932, 0.020408163
    %v2877 = vmul.f32 %v1935, 0.020408163
    %v2878 = vmul.f32 %v1938, 0.020408163
    %v2879 = vmul.f32 %v1941, 0.020408163
    %v2880 = vmul.f32 %v1944, 0.020408163
    %v2881 = vmul.f32 %v1947, 0.020408163
    %v2882 = vmul.f32 %v1950, 0.020408163
    %v2883 = vmul.f32 %v1953, 0.020408163
    %v2884 = vmul.f32 %v1956, 0.020408163
    %v2885 = vmul.f32 %v1959, 0.020408163
    %v2886 = vmul.f32 %v1962, 0.020408163
    %v2887 = vmul.f32 %v1965, 0.020408163
    %v2888 = vmul.f32 %v1968, 0.020408163
    %v2889 = vmul.f32 %v1971, 0.020408163
    %v2890 = vmul.f32 %v1974, 0.020408163
    %v2891 = vmul.f32 %v1977, 0.020408163
    %v2892 = vmul.f32 %v1980, 0.020408163
    %v2893 = vmul.f32 %v1983, 0.020408163
    %v2894 = vmul.f32 %v1986, 0.020408163
    %v2895 = vmul.f32 %v1989, 0.020408163
    %v2896 = vmul.f32 %v1992, 0.020408163
    %v2897 = vmul.f32 %v1995, 0.020408163
    %v2898 = vmul.f32 %v1998, 0.020408163
    %v2899 = vmul.f32 %v2001, 0.020408163
    %v2900 = vmul.f32 %v2004, 0.020408163
    %v2901 = vmul.f32 %v2007, 0.020408163
    %v2902 = vmul.f32 %v2010, 0.020408163
    %v2903 = vmul.f32 %v2013, 0.020408163
    %v2904 = vmul.f32 %v2016, 0.020408163
    %v2905 = vmul.f32 %v2019, 0.020408163
    %v2906 = vmul.f32 %v2022, 0.020408163
    %v2907 = vmul.f32 %v2025, 0.020408163
    %v2908 = vmul.f32 %v2028, 0.020408163
    %v2909 = vmul.f32 %v2031, 0.020408163
    %v2910 = vmul.f32 %v2034, 0.020408163
    %v2911 = vmul.f32 %v2037, 0.020408163
    %v2912 = vmul.f32 %v2040, 0.020408163
    %v2913 = vmul.f32 %v2043, 0.020408163
    %v2914 = vmul.f32 %v2046, 0.020408163
    %v2915 = vmul.f32 %v2049, 0.020408163
    %v2916 = vmul.f32 %v2052, 0.020408163
    %v2917 = vmul.f32 %v2055, 0.020408163
    %v2918 = vmul.f32 %v2058, 0.020408163
    %v2919 = vmul.f32 %v2061, 0.020408163
    %v2920 = vmul.f32 %v2064, 0.020408163
    %v2921 = vmul.f32 %v2067, 0.020408163
    %v2922 = vmul.f32 %v2070, 0.020408163
    %v2923 = vmul.f32 %v2073, 0.020408163
    %v2924 = vmul.f32 %v2076, 0.020408163
    %v2925 = vmul.f32 %v2079, 0.020408163
    %v2926 = vmul.f32 %v2082, 0.020408163
    %v2927 = vmul.f32 %v2085, 0.020408163
    %v2928 = vmul.f32 %v2088, 0.020408163
    %v2929 = vmul.f32 %v2091, 0.020408163
    %v2930 = vmul.f32 %v2094, 0.020408163
    %v2931 = vmul.f32 %v2097, 0.020408163
    %v2932 = vmul.f32 %v2100, 0.020408163
    %v2933 = vmul.f32 %v2103, 0.020408163
    %v2934 = vmul.f32 %v2106, 0.020408163
    %v2935 = vmul.f32 %v2109, 0.020408163
    %v2936 = vmul.f32 %v2112, 0.020408163
    %v2937 = vmul.f32 %v2115, 0.020408163
    %v2938 = vmul.f32 %v2118, 0.020408163
    %v2939 = vmul.f32 %v2121, 0.020408163
    %v2940 = vmul.f32 %v2124, 0.020408163
    %v2941 = vmul.f32 %v2127, 0.020408163
    %v2942 = vmul.f32 %v2130, 0.020408163
    %v2943 = vmul.f32 %v2133, 0.020408163
    %v2944 = vmul.f32 %v2136, 0.020408163
    %v2945 = vmul.f32 %v2139, 0.020408163
    %v2946 = vmul.f32 %v2142, 0.020408163
    %v2947 = vmul.f32 %v2145, 0.020408163
    %v2948 = vmul.f32 %v2148, 0.020408163
    %v2949 = vmul.f32 %v2151, 0.020408163
    %v2950 = vmul.f32 %v2154, 0.020408163
    %v2951 = vmul.f32 %v2157, 0.020408163
    %v2952 = vmul.f32 %v2160, 0.020408163
    %v2953 = vmul.f32 %v2163, 0.020408163
    %v2954 = vmul.f32 %v2166, 0.020408163
    %v2955 = vmul.f32 %v2169, 0.020408163
    %v2956 = vmul.f32 %v2172, 0.020408163
    %v2957 = vmul.f32 %v2175, 0.020408163
    %v2958 = vmul.f32 %v2178, 0.020408163
    %v2959 = vmul.f32 %v2181, 0.020408163
    %v2960 = vmul.f32 %v2184, 0.020408163
    %v2961 = vmul.f32 %v2187, 0.020408163
    %v2962 = vmul.f32 %v2190, 0.020408163
    %v2963 = vmul.f32 %v2193, 0.020408163
    %v2964 = vmul.f32 %v2196, 0.020408163
    %v2965 = vmul.f32 %v2199, 0.020408163
    %v2966 = vmul.f32 %v2202, 0.020408163
    %v2967 = vmul.f32 %v2205, 0.020408163
    %v2968 = vmul.f32 %v2208, 0.020408163
    %v2969 = vmul.f32 %v2211, 0.020408163
    %v2970 = vmul.f32 %v2214, 0.020408163
    %v2971 = vmul.f32 %v2217, 0.020408163
    %v2972 = vmul.f32 %v2220, 0.020408163
    %v2973 = vmul.f32 %v2223, 0.020408163
    %v2974 = vmul.f32 %v2226, 0.020408163
    %v2975 = vmul.f32 %v2229, 0.020408163
    %v2976 = vmul.f32 %v2232, 0.020408163
    %v2977 = vmul.f32 %v2235, 0.020408163
    %v2978 = vmul.f32 %v2238, 0.020408163
    %v2979 = vmul.f32 %v2241, 0.020408163
    %v2980 = vmul.f32 %v2244, 0.020408163
    %v2981 = vmul.f32 %v2247, 0.020408163
    %v2982 = vmul.f32 %v2250, 0.020408163
    %v2983 = vmul.f32 %v2253, 0.020408163
    %v2984 = vmul.f32 %v2256, 0.020408163
    %v2985 = vmul.f32 %v2259, 0.020408163
    %v2986 = vmul.f32 %v2262, 0.020408163
    %v2987 = vmul.f32 %v2265, 0.020408163
    %v2988 = vmul.f32 %v2268, 0.020408163
    %v2989 = vmul.f32 %v2271, 0.020408163
    %v2990 = vmul.f32 %v2274, 0.020408163
    %v2991 = vmul.f32 %v2277, 0.020408163
    %v2992 = vmul.f32 %v2280, 0.020408163
    %v2993 = vmul.f32 %v2283, 0.020408163
    %v2994 = vmul.f32 %v2286, 0.020408163
    %v2995 = vmul.f32 %v2289, 0.020408163
    %v2996 = vmul.f32 %v2292, 0.020408163
    %v2997 = vmul.f32 %v2295, 0.020408163
    %v2998 = vmul.f32 %v2298, 0.020408163
    %v2999 = vmul.f32 %v2301, 0.020408163
    %v3000 = vmul.f32 %v2304, 0.020408163
    %v3001 = vmul.f32 %v2307, 0.020408163
    %v3002 = vmul.f32 %v2310, 0.020408163
    %v3003 = vmul.f32 %v2313, 0.020408163
    %v3004 = vmul.f32 %v2316, 0.020408163
    %v3005 = vmul.f32 %v2319, 0.020408163
    %v3006 = vmul.f32 %v2322, 0.020408163
    %v3007 = vmul.f32 %v2325, 0.020408163
    %v3008 = vmul.f32 %v2328, 0.020408163
    %v3009 = vmul.f32 %v2331, 0.020408163
    %v3010 = vmul.f32 %v2334, 0.020408163
    %v3011 = vmul.f32 %v2337, 0.020408163
    %v3012 = vmul.f32 %v2340, 0.020408163
    %v3013 = vmul.f32 %v2343, 0.020408163
    %v3014 = vmul.f32 %v2346, 0.020408163
    %v3015 = vmul.f32 %v2349, 0.020408163
    %v3016 = vmul.f32 %v2352, 0.020408163
    %v3017 = vmul.f32 %v2355, 0.020408163
    %v3018 = vmul.f32 %v2358, 0.020408163
    %v3019 = vmul.f32 %v2361, 0.020408163
    %v3020 = vmul.f32 %v2364, 0.020408163
    %v3021 = vmul.f32 %v2367, 0.020408163
    %v3022 = vmul.f32 %v2370, 0.020408163
    %v3023 = vmul.f32 %v2373, 0.020408163
    %v3024 = vmul.f32 %v2376, 0.020408163
    %v3025 = vmul.f32 %v2379, 0.020408163
    %v3026 = vmul.f32 %v2382, 0.020408163
    %v3027 = vmul.f32 %v2385, 0.020408163
    %v3028 = vmul.f32 %v2388, 0.020408163
    %v3029 = vmul.f32 %v2391, 0.020408163
    %v3030 = vmul.f32 %v2394, 0.020408163
    %v3031 = vmul.f32 %v2397, 0.020408163
    %v3032 = vmul.f32 %v2400, 0.020408163
    %v3033 = vmul.f32 %v2403, 0.020408163
    %v3034 = vmul.f32 %v2406, 0.020408163
    %v3035 = vmul.f32 %v2409, 0.020408163
    %v3036 = vmul.f32 %v2412, 0.020408163
    %v3037 = vmul.f32 %v2415, 0.020408163
    %v3038 = vmul.f32 %v2418, 0.020408163
    %v3039 = vmul.f32 %v2421, 0.020408163
    %v3040 = vmul.f32 %v2424, 0.020408163
    %v3041 = vmul.f32 %v2427, 0.020408163
    %v3042 = vmul.f32 %v2430, 0.020408163
    %v3043 = vmul.f32 %v2433, 0.020408163
    %v3044 = vmul.f32 %v2436, 0.020408163
    %v3045 = vmul.f32 %v2439, 0.020408163
    %v3046 = vmul.f32 %v2442, 0.020408163
    %v3047 = vmul.f32 %v2445, 0.020408163
    %v3048 = vmul.f32 %v2448, 0.020408163
    %v3049 = vmul.f32 %v2451, 0.020408163
    %v3050 = vmul.f32 %v2454, 0.020408163
    %v3051 = vmul.f32 %v2457, 0.020408163
    %v3052 = vmul.f32 %v2460, 0.020408163
    %v3053 = vmul.f32 %v2463, 0.020408163
    %v3054 = vmul.f32 %v2466, 0.020408163
    %v3055 = vmul.f32 %v2469, 0.020408163
    %v3056 = vmul.f32 %v2472, 0.020408163
    %v3057 = vmul.f32 %v2475, 0.020408163
    %v3058 = vmul.f32 %v2478, 0.020408163
    %v3059 = vmul.f32 %v2481, 0.020408163
    %v3060 = vmul.f32 %v2484, 0.020408163
    %v3061 = vmul.f32 %v2487, 0.020408163
    %v3062 = vmul.f32 %v2490, 0.020408163
    %v3063 = vmul.f32 %v2493, 0.020408163
    %v3064 = vmul.f32 %v2496, 0.020408163
    %v3065 = vmul.f32 %v2499, 0.020408163
    %v3066 = vmul.f32 %v2502, 0.020408163
    %v3067 = vmul.f32 %v2505, 0.020408163
    %v3068 = vmul.f32 %v2508, 0.020408163
    %v3069 = vmul.f32 %v2511, 0.020408163
    %v3070 = vmul.f32 %v2514, 0.020408163
    %v3071 = vmul.f32 %v2517, 0.020408163
    %v3072 = vmul.f32 %v2520, 0.020408163
    %v3073 = vmul.f32 %v2523, 0.020408163
    %v3074 = vmul.f32 %v2526, 0.020408163
    %v3075 = vmul.f32 %v2529, 0.020408163
    %v3076 = vmul.f32 %v2532, 0.020408163
    %v3077 = vmul.f32 %v2535, 0.020408163
    %v3078 = vmul.f32 %v2538, 0.020408163
    %v3079 = vmul.f32 %v2541, 0.020408163
    %v3080 = vmul.f32 %v2544, 0.020408163
    %v3081 = vmul.f32 %v2547, 0.020408163
    %v3082 = vmul.f32 %v2550, 0.020408163
    %v3083 = vmul.f32 %v2553, 0.020408163
    %v3084 = vmul.f32 %v2556, 0.020408163
    %v3085 = vmul.f32 %v2559, 0.020408163
    %v3086 = vmul.f32 %v2562, 0.020408163
    %v3087 = vmul.f32 %v2565, 0.020408163
    %v3088 = vmul.f32 %v2568, 0.020408163
    %v3089 = vmul.f32 %v2571, 0.020408163
    %v3090 = vmul.f32 %v2574, 0.020408163
    %v3091 = vmul.f32 %v2577, 0.020408163
    %v3092 = vmul.f32 %v2580, 0.020408163
    %v3093 = vpack.c.bf16 %v2582, %v2581
    %v3094 = vpack.c.bf16 %v2584, %v2583
    %v3095 = vpack.c.bf16 %v2586, %v2585
    %v3096 = vpack.c.bf16 %v2588, %v2587
    %v3097 = vpack.c.bf16 %v2590, %v2589
    %v3098 = vpack.c.bf16 %v2592, %v2591
    %v3099 = vpack.c.bf16 %v2594, %v2593
    %v3100 = vpack.c.bf16 %v2596, %v2595
    %v3101 = vpack.c.bf16 %v2598, %v2597
    %v3102 = vpack.c.bf16 %v2600, %v2599
    %v3103 = vpack.c.bf16 %v2602, %v2601
    %v3104 = vpack.c.bf16 %v2604, %v2603
    %v3105 = vpack.c.bf16 %v2606, %v2605
    %v3106 = vpack.c.bf16 %v2608, %v2607
    %v3107 = vpack.c.bf16 %v2610, %v2609
    %v3108 = vpack.c.bf16 %v2612, %v2611
    %v3109 = vpack.c.bf16 %v2614, %v2613
    %v3110 = vpack.c.bf16 %v2616, %v2615
    %v3111 = vpack.c.bf16 %v2618, %v2617
    %v3112 = vpack.c.bf16 %v2620, %v2619
    %v3113 = vpack.c.bf16 %v2622, %v2621
    %v3114 = vpack.c.bf16 %v2624, %v2623
    %v3115 = vpack.c.bf16 %v2626, %v2625
    %v3116 = vpack.c.bf16 %v2628, %v2627
    %v3117 = vpack.c.bf16 %v2630, %v2629
    %v3118 = vpack.c.bf16 %v2632, %v2631
    %v3119 = vpack.c.bf16 %v2634, %v2633
    %v3120 = vpack.c.bf16 %v2636, %v2635
    %v3121 = vpack.c.bf16 %v2638, %v2637
    %v3122 = vpack.c.bf16 %v2640, %v2639
    %v3123 = vpack.c.bf16 %v2642, %v2641
    %v3124 = vpack.c.bf16 %v2644, %v2643
    %v3125 = vpack.c.bf16 %v2646, %v2645
    %v3126 = vpack.c.bf16 %v2648, %v2647
    %v3127 = vpack.c.bf16 %v2650, %v2649
    %v3128 = vpack.c.bf16 %v2652, %v2651
    %v3129 = vpack.c.bf16 %v2654, %v2653
    %v3130 = vpack.c.bf16 %v2656, %v2655
    %v3131 = vpack.c.bf16 %v2658, %v2657
    %v3132 = vpack.c.bf16 %v2660, %v2659
    %v3133 = vpack.c.bf16 %v2662, %v2661
    %v3134 = vpack.c.bf16 %v2664, %v2663
    %v3135 = vpack.c.bf16 %v2666, %v2665
    %v3136 = vpack.c.bf16 %v2668, %v2667
    %v3137 = vpack.c.bf16 %v2670, %v2669
    %v3138 = vpack.c.bf16 %v2672, %v2671
    %v3139 = vpack.c.bf16 %v2674, %v2673
    %v3140 = vpack.c.bf16 %v2676, %v2675
    %v3141 = vpack.c.bf16 %v2678, %v2677
    %v3142 = vpack.c.bf16 %v2680, %v2679
    %v3143 = vpack.c.bf16 %v2682, %v2681
    %v3144 = vpack.c.bf16 %v2684, %v2683
    %v3145 = vpack.c.bf16 %v2686, %v2685
    %v3146 = vpack.c.bf16 %v2688, %v2687
    %v3147 = vpack.c.bf16 %v2690, %v2689
    %v3148 = vpack.c.bf16 %v2692, %v2691
    %v3149 = vpack.c.bf16 %v2694, %v2693
    %v3150 = vpack.c.bf16 %v2696, %v2695
    %v3151 = vpack.c.bf16 %v2698, %v2697
    %v3152 = vpack.c.bf16 %v2700, %v2699
    %v3153 = vpack.c.bf16 %v2702, %v2701
    %v3154 = vpack.c.bf16 %v2704, %v2703
    %v3155 = vpack.c.bf16 %v2706, %v2705
    %v3156 = vpack.c.bf16 %v2708, %v2707
    %v3157 = vpack.c.bf16 %v2710, %v2709
    %v3158 = vpack.c.bf16 %v2712, %v2711
    %v3159 = vpack.c.bf16 %v2714, %v2713
    %v3160 = vpack.c.bf16 %v2716, %v2715
    %v3161 = vpack.c.bf16 %v2718, %v2717
    %v3162 = vpack.c.bf16 %v2720, %v2719
    %v3163 = vpack.c.bf16 %v2722, %v2721
    %v3164 = vpack.c.bf16 %v2724, %v2723
    %v3165 = vpack.c.bf16 %v2726, %v2725
    %v3166 = vpack.c.bf16 %v2728, %v2727
    %v3167 = vpack.c.bf16 %v2730, %v2729
    %v3168 = vpack.c.bf16 %v2732, %v2731
    %v3169 = vpack.c.bf16 %v2734, %v2733
    %v3170 = vpack.c.bf16 %v2736, %v2735
    %v3171 = vpack.c.bf16 %v2738, %v2737
    %v3172 = vpack.c.bf16 %v2740, %v2739
    %v3173 = vpack.c.bf16 %v2742, %v2741
    %v3174 = vpack.c.bf16 %v2744, %v2743
    %v3175 = vpack.c.bf16 %v2746, %v2745
    %v3176 = vpack.c.bf16 %v2748, %v2747
    %v3177 = vpack.c.bf16 %v2750, %v2749
    %v3178 = vpack.c.bf16 %v2752, %v2751
    %v3179 = vpack.c.bf16 %v2754, %v2753
    %v3180 = vpack.c.bf16 %v2756, %v2755
    %v3181 = vpack.c.bf16 %v2758, %v2757
    %v3182 = vpack.c.bf16 %v2760, %v2759
    %v3183 = vpack.c.bf16 %v2762, %v2761
    %v3184 = vpack.c.bf16 %v2764, %v2763
    %v3185 = vpack.c.bf16 %v2766, %v2765
    %v3186 = vpack.c.bf16 %v2768, %v2767
    %v3187 = vpack.c.bf16 %v2770, %v2769
    %v3188 = vpack.c.bf16 %v2772, %v2771
    %v3189 = vpack.c.bf16 %v2774, %v2773
    %v3190 = vpack.c.bf16 %v2776, %v2775
    %v3191 = vpack.c.bf16 %v2778, %v2777
    %v3192 = vpack.c.bf16 %v2780, %v2779
    %v3193 = vpack.c.bf16 %v2782, %v2781
    %v3194 = vpack.c.bf16 %v2784, %v2783
    %v3195 = vpack.c.bf16 %v2786, %v2785
    %v3196 = vpack.c.bf16 %v2788, %v2787
    %v3197 = vpack.c.bf16 %v2790, %v2789
    %v3198 = vpack.c.bf16 %v2792, %v2791
    %v3199 = vpack.c.bf16 %v2794, %v2793
    %v3200 = vpack.c.bf16 %v2796, %v2795
    %v3201 = vpack.c.bf16 %v2798, %v2797
    %v3202 = vpack.c.bf16 %v2800, %v2799
    %v3203 = vpack.c.bf16 %v2802, %v2801
    %v3204 = vpack.c.bf16 %v2804, %v2803
    %v3205 = vpack.c.bf16 %v2806, %v2805
    %v3206 = vpack.c.bf16 %v2808, %v2807
    %v3207 = vpack.c.bf16 %v2810, %v2809
    %v3208 = vpack.c.bf16 %v2812, %v2811
    %v3209 = vpack.c.bf16 %v2814, %v2813
    %v3210 = vpack.c.bf16 %v2816, %v2815
    %v3211 = vpack.c.bf16 %v2818, %v2817
    %v3212 = vpack.c.bf16 %v2820, %v2819
    %v3213 = vpack.c.bf16 %v2822, %v2821
    %v3214 = vpack.c.bf16 %v2824, %v2823
    %v3215 = vpack.c.bf16 %v2826, %v2825
    %v3216 = vpack.c.bf16 %v2828, %v2827
    %v3217 = vpack.c.bf16 %v2830, %v2829
    %v3218 = vpack.c.bf16 %v2832, %v2831
    %v3219 = vpack.c.bf16 %v2834, %v2833
    %v3220 = vpack.c.bf16 %v2836, %v2835
    %v3221 = vpack.c.bf16 %v2838, %v2837
    %v3222 = vpack.c.bf16 %v2840, %v2839
    %v3223 = vpack.c.bf16 %v2842, %v2841
    %v3224 = vpack.c.bf16 %v2844, %v2843
    %v3225 = vpack.c.bf16 %v2846, %v2845
    %v3226 = vpack.c.bf16 %v2848, %v2847
    %v3227 = vpack.c.bf16 %v2850, %v2849
    %v3228 = vpack.c.bf16 %v2852, %v2851
    %v3229 = vpack.c.bf16 %v2854, %v2853
    %v3230 = vpack.c.bf16 %v2856, %v2855
    %v3231 = vpack.c.bf16 %v2858, %v2857
    %v3232 = vpack.c.bf16 %v2860, %v2859
    %v3233 = vpack.c.bf16 %v2862, %v2861
    %v3234 = vpack.c.bf16 %v2864, %v2863
    %v3235 = vpack.c.bf16 %v2866, %v2865
    %v3236 = vpack.c.bf16 %v2868, %v2867
    %v3237 = vpack.c.bf16 %v2870, %v2869
    %v3238 = vpack.c.bf16 %v2872, %v2871
    %v3239 = vpack.c.bf16 %v2874, %v2873
    %v3240 = vpack.c.bf16 %v2876, %v2875
    %v3241 = vpack.c.bf16 %v2878, %v2877
    %v3242 = vpack.c.bf16 %v2880, %v2879
    %v3243 = vpack.c.bf16 %v2882, %v2881
    %v3244 = vpack.c.bf16 %v2884, %v2883
    %v3245 = vpack.c.bf16 %v2886, %v2885
    %v3246 = vpack.c.bf16 %v2888, %v2887
    %v3247 = vpack.c.bf16 %v2890, %v2889
    %v3248 = vpack.c.bf16 %v2892, %v2891
    %v3249 = vpack.c.bf16 %v2894, %v2893
    %v3250 = vpack.c.bf16 %v2896, %v2895
    %v3251 = vpack.c.bf16 %v2898, %v2897
    %v3252 = vpack.c.bf16 %v2900, %v2899
    %v3253 = vpack.c.bf16 %v2902, %v2901
    %v3254 = vpack.c.bf16 %v2904, %v2903
    %v3255 = vpack.c.bf16 %v2906, %v2905
    %v3256 = vpack.c.bf16 %v2908, %v2907
    %v3257 = vpack.c.bf16 %v2910, %v2909
    %v3258 = vpack.c.bf16 %v2912, %v2911
    %v3259 = vpack.c.bf16 %v2914, %v2913
    %v3260 = vpack.c.bf16 %v2916, %v2915
    %v3261 = vpack.c.bf16 %v2918, %v2917
    %v3262 = vpack.c.bf16 %v2920, %v2919
    %v3263 = vpack.c.bf16 %v2922, %v2921
    %v3264 = vpack.c.bf16 %v2924, %v2923
    %v3265 = vpack.c.bf16 %v2926, %v2925
    %v3266 = vpack.c.bf16 %v2928, %v2927
    %v3267 = vpack.c.bf16 %v2930, %v2929
    %v3268 = vpack.c.bf16 %v2932, %v2931
    %v3269 = vpack.c.bf16 %v2934, %v2933
    %v3270 = vpack.c.bf16 %v2936, %v2935
    %v3271 = vpack.c.bf16 %v2938, %v2937
    %v3272 = vpack.c.bf16 %v2940, %v2939
    %v3273 = vpack.c.bf16 %v2942, %v2941
    %v3274 = vpack.c.bf16 %v2944, %v2943
    %v3275 = vpack.c.bf16 %v2946, %v2945
    %v3276 = vpack.c.bf16 %v2948, %v2947
    %v3277 = vpack.c.bf16 %v2950, %v2949
    %v3278 = vpack.c.bf16 %v2952, %v2951
    %v3279 = vpack.c.bf16 %v2954, %v2953
    %v3280 = vpack.c.bf16 %v2956, %v2955
    %v3281 = vpack.c.bf16 %v2958, %v2957
    %v3282 = vpack.c.bf16 %v2960, %v2959
    %v3283 = vpack.c.bf16 %v2962, %v2961
    %v3284 = vpack.c.bf16 %v2964, %v2963
    %v3285 = vpack.c.bf16 %v2966, %v2965
    %v3286 = vpack.c.bf16 %v2968, %v2967
    %v3287 = vpack.c.bf16 %v2970, %v2969
    %v3288 = vpack.c.bf16 %v2972, %v2971
    %v3289 = vpack.c.bf16 %v2974, %v2973
    %v3290 = vpack.c.bf16 %v2976, %v2975
    %v3291 = vpack.c.bf16 %v2978, %v2977
    %v3292 = vpack.c.bf16 %v2980, %v2979
    %v3293 = vpack.c.bf16 %v2982, %v2981
    %v3294 = vpack.c.bf16 %v2984, %v2983
    %v3295 = vpack.c.bf16 %v2986, %v2985
    %v3296 = vpack.c.bf16 %v2988, %v2987
    %v3297 = vpack.c.bf16 %v2990, %v2989
    %v3298 = vpack.c.bf16 %v2992, %v2991
    %v3299 = vpack.c.bf16 %v2994, %v2993
    %v3300 = vpack.c.bf16 %v2996, %v2995
    %v3301 = vpack.c.bf16 %v2998, %v2997
    %v3302 = vpack.c.bf16 %v3000, %v2999
    %v3303 = vpack.c.bf16 %v3002, %v3001
    %v3304 = vpack.c.bf16 %v3004, %v3003
    %v3305 = vpack.c.bf16 %v3006, %v3005
    %v3306 = vpack.c.bf16 %v3008, %v3007
    %v3307 = vpack.c.bf16 %v3010, %v3009
    %v3308 = vpack.c.bf16 %v3012, %v3011
    %v3309 = vpack.c.bf16 %v3014, %v3013
    %v3310 = vpack.c.bf16 %v3016, %v3015
    %v3311 = vpack.c.bf16 %v3018, %v3017
    %v3312 = vpack.c.bf16 %v3020, %v3019
    %v3313 = vpack.c.bf16 %v3022, %v3021
    %v3314 = vpack.c.bf16 %v3024, %v3023
    %v3315 = vpack.c.bf16 %v3026, %v3025
    %v3316 = vpack.c.bf16 %v3028, %v3027
    %v3317 = vpack.c.bf16 %v3030, %v3029
    %v3318 = vpack.c.bf16 %v3032, %v3031
    %v3319 = vpack.c.bf16 %v3034, %v3033
    %v3320 = vpack.c.bf16 %v3036, %v3035
    %v3321 = vpack.c.bf16 %v3038, %v3037
    %v3322 = vpack.c.bf16 %v3040, %v3039
    %v3323 = vpack.c.bf16 %v3042, %v3041
    %v3324 = vpack.c.bf16 %v3044, %v3043
    %v3325 = vpack.c.bf16 %v3046, %v3045
    %v3326 = vpack.c.bf16 %v3048, %v3047
    %v3327 = vpack.c.bf16 %v3050, %v3049
    %v3328 = vpack.c.bf16 %v3052, %v3051
    %v3329 = vpack.c.bf16 %v3054, %v3053
    %v3330 = vpack.c.bf16 %v3056, %v3055
    %v3331 = vpack.c.bf16 %v3058, %v3057
    %v3332 = vpack.c.bf16 %v3060, %v3059
    %v3333 = vpack.c.bf16 %v3062, %v3061
    %v3334 = vpack.c.bf16 %v3064, %v3063
    %v3335 = vpack.c.bf16 %v3066, %v3065
    %v3336 = vpack.c.bf16 %v3068, %v3067
    %v3337 = vpack.c.bf16 %v3070, %v3069
    %v3338 = vpack.c.bf16 %v3072, %v3071
    %v3339 = vpack.c.bf16 %v3074, %v3073
    %v3340 = vpack.c.bf16 %v3076, %v3075
    %v3341 = vpack.c.bf16 %v3078, %v3077
    %v3342 = vpack.c.bf16 %v3080, %v3079
    %v3343 = vpack.c.bf16 %v3082, %v3081
    %v3344 = vpack.c.bf16 %v3084, %v3083
    %v3345 = vpack.c.bf16 %v3086, %v3085
    %v3346 = vpack.c.bf16 %v3088, %v3087
    %v3347 = vpack.c.bf16 %v3090, %v3089
    %v3348 = vpack.c.bf16 %v3092, %v3091
    %v3349 = vld [vmem:[%s1] sm:$0xf]
    %v3350 = vld [vmem:[%s1 + $0x4] sm:$0xf]
    %v3351 = vld [vmem:[%s1 + $0x8] sm:$0xf]
    %v3352 = vld [vmem:[%s1 + $0xc] sm:$0xf]
    %v3353 = vld [vmem:[%s1 + $0x10] sm:$0xf]
    %v3354 = vld [vmem:[%s1 + $0x14] sm:$0xf]
    %v3355 = vld [vmem:[%s1 + $0x18] sm:$0xf]
    %v3356 = vld [vmem:[%s1 + $0x1c] sm:$0xf]
    %v3357 = vld [vmem:[%s1 + $0x20] sm:$0xf]
    %v3358 = vld [vmem:[%s1 + $0x24] sm:$0xf]
    %v3359 = vld [vmem:[%s1 + $0x28] sm:$0xf]
    %v3360 = vld [vmem:[%s1 + $0x2c] sm:$0xf]
    %v3361 = vld [vmem:[%s1 + $0x30] sm:$0xf]
    %v3362 = vld [vmem:[%s1 + $0x34] sm:$0xf]
    %v3363 = vld [vmem:[%s1 + $0x38] sm:$0xf]
    %v3364 = vld [vmem:[%s1 + $0x3c] sm:$0xf]
    %v3365 = vld [vmem:[%s1 + $0x40] sm:$0xf]
    %v3366 = vld [vmem:[%s1 + $0x44] sm:$0xf]
    %v3367 = vld [vmem:[%s1 + $0x48] sm:$0xf]
    %v3368 = vld [vmem:[%s1 + $0x4c] sm:$0xf]
    %v3369 = vld [vmem:[%s1 + $0x50] sm:$0xf]
    %v3370 = vld [vmem:[%s1 + $0x54] sm:$0xf]
    %v3371 = vld [vmem:[%s1 + $0x58] sm:$0xf]
    %v3372 = vld [vmem:[%s1 + $0x5c] sm:$0xf]
    %v3373 = vld [vmem:[%s1 + $0x60] sm:$0xf]
    %v3374 = vld [vmem:[%s1 + $0x64] sm:$0xf]
    %v3375 = vld [vmem:[%s1 + $0x68] sm:$0xf]
    %v3376 = vld [vmem:[%s1 + $0x6c] sm:$0xf]
    %v3377 = vld [vmem:[%s1 + $0x70] sm:$0xf]
    %v3378 = vld [vmem:[%s1 + $0x74] sm:$0xf]
    %v3379 = vld [vmem:[%s1 + $0x78] sm:$0xf]
    %v3380 = vld [vmem:[%s1 + $0x7c] sm:$0xf]
    %v3381 = vld [vmem:[%s1 + $0x80] sm:$0xf]
    %v3382 = vld [vmem:[%s1 + $0x84] sm:$0xf]
    %v3383 = vld [vmem:[%s1 + $0x88] sm:$0xf]
    %v3384 = vld [vmem:[%s1 + $0x8c] sm:$0xf]
    %v3385 = vld [vmem:[%s1 + $0x90] sm:$0xf]
    %v3386 = vld [vmem:[%s1 + $0x94] sm:$0xf]
    %v3387 = vld [vmem:[%s1 + $0x98] sm:$0xf]
    %v3388 = vld [vmem:[%s1 + $0x9c] sm:$0xf]
    %v3389 = vld [vmem:[%s1 + $0xa0] sm:$0xf]
    %v3390 = vld [vmem:[%s1 + $0xa4] sm:$0xf]
    %v3391 = vld [vmem:[%s1 + $0xa8] sm:$0xf]
    %v3392 = vld [vmem:[%s1 + $0xac] sm:$0xf]
    %v3393 = vld [vmem:[%s1 + $0xb0] sm:$0xf]
    %v3394 = vld [vmem:[%s1 + $0xb4] sm:$0xf]
    %v3395 = vld [vmem:[%s1 + $0xb8] sm:$0xf]
    %v3396 = vld [vmem:[%s1 + $0xbc] sm:$0xf]
    %v3397 = vld [vmem:[%s1 + $0xc0] sm:$0xf]
    %v3398 = vld [vmem:[%s1 + $0xc4] sm:$0xf]
    %v3399 = vld [vmem:[%s1 + $0xc8] sm:$0xf]
    %v3400 = vld [vmem:[%s1 + $0xcc] sm:$0xf]
    %v3401 = vld [vmem:[%s1 + $0xd0] sm:$0xf]
    %v3402 = vld [vmem:[%s1 + $0xd4] sm:$0xf]
    %v3403 = vld [vmem:[%s1 + $0xd8] sm:$0xf]
    %v3404 = vld [vmem:[%s1 + $0xdc] sm:$0xf]
    %v3405 = vld [vmem:[%s1 + $0xe0] sm:$0xf]
    %v3406 = vld [vmem:[%s1 + $0xe4] sm:$0xf]
    %v3407 = vld [vmem:[%s1 + $0xe8] sm:$0xf]
    %v3408 = vld [vmem:[%s1 + $0xec] sm:$0xf]
    %v3409 = vld [vmem:[%s1 + $0xf0] sm:$0xf]
    %v3410 = vld [vmem:[%s1 + $0xf4] sm:$0xf]
    %v3411 = vld [vmem:[%s1 + $0xf8] sm:$0xf]
    %v3412 = vld [vmem:[%s1 + $0xfc] sm:$0xf]
    %v3413 = vld [vmem:[%s1 + $0x100] sm:$0xf]
    %v3414 = vld [vmem:[%s1 + $0x104] sm:$0xf]
    %v3415 = vld [vmem:[%s1 + $0x108] sm:$0xf]
    %v3416 = vld [vmem:[%s1 + $0x10c] sm:$0xf]
    %v3417 = vld [vmem:[%s1 + $0x110] sm:$0xf]
    %v3418 = vld [vmem:[%s1 + $0x114] sm:$0xf]
    %v3419 = vld [vmem:[%s1 + $0x118] sm:$0xf]
    %v3420 = vld [vmem:[%s1 + $0x11c] sm:$0xf]
    %v3421 = vld [vmem:[%s1 + $0x120] sm:$0xf]
    %v3422 = vld [vmem:[%s1 + $0x124] sm:$0xf]
    %v3423 = vld [vmem:[%s1 + $0x128] sm:$0xf]
    %v3424 = vld [vmem:[%s1 + $0x12c] sm:$0xf]
    %v3425 = vld [vmem:[%s1 + $0x130] sm:$0xf]
    %v3426 = vld [vmem:[%s1 + $0x134] sm:$0xf]
    %v3427 = vld [vmem:[%s1 + $0x138] sm:$0xf]
    %v3428 = vld [vmem:[%s1 + $0x13c] sm:$0xf]
    %v3429 = vld [vmem:[%s1 + $0x140] sm:$0xf]
    %v3430 = vld [vmem:[%s1 + $0x144] sm:$0xf]
    %v3431 = vld [vmem:[%s1 + $0x148] sm:$0xf]
    %v3432 = vld [vmem:[%s1 + $0x14c] sm:$0xf]
    %v3433 = vld [vmem:[%s1 + $0x150] sm:$0xf]
    %v3434 = vld [vmem:[%s1 + $0x154] sm:$0xf]
    %v3435 = vld [vmem:[%s1 + $0x158] sm:$0xf]
    %v3436 = vld [vmem:[%s1 + $0x15c] sm:$0xf]
    %v3437 = vld [vmem:[%s1 + $0x160] sm:$0xf]
    %v3438 = vld [vmem:[%s1 + $0x164] sm:$0xf]
    %v3439 = vld [vmem:[%s1 + $0x168] sm:$0xf]
    %v3440 = vld [vmem:[%s1 + $0x16c] sm:$0xf]
    %v3441 = vld [vmem:[%s1 + $0x170] sm:$0xf]
    %v3442 = vld [vmem:[%s1 + $0x174] sm:$0xf]
    %v3443 = vld [vmem:[%s1 + $0x178] sm:$0xf]
    %v3444 = vld [vmem:[%s1 + $0x17c] sm:$0xf]
    %v3445 = vld [vmem:[%s1 + $0x180] sm:$0xf]
    %v3446 = vld [vmem:[%s1 + $0x184] sm:$0xf]
    %v3447 = vld [vmem:[%s1 + $0x188] sm:$0xf]
    %v3448 = vld [vmem:[%s1 + $0x18c] sm:$0xf]
    %v3449 = vld [vmem:[%s1 + $0x190] sm:$0xf]
    %v3450 = vld [vmem:[%s1 + $0x194] sm:$0xf]
    %v3451 = vld [vmem:[%s1 + $0x198] sm:$0xf]
    %v3452 = vld [vmem:[%s1 + $0x19c] sm:$0xf]
    %v3453 = vld [vmem:[%s1 + $0x1a0] sm:$0xf]
    %v3454 = vld [vmem:[%s1 + $0x1a4] sm:$0xf]
    %v3455 = vld [vmem:[%s1 + $0x1a8] sm:$0xf]
    %v3456 = vld [vmem:[%s1 + $0x1ac] sm:$0xf]
    %v3457 = vld [vmem:[%s1 + $0x1b0] sm:$0xf]
    %v3458 = vld [vmem:[%s1 + $0x1b4] sm:$0xf]
    %v3459 = vld [vmem:[%s1 + $0x1b8] sm:$0xf]
    %v3460 = vld [vmem:[%s1 + $0x1bc] sm:$0xf]
    %v3461 = vld [vmem:[%s1 + $0x1c0] sm:$0xf]
    %v3462 = vld [vmem:[%s1 + $0x1c4] sm:$0xf]
    %v3463 = vld [vmem:[%s1 + $0x1c8] sm:$0xf]
    %v3464 = vld [vmem:[%s1 + $0x1cc] sm:$0xf]
    %v3465 = vld [vmem:[%s1 + $0x1d0] sm:$0xf]
    %v3466 = vld [vmem:[%s1 + $0x1d4] sm:$0xf]
    %v3467 = vld [vmem:[%s1 + $0x1d8] sm:$0xf]
    %v3468 = vld [vmem:[%s1 + $0x1dc] sm:$0xf]
    %v3469 = vld [vmem:[%s1 + $0x1e0] sm:$0xf]
    %v3470 = vld [vmem:[%s1 + $0x1e4] sm:$0xf]
    %v3471 = vld [vmem:[%s1 + $0x1e8] sm:$0xf]
    %v3472 = vld [vmem:[%s1 + $0x1ec] sm:$0xf]
    %v3473 = vld [vmem:[%s1 + $0x1f0] sm:$0xf]
    %v3474 = vld [vmem:[%s1 + $0x1f4] sm:$0xf]
    %v3475 = vld [vmem:[%s1 + $0x1f8] sm:$0xf]
    %v3476 = vld [vmem:[%s1 + $0x1fc] sm:$0xf]
    %v3477 = vld [vmem:[%s1 + $0x200] sm:$0xf]
    %v3478 = vld [vmem:[%s1 + $0x204] sm:$0xf]
    %v3479 = vld [vmem:[%s1 + $0x208] sm:$0xf]
    %v3480 = vld [vmem:[%s1 + $0x20c] sm:$0xf]
    %v3481 = vld [vmem:[%s1 + $0x210] sm:$0xf]
    %v3482 = vld [vmem:[%s1 + $0x214] sm:$0xf]
    %v3483 = vld [vmem:[%s1 + $0x218] sm:$0xf]
    %v3484 = vld [vmem:[%s1 + $0x21c] sm:$0xf]
    %v3485 = vld [vmem:[%s1 + $0x220] sm:$0xf]
    %v3486 = vld [vmem:[%s1 + $0x224] sm:$0xf]
    %v3487 = vld [vmem:[%s1 + $0x228] sm:$0xf]
    %v3488 = vld [vmem:[%s1 + $0x22c] sm:$0xf]
    %v3489 = vld [vmem:[%s1 + $0x230] sm:$0xf]
    %v3490 = vld [vmem:[%s1 + $0x234] sm:$0xf]
    %v3491 = vld [vmem:[%s1 + $0x238] sm:$0xf]
    %v3492 = vld [vmem:[%s1 + $0x23c] sm:$0xf]
    %v3493 = vld [vmem:[%s1 + $0x240] sm:$0xf]
    %v3494 = vld [vmem:[%s1 + $0x244] sm:$0xf]
    %v3495 = vld [vmem:[%s1 + $0x248] sm:$0xf]
    %v3496 = vld [vmem:[%s1 + $0x24c] sm:$0xf]
    %v3497 = vld [vmem:[%s1 + $0x250] sm:$0xf]
    %v3498 = vld [vmem:[%s1 + $0x254] sm:$0xf]
    %v3499 = vld [vmem:[%s1 + $0x258] sm:$0xf]
    %v3500 = vld [vmem:[%s1 + $0x25c] sm:$0xf]
    %v3501 = vld [vmem:[%s1 + $0x260] sm:$0xf]
    %v3502 = vld [vmem:[%s1 + $0x264] sm:$0xf]
    %v3503 = vld [vmem:[%s1 + $0x268] sm:$0xf]
    %v3504 = vld [vmem:[%s1 + $0x26c] sm:$0xf]
    %v3505 = vld [vmem:[%s1 + $0x270] sm:$0xf]
    %v3506 = vld [vmem:[%s1 + $0x274] sm:$0xf]
    %v3507 = vld [vmem:[%s1 + $0x278] sm:$0xf]
    %v3508 = vld [vmem:[%s1 + $0x27c] sm:$0xf]
    %v3509 = vld [vmem:[%s1 + $0x280] sm:$0xf]
    %v3510 = vld [vmem:[%s1 + $0x284] sm:$0xf]
    %v3511 = vld [vmem:[%s1 + $0x288] sm:$0xf]
    %v3512 = vld [vmem:[%s1 + $0x28c] sm:$0xf]
    %v3513 = vld [vmem:[%s1 + $0x290] sm:$0xf]
    %v3514 = vld [vmem:[%s1 + $0x294] sm:$0xf]
    %v3515 = vld [vmem:[%s1 + $0x298] sm:$0xf]
    %v3516 = vld [vmem:[%s1 + $0x29c] sm:$0xf]
    %v3517 = vld [vmem:[%s1 + $0x2a0] sm:$0xf]
    %v3518 = vld [vmem:[%s1 + $0x2a4] sm:$0xf]
    %v3519 = vld [vmem:[%s1 + $0x2a8] sm:$0xf]
    %v3520 = vld [vmem:[%s1 + $0x2ac] sm:$0xf]
    %v3521 = vld [vmem:[%s1 + $0x2b0] sm:$0xf]
    %v3522 = vld [vmem:[%s1 + $0x2b4] sm:$0xf]
    %v3523 = vld [vmem:[%s1 + $0x2b8] sm:$0xf]
    %v3524 = vld [vmem:[%s1 + $0x2bc] sm:$0xf]
    %v3525 = vld [vmem:[%s1 + $0x2c0] sm:$0xf]
    %v3526 = vld [vmem:[%s1 + $0x2c4] sm:$0xf]
    %v3527 = vld [vmem:[%s1 + $0x2c8] sm:$0xf]
    %v3528 = vld [vmem:[%s1 + $0x2cc] sm:$0xf]
    %v3529 = vld [vmem:[%s1 + $0x2d0] sm:$0xf]
    %v3530 = vld [vmem:[%s1 + $0x2d4] sm:$0xf]
    %v3531 = vld [vmem:[%s1 + $0x2d8] sm:$0xf]
    %v3532 = vld [vmem:[%s1 + $0x2dc] sm:$0xf]
    %v3533 = vld [vmem:[%s1 + $0x2e0] sm:$0xf]
    %v3534 = vld [vmem:[%s1 + $0x2e4] sm:$0xf]
    %v3535 = vld [vmem:[%s1 + $0x2e8] sm:$0xf]
    %v3536 = vld [vmem:[%s1 + $0x2ec] sm:$0xf]
    %v3537 = vld [vmem:[%s1 + $0x2f0] sm:$0xf]
    %v3538 = vld [vmem:[%s1 + $0x2f4] sm:$0xf]
    %v3539 = vld [vmem:[%s1 + $0x2f8] sm:$0xf]
    %v3540 = vld [vmem:[%s1 + $0x2fc] sm:$0xf]
    %v3541 = vld [vmem:[%s1 + $0x300] sm:$0xf]
    %v3542 = vld [vmem:[%s1 + $0x304] sm:$0xf]
    %v3543 = vld [vmem:[%s1 + $0x308] sm:$0xf]
    %v3544 = vld [vmem:[%s1 + $0x30c] sm:$0xf]
    %v3545 = vld [vmem:[%s1 + $0x310] sm:$0xf]
    %v3546 = vld [vmem:[%s1 + $0x314] sm:$0xf]
    %v3547 = vld [vmem:[%s1 + $0x318] sm:$0xf]
    %v3548 = vld [vmem:[%s1 + $0x31c] sm:$0xf]
    %v3549 = vld [vmem:[%s1 + $0x320] sm:$0xf]
    %v3550 = vld [vmem:[%s1 + $0x324] sm:$0xf]
    %v3551 = vld [vmem:[%s1 + $0x328] sm:$0xf]
    %v3552 = vld [vmem:[%s1 + $0x32c] sm:$0xf]
    %v3553 = vld [vmem:[%s1 + $0x330] sm:$0xf]
    %v3554 = vld [vmem:[%s1 + $0x334] sm:$0xf]
    %v3555 = vld [vmem:[%s1 + $0x338] sm:$0xf]
    %v3556 = vld [vmem:[%s1 + $0x33c] sm:$0xf]
    %v3557 = vld [vmem:[%s1 + $0x340] sm:$0xf]
    %v3558 = vld [vmem:[%s1 + $0x344] sm:$0xf]
    %v3559 = vld [vmem:[%s1 + $0x348] sm:$0xf]
    %v3560 = vld [vmem:[%s1 + $0x34c] sm:$0xf]
    %v3561 = vld [vmem:[%s1 + $0x350] sm:$0xf]
    %v3562 = vld [vmem:[%s1 + $0x354] sm:$0xf]
    %v3563 = vld [vmem:[%s1 + $0x358] sm:$0xf]
    %v3564 = vld [vmem:[%s1 + $0x35c] sm:$0xf]
    %v3565 = vld [vmem:[%s1 + $0x360] sm:$0xf]
    %v3566 = vld [vmem:[%s1 + $0x364] sm:$0xf]
    %v3567 = vld [vmem:[%s1 + $0x368] sm:$0xf]
    %v3568 = vld [vmem:[%s1 + $0x36c] sm:$0xf]
    %v3569 = vld [vmem:[%s1 + $0x370] sm:$0xf]
    %v3570 = vld [vmem:[%s1 + $0x374] sm:$0xf]
    %v3571 = vld [vmem:[%s1 + $0x378] sm:$0xf]
    %v3572 = vld [vmem:[%s1 + $0x37c] sm:$0xf]
    %v3573 = vld [vmem:[%s1 + $0x380] sm:$0xf]
    %v3574 = vld [vmem:[%s1 + $0x384] sm:$0xf]
    %v3575 = vld [vmem:[%s1 + $0x388] sm:$0xf]
    %v3576 = vld [vmem:[%s1 + $0x38c] sm:$0xf]
    %v3577 = vld [vmem:[%s1 + $0x390] sm:$0xf]
    %v3578 = vld [vmem:[%s1 + $0x394] sm:$0xf]
    %v3579 = vld [vmem:[%s1 + $0x398] sm:$0xf]
    %v3580 = vld [vmem:[%s1 + $0x39c] sm:$0xf]
    %v3581 = vld [vmem:[%s1 + $0x3a0] sm:$0xf]
    %v3582 = vld [vmem:[%s1 + $0x3a4] sm:$0xf]
    %v3583 = vld [vmem:[%s1 + $0x3a8] sm:$0xf]
    %v3584 = vld [vmem:[%s1 + $0x3ac] sm:$0xf]
    %v3585 = vld [vmem:[%s1 + $0x3b0] sm:$0xf]
    %v3586 = vld [vmem:[%s1 + $0x3b4] sm:$0xf]
    %v3587 = vld [vmem:[%s1 + $0x3b8] sm:$0xf]
    %v3588 = vld [vmem:[%s1 + $0x3bc] sm:$0xf]
    %v3589 = vld [vmem:[%s1 + $0x3c0] sm:$0xf]
    %v3590 = vld [vmem:[%s1 + $0x3c4] sm:$0xf]
    %v3591 = vld [vmem:[%s1 + $0x3c8] sm:$0xf]
    %v3592 = vld [vmem:[%s1 + $0x3cc] sm:$0xf]
    %v3593 = vld [vmem:[%s1 + $0x3d0] sm:$0xf]
    %v3594 = vld [vmem:[%s1 + $0x3d4] sm:$0xf]
    %v3595 = vld [vmem:[%s1 + $0x3d8] sm:$0xf]
    %v3596 = vld [vmem:[%s1 + $0x3dc] sm:$0xf]
    %v3597 = vld [vmem:[%s1 + $0x3e0] sm:$0xf]
    %v3598 = vld [vmem:[%s1 + $0x3e4] sm:$0xf]
    %v3599 = vld [vmem:[%s1 + $0x3e8] sm:$0xf]
    %v3600 = vld [vmem:[%s1 + $0x3ec] sm:$0xf]
    %v3601 = vld [vmem:[%s1 + $0x3f0] sm:$0xf]
    %v3602 = vld [vmem:[%s1 + $0x3f4] sm:$0xf]
    %v3603 = vld [vmem:[%s1 + $0x3f8] sm:$0xf]
    %v3604 = vld [vmem:[%s1 + $0x3fc] sm:$0xf]
    %v3605 = vld [vmem:[%s2] sm:$0x1]
    %v3607 = vperm.slane %v3605, 0
    %v3865 = vunpack.c.l.b16 %v3093
    %v3866 = vunpack.c.h.b16 %v3093
    %v3867 = vunpack.c.l.b16 %v3094
    %v3868 = vunpack.c.h.b16 %v3094
    %v3869 = vunpack.c.l.b16 %v3095
    %v3870 = vunpack.c.h.b16 %v3095
    %v3871 = vunpack.c.l.b16 %v3096
    %v3872 = vunpack.c.h.b16 %v3096
    %v3873 = vunpack.c.l.b16 %v3097
    %v3874 = vunpack.c.h.b16 %v3097
    %v3875 = vunpack.c.l.b16 %v3098
    %v3876 = vunpack.c.h.b16 %v3098
    %v3877 = vunpack.c.l.b16 %v3099
    %v3878 = vunpack.c.h.b16 %v3099
    %v3879 = vunpack.c.l.b16 %v3100
    %v3880 = vunpack.c.h.b16 %v3100
    %v3881 = vunpack.c.l.b16 %v3101
    %v3882 = vunpack.c.h.b16 %v3101
    %v3883 = vunpack.c.l.b16 %v3102
    %v3884 = vunpack.c.h.b16 %v3102
    %v3885 = vunpack.c.l.b16 %v3103
    %v3886 = vunpack.c.h.b16 %v3103
    %v3887 = vunpack.c.l.b16 %v3104
    %v3888 = vunpack.c.h.b16 %v3104
    %v3889 = vunpack.c.l.b16 %v3105
    %v3890 = vunpack.c.h.b16 %v3105
    %v3891 = vunpack.c.l.b16 %v3106
    %v3892 = vunpack.c.h.b16 %v3106
    %v3893 = vunpack.c.l.b16 %v3107
    %v3894 = vunpack.c.h.b16 %v3107
    %v3895 = vunpack.c.l.b16 %v3108
    %v3896 = vunpack.c.h.b16 %v3108
    %v3897 = vunpack.c.l.b16 %v3109
    %v3898 = vunpack.c.h.b16 %v3109
    %v3899 = vunpack.c.l.b16 %v3110
    %v3900 = vunpack.c.h.b16 %v3110
    %v3901 = vunpack.c.l.b16 %v3111
    %v3902 = vunpack.c.h.b16 %v3111
    %v3903 = vunpack.c.l.b16 %v3112
    %v3904 = vunpack.c.h.b16 %v3112
    %v3905 = vunpack.c.l.b16 %v3113
    %v3906 = vunpack.c.h.b16 %v3113
    %v3907 = vunpack.c.l.b16 %v3114
    %v3908 = vunpack.c.h.b16 %v3114
    %v3909 = vunpack.c.l.b16 %v3115
    %v3910 = vunpack.c.h.b16 %v3115
    %v3911 = vunpack.c.l.b16 %v3116
    %v3912 = vunpack.c.h.b16 %v3116
    %v3913 = vunpack.c.l.b16 %v3117
    %v3914 = vunpack.c.h.b16 %v3117
    %v3915 = vunpack.c.l.b16 %v3118
    %v3916 = vunpack.c.h.b16 %v3118
    %v3917 = vunpack.c.l.b16 %v3119
    %v3918 = vunpack.c.h.b16 %v3119
    %v3919 = vunpack.c.l.b16 %v3120
    %v3920 = vunpack.c.h.b16 %v3120
    %v3921 = vunpack.c.l.b16 %v3121
    %v3922 = vunpack.c.h.b16 %v3121
    %v3923 = vunpack.c.l.b16 %v3122
    %v3924 = vunpack.c.h.b16 %v3122
    %v3925 = vunpack.c.l.b16 %v3123
    %v3926 = vunpack.c.h.b16 %v3123
    %v3927 = vunpack.c.l.b16 %v3124
    %v3928 = vunpack.c.h.b16 %v3124
    %v3929 = vunpack.c.l.b16 %v3125
    %v3930 = vunpack.c.h.b16 %v3125
    %v3931 = vunpack.c.l.b16 %v3126
    %v3932 = vunpack.c.h.b16 %v3126
    %v3933 = vunpack.c.l.b16 %v3127
    %v3934 = vunpack.c.h.b16 %v3127
    %v3935 = vunpack.c.l.b16 %v3128
    %v3936 = vunpack.c.h.b16 %v3128
    %v3937 = vunpack.c.l.b16 %v3129
    %v3938 = vunpack.c.h.b16 %v3129
    %v3939 = vunpack.c.l.b16 %v3130
    %v3940 = vunpack.c.h.b16 %v3130
    %v3941 = vunpack.c.l.b16 %v3131
    %v3942 = vunpack.c.h.b16 %v3131
    %v3943 = vunpack.c.l.b16 %v3132
    %v3944 = vunpack.c.h.b16 %v3132
    %v3945 = vunpack.c.l.b16 %v3133
    %v3946 = vunpack.c.h.b16 %v3133
    %v3947 = vunpack.c.l.b16 %v3134
    %v3948 = vunpack.c.h.b16 %v3134
    %v3949 = vunpack.c.l.b16 %v3135
    %v3950 = vunpack.c.h.b16 %v3135
    %v3951 = vunpack.c.l.b16 %v3136
    %v3952 = vunpack.c.h.b16 %v3136
    %v3953 = vunpack.c.l.b16 %v3137
    %v3954 = vunpack.c.h.b16 %v3137
    %v3955 = vunpack.c.l.b16 %v3138
    %v3956 = vunpack.c.h.b16 %v3138
    %v3957 = vunpack.c.l.b16 %v3139
    %v3958 = vunpack.c.h.b16 %v3139
    %v3959 = vunpack.c.l.b16 %v3140
    %v3960 = vunpack.c.h.b16 %v3140
    %v3961 = vunpack.c.l.b16 %v3141
    %v3962 = vunpack.c.h.b16 %v3141
    %v3963 = vunpack.c.l.b16 %v3142
    %v3964 = vunpack.c.h.b16 %v3142
    %v3965 = vunpack.c.l.b16 %v3143
    %v3966 = vunpack.c.h.b16 %v3143
    %v3967 = vunpack.c.l.b16 %v3144
    %v3968 = vunpack.c.h.b16 %v3144
    %v3969 = vunpack.c.l.b16 %v3145
    %v3970 = vunpack.c.h.b16 %v3145
    %v3971 = vunpack.c.l.b16 %v3146
    %v3972 = vunpack.c.h.b16 %v3146
    %v3973 = vunpack.c.l.b16 %v3147
    %v3974 = vunpack.c.h.b16 %v3147
    %v3975 = vunpack.c.l.b16 %v3148
    %v3976 = vunpack.c.h.b16 %v3148
    %v3977 = vunpack.c.l.b16 %v3149
    %v3978 = vunpack.c.h.b16 %v3149
    %v3979 = vunpack.c.l.b16 %v3150
    %v3980 = vunpack.c.h.b16 %v3150
    %v3981 = vunpack.c.l.b16 %v3151
    %v3982 = vunpack.c.h.b16 %v3151
    %v3983 = vunpack.c.l.b16 %v3152
    %v3984 = vunpack.c.h.b16 %v3152
    %v3985 = vunpack.c.l.b16 %v3153
    %v3986 = vunpack.c.h.b16 %v3153
    %v3987 = vunpack.c.l.b16 %v3154
    %v3988 = vunpack.c.h.b16 %v3154
    %v3989 = vunpack.c.l.b16 %v3155
    %v3990 = vunpack.c.h.b16 %v3155
    %v3991 = vunpack.c.l.b16 %v3156
    %v3992 = vunpack.c.h.b16 %v3156
    %v3993 = vunpack.c.l.b16 %v3157
    %v3994 = vunpack.c.h.b16 %v3157
    %v3995 = vunpack.c.l.b16 %v3158
    %v3996 = vunpack.c.h.b16 %v3158
    %v3997 = vunpack.c.l.b16 %v3159
    %v3998 = vunpack.c.h.b16 %v3159
    %v3999 = vunpack.c.l.b16 %v3160
    %v4000 = vunpack.c.h.b16 %v3160
    %v4001 = vunpack.c.l.b16 %v3161
    %v4002 = vunpack.c.h.b16 %v3161
    %v4003 = vunpack.c.l.b16 %v3162
    %v4004 = vunpack.c.h.b16 %v3162
    %v4005 = vunpack.c.l.b16 %v3163
    %v4006 = vunpack.c.h.b16 %v3163
    %v4007 = vunpack.c.l.b16 %v3164
    %v4008 = vunpack.c.h.b16 %v3164
    %v4009 = vunpack.c.l.b16 %v3165
    %v4010 = vunpack.c.h.b16 %v3165
    %v4011 = vunpack.c.l.b16 %v3166
    %v4012 = vunpack.c.h.b16 %v3166
    %v4013 = vunpack.c.l.b16 %v3167
    %v4014 = vunpack.c.h.b16 %v3167
    %v4015 = vunpack.c.l.b16 %v3168
    %v4016 = vunpack.c.h.b16 %v3168
    %v4017 = vunpack.c.l.b16 %v3169
    %v4018 = vunpack.c.h.b16 %v3169
    %v4019 = vunpack.c.l.b16 %v3170
    %v4020 = vunpack.c.h.b16 %v3170
    %v4021 = vunpack.c.l.b16 %v3171
    %v4022 = vunpack.c.h.b16 %v3171
    %v4023 = vunpack.c.l.b16 %v3172
    %v4024 = vunpack.c.h.b16 %v3172
    %v4025 = vunpack.c.l.b16 %v3173
    %v4026 = vunpack.c.h.b16 %v3173
    %v4027 = vunpack.c.l.b16 %v3174
    %v4028 = vunpack.c.h.b16 %v3174
    %v4029 = vunpack.c.l.b16 %v3175
    %v4030 = vunpack.c.h.b16 %v3175
    %v4031 = vunpack.c.l.b16 %v3176
    %v4032 = vunpack.c.h.b16 %v3176
    %v4033 = vunpack.c.l.b16 %v3177
    %v4034 = vunpack.c.h.b16 %v3177
    %v4035 = vunpack.c.l.b16 %v3178
    %v4036 = vunpack.c.h.b16 %v3178
    %v4037 = vunpack.c.l.b16 %v3179
    %v4038 = vunpack.c.h.b16 %v3179
    %v4039 = vunpack.c.l.b16 %v3180
    %v4040 = vunpack.c.h.b16 %v3180
    %v4041 = vunpack.c.l.b16 %v3181
    %v4042 = vunpack.c.h.b16 %v3181
    %v4043 = vunpack.c.l.b16 %v3182
    %v4044 = vunpack.c.h.b16 %v3182
    %v4045 = vunpack.c.l.b16 %v3183
    %v4046 = vunpack.c.h.b16 %v3183
    %v4047 = vunpack.c.l.b16 %v3184
    %v4048 = vunpack.c.h.b16 %v3184
    %v4049 = vunpack.c.l.b16 %v3185
    %v4050 = vunpack.c.h.b16 %v3185
    %v4051 = vunpack.c.l.b16 %v3186
    %v4052 = vunpack.c.h.b16 %v3186
    %v4053 = vunpack.c.l.b16 %v3187
    %v4054 = vunpack.c.h.b16 %v3187
    %v4055 = vunpack.c.l.b16 %v3188
    %v4056 = vunpack.c.h.b16 %v3188
    %v4057 = vunpack.c.l.b16 %v3189
    %v4058 = vunpack.c.h.b16 %v3189
    %v4059 = vunpack.c.l.b16 %v3190
    %v4060 = vunpack.c.h.b16 %v3190
    %v4061 = vunpack.c.l.b16 %v3191
    %v4062 = vunpack.c.h.b16 %v3191
    %v4063 = vunpack.c.l.b16 %v3192
    %v4064 = vunpack.c.h.b16 %v3192
    %v4065 = vunpack.c.l.b16 %v3193
    %v4066 = vunpack.c.h.b16 %v3193
    %v4067 = vunpack.c.l.b16 %v3194
    %v4068 = vunpack.c.h.b16 %v3194
    %v4069 = vunpack.c.l.b16 %v3195
    %v4070 = vunpack.c.h.b16 %v3195
    %v4071 = vunpack.c.l.b16 %v3196
    %v4072 = vunpack.c.h.b16 %v3196
    %v4073 = vunpack.c.l.b16 %v3197
    %v4074 = vunpack.c.h.b16 %v3197
    %v4075 = vunpack.c.l.b16 %v3198
    %v4076 = vunpack.c.h.b16 %v3198
    %v4077 = vunpack.c.l.b16 %v3199
    %v4078 = vunpack.c.h.b16 %v3199
    %v4079 = vunpack.c.l.b16 %v3200
    %v4080 = vunpack.c.h.b16 %v3200
    %v4081 = vunpack.c.l.b16 %v3201
    %v4082 = vunpack.c.h.b16 %v3201
    %v4083 = vunpack.c.l.b16 %v3202
    %v4084 = vunpack.c.h.b16 %v3202
    %v4085 = vunpack.c.l.b16 %v3203
    %v4086 = vunpack.c.h.b16 %v3203
    %v4087 = vunpack.c.l.b16 %v3204
    %v4088 = vunpack.c.h.b16 %v3204
    %v4089 = vunpack.c.l.b16 %v3205
    %v4090 = vunpack.c.h.b16 %v3205
    %v4091 = vunpack.c.l.b16 %v3206
    %v4092 = vunpack.c.h.b16 %v3206
    %v4093 = vunpack.c.l.b16 %v3207
    %v4094 = vunpack.c.h.b16 %v3207
    %v4095 = vunpack.c.l.b16 %v3208
    %v4096 = vunpack.c.h.b16 %v3208
    %v4097 = vunpack.c.l.b16 %v3209
    %v4098 = vunpack.c.h.b16 %v3209
    %v4099 = vunpack.c.l.b16 %v3210
    %v4100 = vunpack.c.h.b16 %v3210
    %v4101 = vunpack.c.l.b16 %v3211
    %v4102 = vunpack.c.h.b16 %v3211
    %v4103 = vunpack.c.l.b16 %v3212
    %v4104 = vunpack.c.h.b16 %v3212
    %v4105 = vunpack.c.l.b16 %v3213
    %v4106 = vunpack.c.h.b16 %v3213
    %v4107 = vunpack.c.l.b16 %v3214
    %v4108 = vunpack.c.h.b16 %v3214
    %v4109 = vunpack.c.l.b16 %v3215
    %v4110 = vunpack.c.h.b16 %v3215
    %v4111 = vunpack.c.l.b16 %v3216
    %v4112 = vunpack.c.h.b16 %v3216
    %v4113 = vunpack.c.l.b16 %v3217
    %v4114 = vunpack.c.h.b16 %v3217
    %v4115 = vunpack.c.l.b16 %v3218
    %v4116 = vunpack.c.h.b16 %v3218
    %v4117 = vunpack.c.l.b16 %v3219
    %v4118 = vunpack.c.h.b16 %v3219
    %v4119 = vunpack.c.l.b16 %v3220
    %v4120 = vunpack.c.h.b16 %v3220
    %v4121 = vunpack.c.l.b16 %v3221
    %v4122 = vunpack.c.h.b16 %v3221
    %v4123 = vunpack.c.l.b16 %v3222
    %v4124 = vunpack.c.h.b16 %v3222
    %v4125 = vunpack.c.l.b16 %v3223
    %v4126 = vunpack.c.h.b16 %v3223
    %v4127 = vunpack.c.l.b16 %v3224
    %v4128 = vunpack.c.h.b16 %v3224
    %v4129 = vunpack.c.l.b16 %v3225
    %v4130 = vunpack.c.h.b16 %v3225
    %v4131 = vunpack.c.l.b16 %v3226
    %v4132 = vunpack.c.h.b16 %v3226
    %v4133 = vunpack.c.l.b16 %v3227
    %v4134 = vunpack.c.h.b16 %v3227
    %v4135 = vunpack.c.l.b16 %v3228
    %v4136 = vunpack.c.h.b16 %v3228
    %v4137 = vunpack.c.l.b16 %v3229
    %v4138 = vunpack.c.h.b16 %v3229
    %v4139 = vunpack.c.l.b16 %v3230
    %v4140 = vunpack.c.h.b16 %v3230
    %v4141 = vunpack.c.l.b16 %v3231
    %v4142 = vunpack.c.h.b16 %v3231
    %v4143 = vunpack.c.l.b16 %v3232
    %v4144 = vunpack.c.h.b16 %v3232
    %v4145 = vunpack.c.l.b16 %v3233
    %v4146 = vunpack.c.h.b16 %v3233
    %v4147 = vunpack.c.l.b16 %v3234
    %v4148 = vunpack.c.h.b16 %v3234
    %v4149 = vunpack.c.l.b16 %v3235
    %v4150 = vunpack.c.h.b16 %v3235
    %v4151 = vunpack.c.l.b16 %v3236
    %v4152 = vunpack.c.h.b16 %v3236
    %v4153 = vunpack.c.l.b16 %v3237
    %v4154 = vunpack.c.h.b16 %v3237
    %v4155 = vunpack.c.l.b16 %v3238
    %v4156 = vunpack.c.h.b16 %v3238
    %v4157 = vunpack.c.l.b16 %v3239
    %v4158 = vunpack.c.h.b16 %v3239
    %v4159 = vunpack.c.l.b16 %v3240
    %v4160 = vunpack.c.h.b16 %v3240
    %v4161 = vunpack.c.l.b16 %v3241
    %v4162 = vunpack.c.h.b16 %v3241
    %v4163 = vunpack.c.l.b16 %v3242
    %v4164 = vunpack.c.h.b16 %v3242
    %v4165 = vunpack.c.l.b16 %v3243
    %v4166 = vunpack.c.h.b16 %v3243
    %v4167 = vunpack.c.l.b16 %v3244
    %v4168 = vunpack.c.h.b16 %v3244
    %v4169 = vunpack.c.l.b16 %v3245
    %v4170 = vunpack.c.h.b16 %v3245
    %v4171 = vunpack.c.l.b16 %v3246
    %v4172 = vunpack.c.h.b16 %v3246
    %v4173 = vunpack.c.l.b16 %v3247
    %v4174 = vunpack.c.h.b16 %v3247
    %v4175 = vunpack.c.l.b16 %v3248
    %v4176 = vunpack.c.h.b16 %v3248
    %v4177 = vunpack.c.l.b16 %v3249
    %v4178 = vunpack.c.h.b16 %v3249
    %v4179 = vunpack.c.l.b16 %v3250
    %v4180 = vunpack.c.h.b16 %v3250
    %v4181 = vunpack.c.l.b16 %v3251
    %v4182 = vunpack.c.h.b16 %v3251
    %v4183 = vunpack.c.l.b16 %v3252
    %v4184 = vunpack.c.h.b16 %v3252
    %v4185 = vunpack.c.l.b16 %v3253
    %v4186 = vunpack.c.h.b16 %v3253
    %v4187 = vunpack.c.l.b16 %v3254
    %v4188 = vunpack.c.h.b16 %v3254
    %v4189 = vunpack.c.l.b16 %v3255
    %v4190 = vunpack.c.h.b16 %v3255
    %v4191 = vunpack.c.l.b16 %v3256
    %v4192 = vunpack.c.h.b16 %v3256
    %v4193 = vunpack.c.l.b16 %v3257
    %v4194 = vunpack.c.h.b16 %v3257
    %v4195 = vunpack.c.l.b16 %v3258
    %v4196 = vunpack.c.h.b16 %v3258
    %v4197 = vunpack.c.l.b16 %v3259
    %v4198 = vunpack.c.h.b16 %v3259
    %v4199 = vunpack.c.l.b16 %v3260
    %v4200 = vunpack.c.h.b16 %v3260
    %v4201 = vunpack.c.l.b16 %v3261
    %v4202 = vunpack.c.h.b16 %v3261
    %v4203 = vunpack.c.l.b16 %v3262
    %v4204 = vunpack.c.h.b16 %v3262
    %v4205 = vunpack.c.l.b16 %v3263
    %v4206 = vunpack.c.h.b16 %v3263
    %v4207 = vunpack.c.l.b16 %v3264
    %v4208 = vunpack.c.h.b16 %v3264
    %v4209 = vunpack.c.l.b16 %v3265
    %v4210 = vunpack.c.h.b16 %v3265
    %v4211 = vunpack.c.l.b16 %v3266
    %v4212 = vunpack.c.h.b16 %v3266
    %v4213 = vunpack.c.l.b16 %v3267
    %v4214 = vunpack.c.h.b16 %v3267
    %v4215 = vunpack.c.l.b16 %v3268
    %v4216 = vunpack.c.h.b16 %v3268
    %v4217 = vunpack.c.l.b16 %v3269
    %v4218 = vunpack.c.h.b16 %v3269
    %v4219 = vunpack.c.l.b16 %v3270
    %v4220 = vunpack.c.h.b16 %v3270
    %v4221 = vunpack.c.l.b16 %v3271
    %v4222 = vunpack.c.h.b16 %v3271
    %v4223 = vunpack.c.l.b16 %v3272
    %v4224 = vunpack.c.h.b16 %v3272
    %v4225 = vunpack.c.l.b16 %v3273
    %v4226 = vunpack.c.h.b16 %v3273
    %v4227 = vunpack.c.l.b16 %v3274
    %v4228 = vunpack.c.h.b16 %v3274
    %v4229 = vunpack.c.l.b16 %v3275
    %v4230 = vunpack.c.h.b16 %v3275
    %v4231 = vunpack.c.l.b16 %v3276
    %v4232 = vunpack.c.h.b16 %v3276
    %v4233 = vunpack.c.l.b16 %v3277
    %v4234 = vunpack.c.h.b16 %v3277
    %v4235 = vunpack.c.l.b16 %v3278
    %v4236 = vunpack.c.h.b16 %v3278
    %v4237 = vunpack.c.l.b16 %v3279
    %v4238 = vunpack.c.h.b16 %v3279
    %v4239 = vunpack.c.l.b16 %v3280
    %v4240 = vunpack.c.h.b16 %v3280
    %v4241 = vunpack.c.l.b16 %v3281
    %v4242 = vunpack.c.h.b16 %v3281
    %v4243 = vunpack.c.l.b16 %v3282
    %v4244 = vunpack.c.h.b16 %v3282
    %v4245 = vunpack.c.l.b16 %v3283
    %v4246 = vunpack.c.h.b16 %v3283
    %v4247 = vunpack.c.l.b16 %v3284
    %v4248 = vunpack.c.h.b16 %v3284
    %v4249 = vunpack.c.l.b16 %v3285
    %v4250 = vunpack.c.h.b16 %v3285
    %v4251 = vunpack.c.l.b16 %v3286
    %v4252 = vunpack.c.h.b16 %v3286
    %v4253 = vunpack.c.l.b16 %v3287
    %v4254 = vunpack.c.h.b16 %v3287
    %v4255 = vunpack.c.l.b16 %v3288
    %v4256 = vunpack.c.h.b16 %v3288
    %v4257 = vunpack.c.l.b16 %v3289
    %v4258 = vunpack.c.h.b16 %v3289
    %v4259 = vunpack.c.l.b16 %v3290
    %v4260 = vunpack.c.h.b16 %v3290
    %v4261 = vunpack.c.l.b16 %v3291
    %v4262 = vunpack.c.h.b16 %v3291
    %v4263 = vunpack.c.l.b16 %v3292
    %v4264 = vunpack.c.h.b16 %v3292
    %v4265 = vunpack.c.l.b16 %v3293
    %v4266 = vunpack.c.h.b16 %v3293
    %v4267 = vunpack.c.l.b16 %v3294
    %v4268 = vunpack.c.h.b16 %v3294
    %v4269 = vunpack.c.l.b16 %v3295
    %v4270 = vunpack.c.h.b16 %v3295
    %v4271 = vunpack.c.l.b16 %v3296
    %v4272 = vunpack.c.h.b16 %v3296
    %v4273 = vunpack.c.l.b16 %v3297
    %v4274 = vunpack.c.h.b16 %v3297
    %v4275 = vunpack.c.l.b16 %v3298
    %v4276 = vunpack.c.h.b16 %v3298
    %v4277 = vunpack.c.l.b16 %v3299
    %v4278 = vunpack.c.h.b16 %v3299
    %v4279 = vunpack.c.l.b16 %v3300
    %v4280 = vunpack.c.h.b16 %v3300
    %v4281 = vunpack.c.l.b16 %v3301
    %v4282 = vunpack.c.h.b16 %v3301
    %v4283 = vunpack.c.l.b16 %v3302
    %v4284 = vunpack.c.h.b16 %v3302
    %v4285 = vunpack.c.l.b16 %v3303
    %v4286 = vunpack.c.h.b16 %v3303
    %v4287 = vunpack.c.l.b16 %v3304
    %v4288 = vunpack.c.h.b16 %v3304
    %v4289 = vunpack.c.l.b16 %v3305
    %v4290 = vunpack.c.h.b16 %v3305
    %v4291 = vunpack.c.l.b16 %v3306
    %v4292 = vunpack.c.h.b16 %v3306
    %v4293 = vunpack.c.l.b16 %v3307
    %v4294 = vunpack.c.h.b16 %v3307
    %v4295 = vunpack.c.l.b16 %v3308
    %v4296 = vunpack.c.h.b16 %v3308
    %v4297 = vunpack.c.l.b16 %v3309
    %v4298 = vunpack.c.h.b16 %v3309
    %v4299 = vunpack.c.l.b16 %v3310
    %v4300 = vunpack.c.h.b16 %v3310
    %v4301 = vunpack.c.l.b16 %v3311
    %v4302 = vunpack.c.h.b16 %v3311
    %v4303 = vunpack.c.l.b16 %v3312
    %v4304 = vunpack.c.h.b16 %v3312
    %v4305 = vunpack.c.l.b16 %v3313
    %v4306 = vunpack.c.h.b16 %v3313
    %v4307 = vunpack.c.l.b16 %v3314
    %v4308 = vunpack.c.h.b16 %v3314
    %v4309 = vunpack.c.l.b16 %v3315
    %v4310 = vunpack.c.h.b16 %v3315
    %v4311 = vunpack.c.l.b16 %v3316
    %v4312 = vunpack.c.h.b16 %v3316
    %v4313 = vunpack.c.l.b16 %v3317
    %v4314 = vunpack.c.h.b16 %v3317
    %v4315 = vunpack.c.l.b16 %v3318
    %v4316 = vunpack.c.h.b16 %v3318
    %v4317 = vunpack.c.l.b16 %v3319
    %v4318 = vunpack.c.h.b16 %v3319
    %v4319 = vunpack.c.l.b16 %v3320
    %v4320 = vunpack.c.h.b16 %v3320
    %v4321 = vunpack.c.l.b16 %v3321
    %v4322 = vunpack.c.h.b16 %v3321
    %v4323 = vunpack.c.l.b16 %v3322
    %v4324 = vunpack.c.h.b16 %v3322
    %v4325 = vunpack.c.l.b16 %v3323
    %v4326 = vunpack.c.h.b16 %v3323
    %v4327 = vunpack.c.l.b16 %v3324
    %v4328 = vunpack.c.h.b16 %v3324
    %v4329 = vunpack.c.l.b16 %v3325
    %v4330 = vunpack.c.h.b16 %v3325
    %v4331 = vunpack.c.l.b16 %v3326
    %v4332 = vunpack.c.h.b16 %v3326
    %v4333 = vunpack.c.l.b16 %v3327
    %v4334 = vunpack.c.h.b16 %v3327
    %v4335 = vunpack.c.l.b16 %v3328
    %v4336 = vunpack.c.h.b16 %v3328
    %v4337 = vunpack.c.l.b16 %v3329
    %v4338 = vunpack.c.h.b16 %v3329
    %v4339 = vunpack.c.l.b16 %v3330
    %v4340 = vunpack.c.h.b16 %v3330
    %v4341 = vunpack.c.l.b16 %v3331
    %v4342 = vunpack.c.h.b16 %v3331
    %v4343 = vunpack.c.l.b16 %v3332
    %v4344 = vunpack.c.h.b16 %v3332
    %v4345 = vunpack.c.l.b16 %v3333
    %v4346 = vunpack.c.h.b16 %v3333
    %v4347 = vunpack.c.l.b16 %v3334
    %v4348 = vunpack.c.h.b16 %v3334
    %v4349 = vunpack.c.l.b16 %v3335
    %v4350 = vunpack.c.h.b16 %v3335
    %v4351 = vunpack.c.l.b16 %v3336
    %v4352 = vunpack.c.h.b16 %v3336
    %v4353 = vunpack.c.l.b16 %v3337
    %v4354 = vunpack.c.h.b16 %v3337
    %v4355 = vunpack.c.l.b16 %v3338
    %v4356 = vunpack.c.h.b16 %v3338
    %v4357 = vunpack.c.l.b16 %v3339
    %v4358 = vunpack.c.h.b16 %v3339
    %v4359 = vunpack.c.l.b16 %v3340
    %v4360 = vunpack.c.h.b16 %v3340
    %v4361 = vunpack.c.l.b16 %v3341
    %v4362 = vunpack.c.h.b16 %v3341
    %v4363 = vunpack.c.l.b16 %v3342
    %v4364 = vunpack.c.h.b16 %v3342
    %v4365 = vunpack.c.l.b16 %v3343
    %v4366 = vunpack.c.h.b16 %v3343
    %v4367 = vunpack.c.l.b16 %v3344
    %v4368 = vunpack.c.h.b16 %v3344
    %v4369 = vunpack.c.l.b16 %v3345
    %v4370 = vunpack.c.h.b16 %v3345
    %v4371 = vunpack.c.l.b16 %v3346
    %v4372 = vunpack.c.h.b16 %v3346
    %v4373 = vunpack.c.l.b16 %v3347
    %v4374 = vunpack.c.h.b16 %v3347
    %v4375 = vunpack.c.l.b16 %v3348
    %v4376 = vunpack.c.h.b16 %v3348
    %v4377 = vlaneseq
    %v4378 = vand.u32 %v4377, 127
    %v4379 = vperm.slane %v3865, %v4378
    %v4380 = vadd.s32 %v4378, 4294967288
    %v4381 = vperm.slane %v3866, %v4380
    %vm4382 = vcmask 130112
    %v4383 = vsel %vm4382, %v4381, %v4379
    %v4384 = vadd.s32 %v4378, 4294967280
    %v4385 = vperm.slane %v3867, %v4384
    %vm4386 = vcmask 195712
    %v4387 = vsel %vm4386, %v4385, %v4383
    %v4388 = vadd.s32 %v4378, 4294967272
    %v4389 = vperm.slane %v3868, %v4388
    %vm4390 = vcmask 261312
    %v4391 = vsel %vm4390, %v4389, %v4387
    %v4392 = vadd.s32 %v4378, 4294967264
    %v4393 = vperm.slane %v3869, %v4392
    %vm4394 = vcmask 326912
    %v4395 = vsel %vm4394, %v4393, %v4391
    %v4396 = vadd.s32 %v4378, 4294967256
    %v4397 = vperm.slane %v3870, %v4396
    %vm4398 = vcmask 392512
    %v4399 = vsel %vm4398, %v4397, %v4395
    %v4400 = vadd.s32 %v4378, 4294967248
    %v4401 = vperm.slane %v3871, %v4400
    %vm4402 = vcmask 458112
    %v4403 = vsel %vm4402, %v4401, %v4399
    %v4404 = vadd.s32 %v4378, 4294967240
    %v4405 = vperm.slane %v3872, %v4404
    %vm4406 = vcmask 523712
    %v4407 = vsel %vm4406, %v4405, %v4403
    %v4408 = vadd.s32 %v4378, 4294967232
    %v4409 = vperm.slane %v3873, %v4408
    %vm4410 = vcmask 589312
    %v4411 = vsel %vm4410, %v4409, %v4407
    %v4412 = vadd.s32 %v4378, 4294967224
    %v4413 = vperm.slane %v3874, %v4412
    %vm4414 = vcmask 654912
    %v4415 = vsel %vm4414, %v4413, %v4411
    %v4416 = vadd.s32 %v4378, 4294967216
    %v4417 = vperm.slane %v3875, %v4416
    %vm4418 = vcmask 720512
    %v4419 = vsel %vm4418, %v4417, %v4415
    %v4420 = vadd.s32 %v4378, 4294967208
    %v4421 = vperm.slane %v3876, %v4420
    %vm4422 = vcmask 786112
    %v4423 = vsel %vm4422, %v4421, %v4419
    %v4424 = vadd.s32 %v4378, 4294967200
    %v4425 = vperm.slane %v3877, %v4424
    %vm4426 = vcmask 851712
    %v4427 = vsel %vm4426, %v4425, %v4423
    %v4428 = vadd.s32 %v4378, 4294967192
    %v4429 = vperm.slane %v3878, %v4428
    %vm4430 = vcmask 917312
    %v4431 = vsel %vm4430, %v4429, %v4427
    %v4432 = vadd.s32 %v4378, 4294967184
    %v4433 = vperm.slane %v3879, %v4432
    %vm4434 = vcmask 982912
    %v4435 = vsel %vm4434, %v4433, %v4431
    %v4436 = vadd.s32 %v4378, 4294967176
    %v4437 = vperm.slane %v3880, %v4436
    %vm4438 = vcmask 1048512
    %v4439 = vsel %vm4438, %v4437, %v4435
    %v4440 = vperm.slane %v3881, %v4378
    %v4441 = vperm.slane %v3882, %v4380
    %v4442 = vsel %vm4382, %v4441, %v4440
    %v4443 = vperm.slane %v3883, %v4384
    %v4444 = vsel %vm4386, %v4443, %v4442
    %v4445 = vperm.slane %v3884, %v4388
    %v4446 = vsel %vm4390, %v4445, %v4444
    %v4447 = vperm.slane %v3885, %v4392
    %v4448 = vsel %vm4394, %v4447, %v4446
    %v4449 = vperm.slane %v3886, %v4396
    %v4450 = vsel %vm4398, %v4449, %v4448
    %v4451 = vperm.slane %v3887, %v4400
    %v4452 = vsel %vm4402, %v4451, %v4450
    %v4453 = vperm.slane %v3888, %v4404
    %v4454 = vsel %vm4406, %v4453, %v4452
    %v4455 = vperm.slane %v3889, %v4408
    %v4456 = vsel %vm4410, %v4455, %v4454
    %v4457 = vperm.slane %v3890, %v4412
    %v4458 = vsel %vm4414, %v4457, %v4456
    %v4459 = vperm.slane %v3891, %v4416
    %v4460 = vsel %vm4418, %v4459, %v4458
    %v4461 = vperm.slane %v3892, %v4420
    %v4462 = vsel %vm4422, %v4461, %v4460
    %v4463 = vperm.slane %v3893, %v4424
    %v4464 = vsel %vm4426, %v4463, %v4462
    %v4465 = vperm.slane %v3894, %v4428
    %v4466 = vsel %vm4430, %v4465, %v4464
    %v4467 = vperm.slane %v3895, %v4432
    %v4468 = vsel %vm4434, %v4467, %v4466
    %v4469 = vperm.slane %v3896, %v4436
    %v4470 = vsel %vm4438, %v4469, %v4468
    %v4471 = vperm.slane %v3897, %v4378
    %v4472 = vperm.slane %v3898, %v4380
    %v4473 = vsel %vm4382, %v4472, %v4471
    %v4474 = vperm.slane %v3899, %v4384
    %v4475 = vsel %vm4386, %v4474, %v4473
    %v4476 = vperm.slane %v3900, %v4388
    %v4477 = vsel %vm4390, %v4476, %v4475
    %v4478 = vperm.slane %v3901, %v4392
    %v4479 = vsel %vm4394, %v4478, %v4477
    %v4480 = vperm.slane %v3902, %v4396
    %v4481 = vsel %vm4398, %v4480, %v4479
    %v4482 = vperm.slane %v3903, %v4400
    %v4483 = vsel %vm4402, %v4482, %v4481
    %v4484 = vperm.slane %v3904, %v4404
    %v4485 = vsel %vm4406, %v4484, %v4483
    %v4486 = vperm.slane %v3905, %v4408
    %v4487 = vsel %vm4410, %v4486, %v4485
    %v4488 = vperm.slane %v3906, %v4412
    %v4489 = vsel %vm4414, %v4488, %v4487
    %v4490 = vperm.slane %v3907, %v4416
    %v4491 = vsel %vm4418, %v4490, %v4489
    %v4492 = vperm.slane %v3908, %v4420
    %v4493 = vsel %vm4422, %v4492, %v4491
    %v4494 = vperm.slane %v3909, %v4424
    %v4495 = vsel %vm4426, %v4494, %v4493
    %v4496 = vperm.slane %v3910, %v4428
    %v4497 = vsel %vm4430, %v4496, %v4495
    %v4498 = vperm.slane %v3911, %v4432
    %v4499 = vsel %vm4434, %v4498, %v4497
    %v4500 = vperm.slane %v3912, %v4436
    %v4501 = vsel %vm4438, %v4500, %v4499
    %v4502 = vperm.slane %v3913, %v4378
    %v4503 = vperm.slane %v3914, %v4380
    %v4504 = vsel %vm4382, %v4503, %v4502
    %v4505 = vperm.slane %v3915, %v4384
    %v4506 = vsel %vm4386, %v4505, %v4504
    %v4507 = vperm.slane %v3916, %v4388
    %v4508 = vsel %vm4390, %v4507, %v4506
    %v4509 = vperm.slane %v3917, %v4392
    %v4510 = vsel %vm4394, %v4509, %v4508
    %v4511 = vperm.slane %v3918, %v4396
    %v4512 = vsel %vm4398, %v4511, %v4510
    %v4513 = vperm.slane %v3919, %v4400
    %v4514 = vsel %vm4402, %v4513, %v4512
    %v4515 = vperm.slane %v3920, %v4404
    %v4516 = vsel %vm4406, %v4515, %v4514
    %v4517 = vperm.slane %v3921, %v4408
    %v4518 = vsel %vm4410, %v4517, %v4516
    %v4519 = vperm.slane %v3922, %v4412
    %v4520 = vsel %vm4414, %v4519, %v4518
    %v4521 = vperm.slane %v3923, %v4416
    %v4522 = vsel %vm4418, %v4521, %v4520
    %v4523 = vperm.slane %v3924, %v4420
    %v4524 = vsel %vm4422, %v4523, %v4522
    %v4525 = vperm.slane %v3925, %v4424
    %v4526 = vsel %vm4426, %v4525, %v4524
    %v4527 = vperm.slane %v3926, %v4428
    %v4528 = vsel %vm4430, %v4527, %v4526
    %v4529 = vperm.slane %v3927, %v4432
    %v4530 = vsel %vm4434, %v4529, %v4528
    %v4531 = vperm.slane %v3928, %v4436
    %v4532 = vsel %vm4438, %v4531, %v4530
    %v4533 = vperm.slane %v3929, %v4378
    %v4534 = vperm.slane %v3930, %v4380
    %v4535 = vsel %vm4382, %v4534, %v4533
    %v4536 = vperm.slane %v3931, %v4384
    %v4537 = vsel %vm4386, %v4536, %v4535
    %v4538 = vperm.slane %v3932, %v4388
    %v4539 = vsel %vm4390, %v4538, %v4537
    %v4540 = vperm.slane %v3933, %v4392
    %v4541 = vsel %vm4394, %v4540, %v4539
    %v4542 = vperm.slane %v3934, %v4396
    %v4543 = vsel %vm4398, %v4542, %v4541
    %v4544 = vperm.slane %v3935, %v4400
    %v4545 = vsel %vm4402, %v4544, %v4543
    %v4546 = vperm.slane %v3936, %v4404
    %v4547 = vsel %vm4406, %v4546, %v4545
    %v4548 = vperm.slane %v3937, %v4408
    %v4549 = vsel %vm4410, %v4548, %v4547
    %v4550 = vperm.slane %v3938, %v4412
    %v4551 = vsel %vm4414, %v4550, %v4549
    %v4552 = vperm.slane %v3939, %v4416
    %v4553 = vsel %vm4418, %v4552, %v4551
    %v4554 = vperm.slane %v3940, %v4420
    %v4555 = vsel %vm4422, %v4554, %v4553
    %v4556 = vperm.slane %v3941, %v4424
    %v4557 = vsel %vm4426, %v4556, %v4555
    %v4558 = vperm.slane %v3942, %v4428
    %v4559 = vsel %vm4430, %v4558, %v4557
    %v4560 = vperm.slane %v3943, %v4432
    %v4561 = vsel %vm4434, %v4560, %v4559
    %v4562 = vperm.slane %v3944, %v4436
    %v4563 = vsel %vm4438, %v4562, %v4561
    %v4564 = vperm.slane %v3945, %v4378
    %v4565 = vperm.slane %v3946, %v4380
    %v4566 = vsel %vm4382, %v4565, %v4564
    %v4567 = vperm.slane %v3947, %v4384
    %v4568 = vsel %vm4386, %v4567, %v4566
    %v4569 = vperm.slane %v3948, %v4388
    %v4570 = vsel %vm4390, %v4569, %v4568
    %v4571 = vperm.slane %v3949, %v4392
    %v4572 = vsel %vm4394, %v4571, %v4570
    %v4573 = vperm.slane %v3950, %v4396
    %v4574 = vsel %vm4398, %v4573, %v4572
    %v4575 = vperm.slane %v3951, %v4400
    %v4576 = vsel %vm4402, %v4575, %v4574
    %v4577 = vperm.slane %v3952, %v4404
    %v4578 = vsel %vm4406, %v4577, %v4576
    %v4579 = vperm.slane %v3953, %v4408
    %v4580 = vsel %vm4410, %v4579, %v4578
    %v4581 = vperm.slane %v3954, %v4412
    %v4582 = vsel %vm4414, %v4581, %v4580
    %v4583 = vperm.slane %v3955, %v4416
    %v4584 = vsel %vm4418, %v4583, %v4582
    %v4585 = vperm.slane %v3956, %v4420
    %v4586 = vsel %vm4422, %v4585, %v4584
    %v4587 = vperm.slane %v3957, %v4424
    %v4588 = vsel %vm4426, %v4587, %v4586
    %v4589 = vperm.slane %v3958, %v4428
    %v4590 = vsel %vm4430, %v4589, %v4588
    %v4591 = vperm.slane %v3959, %v4432
    %v4592 = vsel %vm4434, %v4591, %v4590
    %v4593 = vperm.slane %v3960, %v4436
    %v4594 = vsel %vm4438, %v4593, %v4592
    %v4595 = vperm.slane %v3961, %v4378
    %v4596 = vperm.slane %v3962, %v4380
    %v4597 = vsel %vm4382, %v4596, %v4595
    %v4598 = vperm.slane %v3963, %v4384
    %v4599 = vsel %vm4386, %v4598, %v4597
    %v4600 = vperm.slane %v3964, %v4388
    %v4601 = vsel %vm4390, %v4600, %v4599
    %v4602 = vperm.slane %v3965, %v4392
    %v4603 = vsel %vm4394, %v4602, %v4601
    %v4604 = vperm.slane %v3966, %v4396
    %v4605 = vsel %vm4398, %v4604, %v4603
    %v4606 = vperm.slane %v3967, %v4400
    %v4607 = vsel %vm4402, %v4606, %v4605
    %v4608 = vperm.slane %v3968, %v4404
    %v4609 = vsel %vm4406, %v4608, %v4607
    %v4610 = vperm.slane %v3969, %v4408
    %v4611 = vsel %vm4410, %v4610, %v4609
    %v4612 = vperm.slane %v3970, %v4412
    %v4613 = vsel %vm4414, %v4612, %v4611
    %v4614 = vperm.slane %v3971, %v4416
    %v4615 = vsel %vm4418, %v4614, %v4613
    %v4616 = vperm.slane %v3972, %v4420
    %v4617 = vsel %vm4422, %v4616, %v4615
    %v4618 = vperm.slane %v3973, %v4424
    %v4619 = vsel %vm4426, %v4618, %v4617
    %v4620 = vperm.slane %v3974, %v4428
    %v4621 = vsel %vm4430, %v4620, %v4619
    %v4622 = vperm.slane %v3975, %v4432
    %v4623 = vsel %vm4434, %v4622, %v4621
    %v4624 = vperm.slane %v3976, %v4436
    %v4625 = vsel %vm4438, %v4624, %v4623
    %v4626 = vperm.slane %v3977, %v4378
    %v4627 = vperm.slane %v3978, %v4380
    %v4628 = vsel %vm4382, %v4627, %v4626
    %v4629 = vperm.slane %v3979, %v4384
    %v4630 = vsel %vm4386, %v4629, %v4628
    %v4631 = vperm.slane %v3980, %v4388
    %v4632 = vsel %vm4390, %v4631, %v4630
    %v4633 = vperm.slane %v3981, %v4392
    %v4634 = vsel %vm4394, %v4633, %v4632
    %v4635 = vperm.slane %v3982, %v4396
    %v4636 = vsel %vm4398, %v4635, %v4634
    %v4637 = vperm.slane %v3983, %v4400
    %v4638 = vsel %vm4402, %v4637, %v4636
    %v4639 = vperm.slane %v3984, %v4404
    %v4640 = vsel %vm4406, %v4639, %v4638
    %v4641 = vperm.slane %v3985, %v4408
    %v4642 = vsel %vm4410, %v4641, %v4640
    %v4643 = vperm.slane %v3986, %v4412
    %v4644 = vsel %vm4414, %v4643, %v4642
    %v4645 = vperm.slane %v3987, %v4416
    %v4646 = vsel %vm4418, %v4645, %v4644
    %v4647 = vperm.slane %v3988, %v4420
    %v4648 = vsel %vm4422, %v4647, %v4646
    %v4649 = vperm.slane %v3989, %v4424
    %v4650 = vsel %vm4426, %v4649, %v4648
    %v4651 = vperm.slane %v3990, %v4428
    %v4652 = vsel %vm4430, %v4651, %v4650
    %v4653 = vperm.slane %v3991, %v4432
    %v4654 = vsel %vm4434, %v4653, %v4652
    %v4655 = vperm.slane %v3992, %v4436
    %v4656 = vsel %vm4438, %v4655, %v4654
    %v4657 = vperm.slane %v3993, %v4378
    %v4658 = vperm.slane %v3994, %v4380
    %v4659 = vsel %vm4382, %v4658, %v4657
    %v4660 = vperm.slane %v3995, %v4384
    %v4661 = vsel %vm4386, %v4660, %v4659
    %v4662 = vperm.slane %v3996, %v4388
    %v4663 = vsel %vm4390, %v4662, %v4661
    %v4664 = vperm.slane %v3997, %v4392
    %v4665 = vsel %vm4394, %v4664, %v4663
    %v4666 = vperm.slane %v3998, %v4396
    %v4667 = vsel %vm4398, %v4666, %v4665
    %v4668 = vperm.slane %v3999, %v4400
    %v4669 = vsel %vm4402, %v4668, %v4667
    %v4670 = vperm.slane %v4000, %v4404
    %v4671 = vsel %vm4406, %v4670, %v4669
    %v4672 = vperm.slane %v4001, %v4408
    %v4673 = vsel %vm4410, %v4672, %v4671
    %v4674 = vperm.slane %v4002, %v4412
    %v4675 = vsel %vm4414, %v4674, %v4673
    %v4676 = vperm.slane %v4003, %v4416
    %v4677 = vsel %vm4418, %v4676, %v4675
    %v4678 = vperm.slane %v4004, %v4420
    %v4679 = vsel %vm4422, %v4678, %v4677
    %v4680 = vperm.slane %v4005, %v4424
    %v4681 = vsel %vm4426, %v4680, %v4679
    %v4682 = vperm.slane %v4006, %v4428
    %v4683 = vsel %vm4430, %v4682, %v4681
    %v4684 = vperm.slane %v4007, %v4432
    %v4685 = vsel %vm4434, %v4684, %v4683
    %v4686 = vperm.slane %v4008, %v4436
    %v4687 = vsel %vm4438, %v4686, %v4685
    %v4688 = vperm.slane %v4009, %v4378
    %v4689 = vperm.slane %v4010, %v4380
    %v4690 = vsel %vm4382, %v4689, %v4688
    %v4691 = vperm.slane %v4011, %v4384
    %v4692 = vsel %vm4386, %v4691, %v4690
    %v4693 = vperm.slane %v4012, %v4388
    %v4694 = vsel %vm4390, %v4693, %v4692
    %v4695 = vperm.slane %v4013, %v4392
    %v4696 = vsel %vm4394, %v4695, %v4694
    %v4697 = vperm.slane %v4014, %v4396
    %v4698 = vsel %vm4398, %v4697, %v4696
    %v4699 = vperm.slane %v4015, %v4400
    %v4700 = vsel %vm4402, %v4699, %v4698
    %v4701 = vperm.slane %v4016, %v4404
    %v4702 = vsel %vm4406, %v4701, %v4700
    %v4703 = vperm.slane %v4017, %v4408
    %v4704 = vsel %vm4410, %v4703, %v4702
    %v4705 = vperm.slane %v4018, %v4412
    %v4706 = vsel %vm4414, %v4705, %v4704
    %v4707 = vperm.slane %v4019, %v4416
    %v4708 = vsel %vm4418, %v4707, %v4706
    %v4709 = vperm.slane %v4020, %v4420
    %v4710 = vsel %vm4422, %v4709, %v4708
    %v4711 = vperm.slane %v4021, %v4424
    %v4712 = vsel %vm4426, %v4711, %v4710
    %v4713 = vperm.slane %v4022, %v4428
    %v4714 = vsel %vm4430, %v4713, %v4712
    %v4715 = vperm.slane %v4023, %v4432
    %v4716 = vsel %vm4434, %v4715, %v4714
    %v4717 = vperm.slane %v4024, %v4436
    %v4718 = vsel %vm4438, %v4717, %v4716
    %v4719 = vperm.slane %v4025, %v4378
    %v4720 = vperm.slane %v4026, %v4380
    %v4721 = vsel %vm4382, %v4720, %v4719
    %v4722 = vperm.slane %v4027, %v4384
    %v4723 = vsel %vm4386, %v4722, %v4721
    %v4724 = vperm.slane %v4028, %v4388
    %v4725 = vsel %vm4390, %v4724, %v4723
    %v4726 = vperm.slane %v4029, %v4392
    %v4727 = vsel %vm4394, %v4726, %v4725
    %v4728 = vperm.slane %v4030, %v4396
    %v4729 = vsel %vm4398, %v4728, %v4727
    %v4730 = vperm.slane %v4031, %v4400
    %v4731 = vsel %vm4402, %v4730, %v4729
    %v4732 = vperm.slane %v4032, %v4404
    %v4733 = vsel %vm4406, %v4732, %v4731
    %v4734 = vperm.slane %v4033, %v4408
    %v4735 = vsel %vm4410, %v4734, %v4733
    %v4736 = vperm.slane %v4034, %v4412
    %v4737 = vsel %vm4414, %v4736, %v4735
    %v4738 = vperm.slane %v4035, %v4416
    %v4739 = vsel %vm4418, %v4738, %v4737
    %v4740 = vperm.slane %v4036, %v4420
    %v4741 = vsel %vm4422, %v4740, %v4739
    %v4742 = vperm.slane %v4037, %v4424
    %v4743 = vsel %vm4426, %v4742, %v4741
    %v4744 = vperm.slane %v4038, %v4428
    %v4745 = vsel %vm4430, %v4744, %v4743
    %v4746 = vperm.slane %v4039, %v4432
    %v4747 = vsel %vm4434, %v4746, %v4745
    %v4748 = vperm.slane %v4040, %v4436
    %v4749 = vsel %vm4438, %v4748, %v4747
    %v4750 = vperm.slane %v4041, %v4378
    %v4751 = vperm.slane %v4042, %v4380
    %v4752 = vsel %vm4382, %v4751, %v4750
    %v4753 = vperm.slane %v4043, %v4384
    %v4754 = vsel %vm4386, %v4753, %v4752
    %v4755 = vperm.slane %v4044, %v4388
    %v4756 = vsel %vm4390, %v4755, %v4754
    %v4757 = vperm.slane %v4045, %v4392
    %v4758 = vsel %vm4394, %v4757, %v4756
    %v4759 = vperm.slane %v4046, %v4396
    %v4760 = vsel %vm4398, %v4759, %v4758
    %v4761 = vperm.slane %v4047, %v4400
    %v4762 = vsel %vm4402, %v4761, %v4760
    %v4763 = vperm.slane %v4048, %v4404
    %v4764 = vsel %vm4406, %v4763, %v4762
    %v4765 = vperm.slane %v4049, %v4408
    %v4766 = vsel %vm4410, %v4765, %v4764
    %v4767 = vperm.slane %v4050, %v4412
    %v4768 = vsel %vm4414, %v4767, %v4766
    %v4769 = vperm.slane %v4051, %v4416
    %v4770 = vsel %vm4418, %v4769, %v4768
    %v4771 = vperm.slane %v4052, %v4420
    %v4772 = vsel %vm4422, %v4771, %v4770
    %v4773 = vperm.slane %v4053, %v4424
    %v4774 = vsel %vm4426, %v4773, %v4772
    %v4775 = vperm.slane %v4054, %v4428
    %v4776 = vsel %vm4430, %v4775, %v4774
    %v4777 = vperm.slane %v4055, %v4432
    %v4778 = vsel %vm4434, %v4777, %v4776
    %v4779 = vperm.slane %v4056, %v4436
    %v4780 = vsel %vm4438, %v4779, %v4778
    %v4781 = vperm.slane %v4057, %v4378
    %v4782 = vperm.slane %v4058, %v4380
    %v4783 = vsel %vm4382, %v4782, %v4781
    %v4784 = vperm.slane %v4059, %v4384
    %v4785 = vsel %vm4386, %v4784, %v4783
    %v4786 = vperm.slane %v4060, %v4388
    %v4787 = vsel %vm4390, %v4786, %v4785
    %v4788 = vperm.slane %v4061, %v4392
    %v4789 = vsel %vm4394, %v4788, %v4787
    %v4790 = vperm.slane %v4062, %v4396
    %v4791 = vsel %vm4398, %v4790, %v4789
    %v4792 = vperm.slane %v4063, %v4400
    %v4793 = vsel %vm4402, %v4792, %v4791
    %v4794 = vperm.slane %v4064, %v4404
    %v4795 = vsel %vm4406, %v4794, %v4793
    %v4796 = vperm.slane %v4065, %v4408
    %v4797 = vsel %vm4410, %v4796, %v4795
    %v4798 = vperm.slane %v4066, %v4412
    %v4799 = vsel %vm4414, %v4798, %v4797
    %v4800 = vperm.slane %v4067, %v4416
    %v4801 = vsel %vm4418, %v4800, %v4799
    %v4802 = vperm.slane %v4068, %v4420
    %v4803 = vsel %vm4422, %v4802, %v4801
    %v4804 = vperm.slane %v4069, %v4424
    %v4805 = vsel %vm4426, %v4804, %v4803
    %v4806 = vperm.slane %v4070, %v4428
    %v4807 = vsel %vm4430, %v4806, %v4805
    %v4808 = vperm.slane %v4071, %v4432
    %v4809 = vsel %vm4434, %v4808, %v4807
    %v4810 = vperm.slane %v4072, %v4436
    %v4811 = vsel %vm4438, %v4810, %v4809
    %v4812 = vperm.slane %v4073, %v4378
    %v4813 = vperm.slane %v4074, %v4380
    %v4814 = vsel %vm4382, %v4813, %v4812
    %v4815 = vperm.slane %v4075, %v4384
    %v4816 = vsel %vm4386, %v4815, %v4814
    %v4817 = vperm.slane %v4076, %v4388
    %v4818 = vsel %vm4390, %v4817, %v4816
    %v4819 = vperm.slane %v4077, %v4392
    %v4820 = vsel %vm4394, %v4819, %v4818
    %v4821 = vperm.slane %v4078, %v4396
    %v4822 = vsel %vm4398, %v4821, %v4820
    %v4823 = vperm.slane %v4079, %v4400
    %v4824 = vsel %vm4402, %v4823, %v4822
    %v4825 = vperm.slane %v4080, %v4404
    %v4826 = vsel %vm4406, %v4825, %v4824
    %v4827 = vperm.slane %v4081, %v4408
    %v4828 = vsel %vm4410, %v4827, %v4826
    %v4829 = vperm.slane %v4082, %v4412
    %v4830 = vsel %vm4414, %v4829, %v4828
    %v4831 = vperm.slane %v4083, %v4416
    %v4832 = vsel %vm4418, %v4831, %v4830
    %v4833 = vperm.slane %v4084, %v4420
    %v4834 = vsel %vm4422, %v4833, %v4832
    %v4835 = vperm.slane %v4085, %v4424
    %v4836 = vsel %vm4426, %v4835, %v4834
    %v4837 = vperm.slane %v4086, %v4428
    %v4838 = vsel %vm4430, %v4837, %v4836
    %v4839 = vperm.slane %v4087, %v4432
    %v4840 = vsel %vm4434, %v4839, %v4838
    %v4841 = vperm.slane %v4088, %v4436
    %v4842 = vsel %vm4438, %v4841, %v4840
    %v4843 = vperm.slane %v4089, %v4378
    %v4844 = vperm.slane %v4090, %v4380
    %v4845 = vsel %vm4382, %v4844, %v4843
    %v4846 = vperm.slane %v4091, %v4384
    %v4847 = vsel %vm4386, %v4846, %v4845
    %v4848 = vperm.slane %v4092, %v4388
    %v4849 = vsel %vm4390, %v4848, %v4847
    %v4850 = vperm.slane %v4093, %v4392
    %v4851 = vsel %vm4394, %v4850, %v4849
    %v4852 = vperm.slane %v4094, %v4396
    %v4853 = vsel %vm4398, %v4852, %v4851
    %v4854 = vperm.slane %v4095, %v4400
    %v4855 = vsel %vm4402, %v4854, %v4853
    %v4856 = vperm.slane %v4096, %v4404
    %v4857 = vsel %vm4406, %v4856, %v4855
    %v4858 = vperm.slane %v4097, %v4408
    %v4859 = vsel %vm4410, %v4858, %v4857
    %v4860 = vperm.slane %v4098, %v4412
    %v4861 = vsel %vm4414, %v4860, %v4859
    %v4862 = vperm.slane %v4099, %v4416
    %v4863 = vsel %vm4418, %v4862, %v4861
    %v4864 = vperm.slane %v4100, %v4420
    %v4865 = vsel %vm4422, %v4864, %v4863
    %v4866 = vperm.slane %v4101, %v4424
    %v4867 = vsel %vm4426, %v4866, %v4865
    %v4868 = vperm.slane %v4102, %v4428
    %v4869 = vsel %vm4430, %v4868, %v4867
    %v4870 = vperm.slane %v4103, %v4432
    %v4871 = vsel %vm4434, %v4870, %v4869
    %v4872 = vperm.slane %v4104, %v4436
    %v4873 = vsel %vm4438, %v4872, %v4871
    %v4874 = vperm.slane %v4105, %v4378
    %v4875 = vperm.slane %v4106, %v4380
    %v4876 = vsel %vm4382, %v4875, %v4874
    %v4877 = vperm.slane %v4107, %v4384
    %v4878 = vsel %vm4386, %v4877, %v4876
    %v4879 = vperm.slane %v4108, %v4388
    %v4880 = vsel %vm4390, %v4879, %v4878
    %v4881 = vperm.slane %v4109, %v4392
    %v4882 = vsel %vm4394, %v4881, %v4880
    %v4883 = vperm.slane %v4110, %v4396
    %v4884 = vsel %vm4398, %v4883, %v4882
    %v4885 = vperm.slane %v4111, %v4400
    %v4886 = vsel %vm4402, %v4885, %v4884
    %v4887 = vperm.slane %v4112, %v4404
    %v4888 = vsel %vm4406, %v4887, %v4886
    %v4889 = vperm.slane %v4113, %v4408
    %v4890 = vsel %vm4410, %v4889, %v4888
    %v4891 = vperm.slane %v4114, %v4412
    %v4892 = vsel %vm4414, %v4891, %v4890
    %v4893 = vperm.slane %v4115, %v4416
    %v4894 = vsel %vm4418, %v4893, %v4892
    %v4895 = vperm.slane %v4116, %v4420
    %v4896 = vsel %vm4422, %v4895, %v4894
    %v4897 = vperm.slane %v4117, %v4424
    %v4898 = vsel %vm4426, %v4897, %v4896
    %v4899 = vperm.slane %v4118, %v4428
    %v4900 = vsel %vm4430, %v4899, %v4898
    %v4901 = vperm.slane %v4119, %v4432
    %v4902 = vsel %vm4434, %v4901, %v4900
    %v4903 = vperm.slane %v4120, %v4436
    %v4904 = vsel %vm4438, %v4903, %v4902
    %v4905 = vperm.slane %v4121, %v4378
    %v4906 = vperm.slane %v4122, %v4380
    %v4907 = vsel %vm4382, %v4906, %v4905
    %v4908 = vperm.slane %v4123, %v4384
    %v4909 = vsel %vm4386, %v4908, %v4907
    %v4910 = vperm.slane %v4124, %v4388
    %v4911 = vsel %vm4390, %v4910, %v4909
    %v4912 = vperm.slane %v4125, %v4392
    %v4913 = vsel %vm4394, %v4912, %v4911
    %v4914 = vperm.slane %v4126, %v4396
    %v4915 = vsel %vm4398, %v4914, %v4913
    %v4916 = vperm.slane %v4127, %v4400
    %v4917 = vsel %vm4402, %v4916, %v4915
    %v4918 = vperm.slane %v4128, %v4404
    %v4919 = vsel %vm4406, %v4918, %v4917
    %v4920 = vperm.slane %v4129, %v4408
    %v4921 = vsel %vm4410, %v4920, %v4919
    %v4922 = vperm.slane %v4130, %v4412
    %v4923 = vsel %vm4414, %v4922, %v4921
    %v4924 = vperm.slane %v4131, %v4416
    %v4925 = vsel %vm4418, %v4924, %v4923
    %v4926 = vperm.slane %v4132, %v4420
    %v4927 = vsel %vm4422, %v4926, %v4925
    %v4928 = vperm.slane %v4133, %v4424
    %v4929 = vsel %vm4426, %v4928, %v4927
    %v4930 = vperm.slane %v4134, %v4428
    %v4931 = vsel %vm4430, %v4930, %v4929
    %v4932 = vperm.slane %v4135, %v4432
    %v4933 = vsel %vm4434, %v4932, %v4931
    %v4934 = vperm.slane %v4136, %v4436
    %v4935 = vsel %vm4438, %v4934, %v4933
    %v4936 = vperm.slane %v4137, %v4378
    %v4937 = vperm.slane %v4138, %v4380
    %v4938 = vsel %vm4382, %v4937, %v4936
    %v4939 = vperm.slane %v4139, %v4384
    %v4940 = vsel %vm4386, %v4939, %v4938
    %v4941 = vperm.slane %v4140, %v4388
    %v4942 = vsel %vm4390, %v4941, %v4940
    %v4943 = vperm.slane %v4141, %v4392
    %v4944 = vsel %vm4394, %v4943, %v4942
    %v4945 = vperm.slane %v4142, %v4396
    %v4946 = vsel %vm4398, %v4945, %v4944
    %v4947 = vperm.slane %v4143, %v4400
    %v4948 = vsel %vm4402, %v4947, %v4946
    %v4949 = vperm.slane %v4144, %v4404
    %v4950 = vsel %vm4406, %v4949, %v4948
    %v4951 = vperm.slane %v4145, %v4408
    %v4952 = vsel %vm4410, %v4951, %v4950
    %v4953 = vperm.slane %v4146, %v4412
    %v4954 = vsel %vm4414, %v4953, %v4952
    %v4955 = vperm.slane %v4147, %v4416
    %v4956 = vsel %vm4418, %v4955, %v4954
    %v4957 = vperm.slane %v4148, %v4420
    %v4958 = vsel %vm4422, %v4957, %v4956
    %v4959 = vperm.slane %v4149, %v4424
    %v4960 = vsel %vm4426, %v4959, %v4958
    %v4961 = vperm.slane %v4150, %v4428
    %v4962 = vsel %vm4430, %v4961, %v4960
    %v4963 = vperm.slane %v4151, %v4432
    %v4964 = vsel %vm4434, %v4963, %v4962
    %v4965 = vperm.slane %v4152, %v4436
    %v4966 = vsel %vm4438, %v4965, %v4964
    %v4967 = vperm.slane %v4153, %v4378
    %v4968 = vperm.slane %v4154, %v4380
    %v4969 = vsel %vm4382, %v4968, %v4967
    %v4970 = vperm.slane %v4155, %v4384
    %v4971 = vsel %vm4386, %v4970, %v4969
    %v4972 = vperm.slane %v4156, %v4388
    %v4973 = vsel %vm4390, %v4972, %v4971
    %v4974 = vperm.slane %v4157, %v4392
    %v4975 = vsel %vm4394, %v4974, %v4973
    %v4976 = vperm.slane %v4158, %v4396
    %v4977 = vsel %vm4398, %v4976, %v4975
    %v4978 = vperm.slane %v4159, %v4400
    %v4979 = vsel %vm4402, %v4978, %v4977
    %v4980 = vperm.slane %v4160, %v4404
    %v4981 = vsel %vm4406, %v4980, %v4979
    %v4982 = vperm.slane %v4161, %v4408
    %v4983 = vsel %vm4410, %v4982, %v4981
    %v4984 = vperm.slane %v4162, %v4412
    %v4985 = vsel %vm4414, %v4984, %v4983
    %v4986 = vperm.slane %v4163, %v4416
    %v4987 = vsel %vm4418, %v4986, %v4985
    %v4988 = vperm.slane %v4164, %v4420
    %v4989 = vsel %vm4422, %v4988, %v4987
    %v4990 = vperm.slane %v4165, %v4424
    %v4991 = vsel %vm4426, %v4990, %v4989
    %v4992 = vperm.slane %v4166, %v4428
    %v4993 = vsel %vm4430, %v4992, %v4991
    %v4994 = vperm.slane %v4167, %v4432
    %v4995 = vsel %vm4434, %v4994, %v4993
    %v4996 = vperm.slane %v4168, %v4436
    %v4997 = vsel %vm4438, %v4996, %v4995
    %v4998 = vperm.slane %v4169, %v4378
    %v4999 = vperm.slane %v4170, %v4380
    %v5000 = vsel %vm4382, %v4999, %v4998
    %v5001 = vperm.slane %v4171, %v4384
    %v5002 = vsel %vm4386, %v5001, %v5000
    %v5003 = vperm.slane %v4172, %v4388
    %v5004 = vsel %vm4390, %v5003, %v5002
    %v5005 = vperm.slane %v4173, %v4392
    %v5006 = vsel %vm4394, %v5005, %v5004
    %v5007 = vperm.slane %v4174, %v4396
    %v5008 = vsel %vm4398, %v5007, %v5006
    %v5009 = vperm.slane %v4175, %v4400
    %v5010 = vsel %vm4402, %v5009, %v5008
    %v5011 = vperm.slane %v4176, %v4404
    %v5012 = vsel %vm4406, %v5011, %v5010
    %v5013 = vperm.slane %v4177, %v4408
    %v5014 = vsel %vm4410, %v5013, %v5012
    %v5015 = vperm.slane %v4178, %v4412
    %v5016 = vsel %vm4414, %v5015, %v5014
    %v5017 = vperm.slane %v4179, %v4416
    %v5018 = vsel %vm4418, %v5017, %v5016
    %v5019 = vperm.slane %v4180, %v4420
    %v5020 = vsel %vm4422, %v5019, %v5018
    %v5021 = vperm.slane %v4181, %v4424
    %v5022 = vsel %vm4426, %v5021, %v5020
    %v5023 = vperm.slane %v4182, %v4428
    %v5024 = vsel %vm4430, %v5023, %v5022
    %v5025 = vperm.slane %v4183, %v4432
    %v5026 = vsel %vm4434, %v5025, %v5024
    %v5027 = vperm.slane %v4184, %v4436
    %v5028 = vsel %vm4438, %v5027, %v5026
    %v5029 = vperm.slane %v4185, %v4378
    %v5030 = vperm.slane %v4186, %v4380
    %v5031 = vsel %vm4382, %v5030, %v5029
    %v5032 = vperm.slane %v4187, %v4384
    %v5033 = vsel %vm4386, %v5032, %v5031
    %v5034 = vperm.slane %v4188, %v4388
    %v5035 = vsel %vm4390, %v5034, %v5033
    %v5036 = vperm.slane %v4189, %v4392
    %v5037 = vsel %vm4394, %v5036, %v5035
    %v5038 = vperm.slane %v4190, %v4396
    %v5039 = vsel %vm4398, %v5038, %v5037
    %v5040 = vperm.slane %v4191, %v4400
    %v5041 = vsel %vm4402, %v5040, %v5039
    %v5042 = vperm.slane %v4192, %v4404
    %v5043 = vsel %vm4406, %v5042, %v5041
    %v5044 = vperm.slane %v4193, %v4408
    %v5045 = vsel %vm4410, %v5044, %v5043
    %v5046 = vperm.slane %v4194, %v4412
    %v5047 = vsel %vm4414, %v5046, %v5045
    %v5048 = vperm.slane %v4195, %v4416
    %v5049 = vsel %vm4418, %v5048, %v5047
    %v5050 = vperm.slane %v4196, %v4420
    %v5051 = vsel %vm4422, %v5050, %v5049
    %v5052 = vperm.slane %v4197, %v4424
    %v5053 = vsel %vm4426, %v5052, %v5051
    %v5054 = vperm.slane %v4198, %v4428
    %v5055 = vsel %vm4430, %v5054, %v5053
    %v5056 = vperm.slane %v4199, %v4432
    %v5057 = vsel %vm4434, %v5056, %v5055
    %v5058 = vperm.slane %v4200, %v4436
    %v5059 = vsel %vm4438, %v5058, %v5057
    %v5060 = vperm.slane %v4201, %v4378
    %v5061 = vperm.slane %v4202, %v4380
    %v5062 = vsel %vm4382, %v5061, %v5060
    %v5063 = vperm.slane %v4203, %v4384
    %v5064 = vsel %vm4386, %v5063, %v5062
    %v5065 = vperm.slane %v4204, %v4388
    %v5066 = vsel %vm4390, %v5065, %v5064
    %v5067 = vperm.slane %v4205, %v4392
    %v5068 = vsel %vm4394, %v5067, %v5066
    %v5069 = vperm.slane %v4206, %v4396
    %v5070 = vsel %vm4398, %v5069, %v5068
    %v5071 = vperm.slane %v4207, %v4400
    %v5072 = vsel %vm4402, %v5071, %v5070
    %v5073 = vperm.slane %v4208, %v4404
    %v5074 = vsel %vm4406, %v5073, %v5072
    %v5075 = vperm.slane %v4209, %v4408
    %v5076 = vsel %vm4410, %v5075, %v5074
    %v5077 = vperm.slane %v4210, %v4412
    %v5078 = vsel %vm4414, %v5077, %v5076
    %v5079 = vperm.slane %v4211, %v4416
    %v5080 = vsel %vm4418, %v5079, %v5078
    %v5081 = vperm.slane %v4212, %v4420
    %v5082 = vsel %vm4422, %v5081, %v5080
    %v5083 = vperm.slane %v4213, %v4424
    %v5084 = vsel %vm4426, %v5083, %v5082
    %v5085 = vperm.slane %v4214, %v4428
    %v5086 = vsel %vm4430, %v5085, %v5084
    %v5087 = vperm.slane %v4215, %v4432
    %v5088 = vsel %vm4434, %v5087, %v5086
    %v5089 = vperm.slane %v4216, %v4436
    %v5090 = vsel %vm4438, %v5089, %v5088
    %v5091 = vperm.slane %v4217, %v4378
    %v5092 = vperm.slane %v4218, %v4380
    %v5093 = vsel %vm4382, %v5092, %v5091
    %v5094 = vperm.slane %v4219, %v4384
    %v5095 = vsel %vm4386, %v5094, %v5093
    %v5096 = vperm.slane %v4220, %v4388
    %v5097 = vsel %vm4390, %v5096, %v5095
    %v5098 = vperm.slane %v4221, %v4392
    %v5099 = vsel %vm4394, %v5098, %v5097
    %v5100 = vperm.slane %v4222, %v4396
    %v5101 = vsel %vm4398, %v5100, %v5099
    %v5102 = vperm.slane %v4223, %v4400
    %v5103 = vsel %vm4402, %v5102, %v5101
    %v5104 = vperm.slane %v4224, %v4404
    %v5105 = vsel %vm4406, %v5104, %v5103
    %v5106 = vperm.slane %v4225, %v4408
    %v5107 = vsel %vm4410, %v5106, %v5105
    %v5108 = vperm.slane %v4226, %v4412
    %v5109 = vsel %vm4414, %v5108, %v5107
    %v5110 = vperm.slane %v4227, %v4416
    %v5111 = vsel %vm4418, %v5110, %v5109
    %v5112 = vperm.slane %v4228, %v4420
    %v5113 = vsel %vm4422, %v5112, %v5111
    %v5114 = vperm.slane %v4229, %v4424
    %v5115 = vsel %vm4426, %v5114, %v5113
    %v5116 = vperm.slane %v4230, %v4428
    %v5117 = vsel %vm4430, %v5116, %v5115
    %v5118 = vperm.slane %v4231, %v4432
    %v5119 = vsel %vm4434, %v5118, %v5117
    %v5120 = vperm.slane %v4232, %v4436
    %v5121 = vsel %vm4438, %v5120, %v5119
    %v5122 = vperm.slane %v4233, %v4378
    %v5123 = vperm.slane %v4234, %v4380
    %v5124 = vsel %vm4382, %v5123, %v5122
    %v5125 = vperm.slane %v4235, %v4384
    %v5126 = vsel %vm4386, %v5125, %v5124
    %v5127 = vperm.slane %v4236, %v4388
    %v5128 = vsel %vm4390, %v5127, %v5126
    %v5129 = vperm.slane %v4237, %v4392
    %v5130 = vsel %vm4394, %v5129, %v5128
    %v5131 = vperm.slane %v4238, %v4396
    %v5132 = vsel %vm4398, %v5131, %v5130
    %v5133 = vperm.slane %v4239, %v4400
    %v5134 = vsel %vm4402, %v5133, %v5132
    %v5135 = vperm.slane %v4240, %v4404
    %v5136 = vsel %vm4406, %v5135, %v5134
    %v5137 = vperm.slane %v4241, %v4408
    %v5138 = vsel %vm4410, %v5137, %v5136
    %v5139 = vperm.slane %v4242, %v4412
    %v5140 = vsel %vm4414, %v5139, %v5138
    %v5141 = vperm.slane %v4243, %v4416
    %v5142 = vsel %vm4418, %v5141, %v5140
    %v5143 = vperm.slane %v4244, %v4420
    %v5144 = vsel %vm4422, %v5143, %v5142
    %v5145 = vperm.slane %v4245, %v4424
    %v5146 = vsel %vm4426, %v5145, %v5144
    %v5147 = vperm.slane %v4246, %v4428
    %v5148 = vsel %vm4430, %v5147, %v5146
    %v5149 = vperm.slane %v4247, %v4432
    %v5150 = vsel %vm4434, %v5149, %v5148
    %v5151 = vperm.slane %v4248, %v4436
    %v5152 = vsel %vm4438, %v5151, %v5150
    %v5153 = vperm.slane %v4249, %v4378
    %v5154 = vperm.slane %v4250, %v4380
    %v5155 = vsel %vm4382, %v5154, %v5153
    %v5156 = vperm.slane %v4251, %v4384
    %v5157 = vsel %vm4386, %v5156, %v5155
    %v5158 = vperm.slane %v4252, %v4388
    %v5159 = vsel %vm4390, %v5158, %v5157
    %v5160 = vperm.slane %v4253, %v4392
    %v5161 = vsel %vm4394, %v5160, %v5159
    %v5162 = vperm.slane %v4254, %v4396
    %v5163 = vsel %vm4398, %v5162, %v5161
    %v5164 = vperm.slane %v4255, %v4400
    %v5165 = vsel %vm4402, %v5164, %v5163
    %v5166 = vperm.slane %v4256, %v4404
    %v5167 = vsel %vm4406, %v5166, %v5165
    %v5168 = vperm.slane %v4257, %v4408
    %v5169 = vsel %vm4410, %v5168, %v5167
    %v5170 = vperm.slane %v4258, %v4412
    %v5171 = vsel %vm4414, %v5170, %v5169
    %v5172 = vperm.slane %v4259, %v4416
    %v5173 = vsel %vm4418, %v5172, %v5171
    %v5174 = vperm.slane %v4260, %v4420
    %v5175 = vsel %vm4422, %v5174, %v5173
    %v5176 = vperm.slane %v4261, %v4424
    %v5177 = vsel %vm4426, %v5176, %v5175
    %v5178 = vperm.slane %v4262, %v4428
    %v5179 = vsel %vm4430, %v5178, %v5177
    %v5180 = vperm.slane %v4263, %v4432
    %v5181 = vsel %vm4434, %v5180, %v5179
    %v5182 = vperm.slane %v4264, %v4436
    %v5183 = vsel %vm4438, %v5182, %v5181
    %v5184 = vperm.slane %v4265, %v4378
    %v5185 = vperm.slane %v4266, %v4380
    %v5186 = vsel %vm4382, %v5185, %v5184
    %v5187 = vperm.slane %v4267, %v4384
    %v5188 = vsel %vm4386, %v5187, %v5186
    %v5189 = vperm.slane %v4268, %v4388
    %v5190 = vsel %vm4390, %v5189, %v5188
    %v5191 = vperm.slane %v4269, %v4392
    %v5192 = vsel %vm4394, %v5191, %v5190
    %v5193 = vperm.slane %v4270, %v4396
    %v5194 = vsel %vm4398, %v5193, %v5192
    %v5195 = vperm.slane %v4271, %v4400
    %v5196 = vsel %vm4402, %v5195, %v5194
    %v5197 = vperm.slane %v4272, %v4404
    %v5198 = vsel %vm4406, %v5197, %v5196
    %v5199 = vperm.slane %v4273, %v4408
    %v5200 = vsel %vm4410, %v5199, %v5198
    %v5201 = vperm.slane %v4274, %v4412
    %v5202 = vsel %vm4414, %v5201, %v5200
    %v5203 = vperm.slane %v4275, %v4416
    %v5204 = vsel %vm4418, %v5203, %v5202
    %v5205 = vperm.slane %v4276, %v4420
    %v5206 = vsel %vm4422, %v5205, %v5204
    %v5207 = vperm.slane %v4277, %v4424
    %v5208 = vsel %vm4426, %v5207, %v5206
    %v5209 = vperm.slane %v4278, %v4428
    %v5210 = vsel %vm4430, %v5209, %v5208
    %v5211 = vperm.slane %v4279, %v4432
    %v5212 = vsel %vm4434, %v5211, %v5210
    %v5213 = vperm.slane %v4280, %v4436
    %v5214 = vsel %vm4438, %v5213, %v5212
    %v5215 = vperm.slane %v4281, %v4378
    %v5216 = vperm.slane %v4282, %v4380
    %v5217 = vsel %vm4382, %v5216, %v5215
    %v5218 = vperm.slane %v4283, %v4384
    %v5219 = vsel %vm4386, %v5218, %v5217
    %v5220 = vperm.slane %v4284, %v4388
    %v5221 = vsel %vm4390, %v5220, %v5219
    %v5222 = vperm.slane %v4285, %v4392
    %v5223 = vsel %vm4394, %v5222, %v5221
    %v5224 = vperm.slane %v4286, %v4396
    %v5225 = vsel %vm4398, %v5224, %v5223
    %v5226 = vperm.slane %v4287, %v4400
    %v5227 = vsel %vm4402, %v5226, %v5225
    %v5228 = vperm.slane %v4288, %v4404
    %v5229 = vsel %vm4406, %v5228, %v5227
    %v5230 = vperm.slane %v4289, %v4408
    %v5231 = vsel %vm4410, %v5230, %v5229
    %v5232 = vperm.slane %v4290, %v4412
    %v5233 = vsel %vm4414, %v5232, %v5231
    %v5234 = vperm.slane %v4291, %v4416
    %v5235 = vsel %vm4418, %v5234, %v5233
    %v5236 = vperm.slane %v4292, %v4420
    %v5237 = vsel %vm4422, %v5236, %v5235
    %v5238 = vperm.slane %v4293, %v4424
    %v5239 = vsel %vm4426, %v5238, %v5237
    %v5240 = vperm.slane %v4294, %v4428
    %v5241 = vsel %vm4430, %v5240, %v5239
    %v5242 = vperm.slane %v4295, %v4432
    %v5243 = vsel %vm4434, %v5242, %v5241
    %v5244 = vperm.slane %v4296, %v4436
    %v5245 = vsel %vm4438, %v5244, %v5243
    %v5246 = vperm.slane %v4297, %v4378
    %v5247 = vperm.slane %v4298, %v4380
    %v5248 = vsel %vm4382, %v5247, %v5246
    %v5249 = vperm.slane %v4299, %v4384
    %v5250 = vsel %vm4386, %v5249, %v5248
    %v5251 = vperm.slane %v4300, %v4388
    %v5252 = vsel %vm4390, %v5251, %v5250
    %v5253 = vperm.slane %v4301, %v4392
    %v5254 = vsel %vm4394, %v5253, %v5252
    %v5255 = vperm.slane %v4302, %v4396
    %v5256 = vsel %vm4398, %v5255, %v5254
    %v5257 = vperm.slane %v4303, %v4400
    %v5258 = vsel %vm4402, %v5257, %v5256
    %v5259 = vperm.slane %v4304, %v4404
    %v5260 = vsel %vm4406, %v5259, %v5258
    %v5261 = vperm.slane %v4305, %v4408
    %v5262 = vsel %vm4410, %v5261, %v5260
    %v5263 = vperm.slane %v4306, %v4412
    %v5264 = vsel %vm4414, %v5263, %v5262
    %v5265 = vperm.slane %v4307, %v4416
    %v5266 = vsel %vm4418, %v5265, %v5264
    %v5267 = vperm.slane %v4308, %v4420
    %v5268 = vsel %vm4422, %v5267, %v5266
    %v5269 = vperm.slane %v4309, %v4424
    %v5270 = vsel %vm4426, %v5269, %v5268
    %v5271 = vperm.slane %v4310, %v4428
    %v5272 = vsel %vm4430, %v5271, %v5270
    %v5273 = vperm.slane %v4311, %v4432
    %v5274 = vsel %vm4434, %v5273, %v5272
    %v5275 = vperm.slane %v4312, %v4436
    %v5276 = vsel %vm4438, %v5275, %v5274
    %v5277 = vperm.slane %v4313, %v4378
    %v5278 = vperm.slane %v4314, %v4380
    %v5279 = vsel %vm4382, %v5278, %v5277
    %v5280 = vperm.slane %v4315, %v4384
    %v5281 = vsel %vm4386, %v5280, %v5279
    %v5282 = vperm.slane %v4316, %v4388
    %v5283 = vsel %vm4390, %v5282, %v5281
    %v5284 = vperm.slane %v4317, %v4392
    %v5285 = vsel %vm4394, %v5284, %v5283
    %v5286 = vperm.slane %v4318, %v4396
    %v5287 = vsel %vm4398, %v5286, %v5285
    %v5288 = vperm.slane %v4319, %v4400
    %v5289 = vsel %vm4402, %v5288, %v5287
    %v5290 = vperm.slane %v4320, %v4404
    %v5291 = vsel %vm4406, %v5290, %v5289
    %v5292 = vperm.slane %v4321, %v4408
    %v5293 = vsel %vm4410, %v5292, %v5291
    %v5294 = vperm.slane %v4322, %v4412
    %v5295 = vsel %vm4414, %v5294, %v5293
    %v5296 = vperm.slane %v4323, %v4416
    %v5297 = vsel %vm4418, %v5296, %v5295
    %v5298 = vperm.slane %v4324, %v4420
    %v5299 = vsel %vm4422, %v5298, %v5297
    %v5300 = vperm.slane %v4325, %v4424
    %v5301 = vsel %vm4426, %v5300, %v5299
    %v5302 = vperm.slane %v4326, %v4428
    %v5303 = vsel %vm4430, %v5302, %v5301
    %v5304 = vperm.slane %v4327, %v4432
    %v5305 = vsel %vm4434, %v5304, %v5303
    %v5306 = vperm.slane %v4328, %v4436
    %v5307 = vsel %vm4438, %v5306, %v5305
    %v5308 = vperm.slane %v4329, %v4378
    %v5309 = vperm.slane %v4330, %v4380
    %v5310 = vsel %vm4382, %v5309, %v5308
    %v5311 = vperm.slane %v4331, %v4384
    %v5312 = vsel %vm4386, %v5311, %v5310
    %v5313 = vperm.slane %v4332, %v4388
    %v5314 = vsel %vm4390, %v5313, %v5312
    %v5315 = vperm.slane %v4333, %v4392
    %v5316 = vsel %vm4394, %v5315, %v5314
    %v5317 = vperm.slane %v4334, %v4396
    %v5318 = vsel %vm4398, %v5317, %v5316
    %v5319 = vperm.slane %v4335, %v4400
    %v5320 = vsel %vm4402, %v5319, %v5318
    %v5321 = vperm.slane %v4336, %v4404
    %v5322 = vsel %vm4406, %v5321, %v5320
    %v5323 = vperm.slane %v4337, %v4408
    %v5324 = vsel %vm4410, %v5323, %v5322
    %v5325 = vperm.slane %v4338, %v4412
    %v5326 = vsel %vm4414, %v5325, %v5324
    %v5327 = vperm.slane %v4339, %v4416
    %v5328 = vsel %vm4418, %v5327, %v5326
    %v5329 = vperm.slane %v4340, %v4420
    %v5330 = vsel %vm4422, %v5329, %v5328
    %v5331 = vperm.slane %v4341, %v4424
    %v5332 = vsel %vm4426, %v5331, %v5330
    %v5333 = vperm.slane %v4342, %v4428
    %v5334 = vsel %vm4430, %v5333, %v5332
    %v5335 = vperm.slane %v4343, %v4432
    %v5336 = vsel %vm4434, %v5335, %v5334
    %v5337 = vperm.slane %v4344, %v4436
    %v5338 = vsel %vm4438, %v5337, %v5336
    %v5339 = vperm.slane %v4345, %v4378
    %v5340 = vperm.slane %v4346, %v4380
    %v5341 = vsel %vm4382, %v5340, %v5339
    %v5342 = vperm.slane %v4347, %v4384
    %v5343 = vsel %vm4386, %v5342, %v5341
    %v5344 = vperm.slane %v4348, %v4388
    %v5345 = vsel %vm4390, %v5344, %v5343
    %v5346 = vperm.slane %v4349, %v4392
    %v5347 = vsel %vm4394, %v5346, %v5345
    %v5348 = vperm.slane %v4350, %v4396
    %v5349 = vsel %vm4398, %v5348, %v5347
    %v5350 = vperm.slane %v4351, %v4400
    %v5351 = vsel %vm4402, %v5350, %v5349
    %v5352 = vperm.slane %v4352, %v4404
    %v5353 = vsel %vm4406, %v5352, %v5351
    %v5354 = vperm.slane %v4353, %v4408
    %v5355 = vsel %vm4410, %v5354, %v5353
    %v5356 = vperm.slane %v4354, %v4412
    %v5357 = vsel %vm4414, %v5356, %v5355
    %v5358 = vperm.slane %v4355, %v4416
    %v5359 = vsel %vm4418, %v5358, %v5357
    %v5360 = vperm.slane %v4356, %v4420
    %v5361 = vsel %vm4422, %v5360, %v5359
    %v5362 = vperm.slane %v4357, %v4424
    %v5363 = vsel %vm4426, %v5362, %v5361
    %v5364 = vperm.slane %v4358, %v4428
    %v5365 = vsel %vm4430, %v5364, %v5363
    %v5366 = vperm.slane %v4359, %v4432
    %v5367 = vsel %vm4434, %v5366, %v5365
    %v5368 = vperm.slane %v4360, %v4436
    %v5369 = vsel %vm4438, %v5368, %v5367
    %v5370 = vperm.slane %v4361, %v4378
    %v5371 = vperm.slane %v4362, %v4380
    %v5372 = vsel %vm4382, %v5371, %v5370
    %v5373 = vperm.slane %v4363, %v4384
    %v5374 = vsel %vm4386, %v5373, %v5372
    %v5375 = vperm.slane %v4364, %v4388
    %v5376 = vsel %vm4390, %v5375, %v5374
    %v5377 = vperm.slane %v4365, %v4392
    %v5378 = vsel %vm4394, %v5377, %v5376
    %v5379 = vperm.slane %v4366, %v4396
    %v5380 = vsel %vm4398, %v5379, %v5378
    %v5381 = vperm.slane %v4367, %v4400
    %v5382 = vsel %vm4402, %v5381, %v5380
    %v5383 = vperm.slane %v4368, %v4404
    %v5384 = vsel %vm4406, %v5383, %v5382
    %v5385 = vperm.slane %v4369, %v4408
    %v5386 = vsel %vm4410, %v5385, %v5384
    %v5387 = vperm.slane %v4370, %v4412
    %v5388 = vsel %vm4414, %v5387, %v5386
    %v5389 = vperm.slane %v4371, %v4416
    %v5390 = vsel %vm4418, %v5389, %v5388
    %v5391 = vperm.slane %v4372, %v4420
    %v5392 = vsel %vm4422, %v5391, %v5390
    %v5393 = vperm.slane %v4373, %v4424
    %v5394 = vsel %vm4426, %v5393, %v5392
    %v5395 = vperm.slane %v4374, %v4428
    %v5396 = vsel %vm4430, %v5395, %v5394
    %v5397 = vperm.slane %v4375, %v4432
    %v5398 = vsel %vm4434, %v5397, %v5396
    %v5399 = vperm.slane %v4376, %v4436
    %v5400 = vsel %vm4438, %v5399, %v5398
    %vm5401 = vcmask 1041409
    %v5402 = vsel %vm5401, %v4935, %v4439
    %v5403 = vsel %vm5401, %v4966, %v4470
    %v5404 = vsel %vm5401, %v4997, %v4501
    %v5405 = vsel %vm5401, %v5028, %v4532
    %v5406 = vsel %vm5401, %v5059, %v4563
    %v5407 = vsel %vm5401, %v5090, %v4594
    %v5408 = vsel %vm5401, %v5121, %v4625
    %v5409 = vsel %vm5401, %v5152, %v4656
    %v5410 = vsel %vm5401, %v5183, %v4687
    %v5411 = vsel %vm5401, %v5214, %v4718
    %v5412 = vsel %vm5401, %v5245, %v4749
    %v5413 = vsel %vm5401, %v5276, %v4780
    %v5414 = vsel %vm5401, %v5307, %v4811
    %v5415 = vsel %vm5401, %v5338, %v4842
    %v5416 = vsel %vm5401, %v5369, %v4873
    %v5417 = vsel %vm5401, %v5400, %v4904
    %v5418 = vpack.c.b16 %v5402, %v5402
    %v5419 = vpack.c.b16 %v5403, %v5403
    %v5420 = vpack.c.b16 %v5404, %v5404
    %v5421 = vpack.c.b16 %v5405, %v5405
    %v5422 = vpack.c.b16 %v5406, %v5406
    %v5423 = vpack.c.b16 %v5407, %v5407
    %v5424 = vpack.c.b16 %v5408, %v5408
    %v5425 = vpack.c.b16 %v5409, %v5409
    %v5426 = vpack.c.b16 %v5410, %v5410
    %v5427 = vpack.c.b16 %v5411, %v5411
    %v5428 = vpack.c.b16 %v5412, %v5412
    %v5429 = vpack.c.b16 %v5413, %v5413
    %v5430 = vpack.c.b16 %v5414, %v5414
    %v5431 = vpack.c.b16 %v5415, %v5415
    %v5432 = vpack.c.b16 %v5416, %v5416
    %v5433 = vpack.c.b16 %v5417, %v5417
    %v5706 = vunpack.c.l.b16 %v3349
    %v5707 = vunpack.c.l.b16 %v3350
    %v5708 = vunpack.c.l.b16 %v3351
    %v5709 = vunpack.c.l.b16 %v3352
    %v5710 = vunpack.c.l.b16 %v3353
    %v5711 = vunpack.c.l.b16 %v3354
    %v5712 = vunpack.c.l.b16 %v3355
    %v5713 = vunpack.c.l.b16 %v3356
    %v5714 = vunpack.c.l.b16 %v3357
    %v5715 = vunpack.c.l.b16 %v3358
    %v5716 = vunpack.c.l.b16 %v3359
    %v5717 = vunpack.c.l.b16 %v3360
    %v5718 = vunpack.c.l.b16 %v3361
    %v5719 = vunpack.c.l.b16 %v3362
    %v5720 = vunpack.c.l.b16 %v3363
    %v5721 = vunpack.c.l.b16 %v3364
    %v5722 = vunpack.c.l.b16 %v3365
    %v5723 = vunpack.c.l.b16 %v3366
    %v5724 = vunpack.c.l.b16 %v3367
    %v5725 = vunpack.c.l.b16 %v3368
    %v5726 = vunpack.c.l.b16 %v3369
    %v5727 = vunpack.c.l.b16 %v3370
    %v5728 = vunpack.c.l.b16 %v3371
    %v5729 = vunpack.c.l.b16 %v3372
    %v5730 = vunpack.c.l.b16 %v3373
    %v5731 = vunpack.c.l.b16 %v3374
    %v5732 = vunpack.c.l.b16 %v3375
    %v5733 = vunpack.c.l.b16 %v3376
    %v5734 = vunpack.c.l.b16 %v3377
    %v5735 = vunpack.c.l.b16 %v3378
    %v5736 = vunpack.c.l.b16 %v3379
    %v5737 = vunpack.c.l.b16 %v3380
    %v5738 = vunpack.c.l.b16 %v3381
    %v5739 = vunpack.c.l.b16 %v3382
    %v5740 = vunpack.c.l.b16 %v3383
    %v5741 = vunpack.c.l.b16 %v3384
    %v5742 = vunpack.c.l.b16 %v3385
    %v5743 = vunpack.c.l.b16 %v3386
    %v5744 = vunpack.c.l.b16 %v3387
    %v5745 = vunpack.c.l.b16 %v3388
    %v5746 = vunpack.c.l.b16 %v3389
    %v5747 = vunpack.c.l.b16 %v3390
    %v5748 = vunpack.c.l.b16 %v3391
    %v5749 = vunpack.c.l.b16 %v3392
    %v5750 = vunpack.c.l.b16 %v3393
    %v5751 = vunpack.c.l.b16 %v3394
    %v5752 = vunpack.c.l.b16 %v3395
    %v5753 = vunpack.c.l.b16 %v3396
    %v5754 = vunpack.c.l.b16 %v3397
    %v5755 = vunpack.c.l.b16 %v3398
    %v5756 = vunpack.c.l.b16 %v3399
    %v5757 = vunpack.c.l.b16 %v3400
    %v5758 = vunpack.c.l.b16 %v3401
    %v5759 = vunpack.c.l.b16 %v3402
    %v5760 = vunpack.c.l.b16 %v3403
    %v5761 = vunpack.c.l.b16 %v3404
    %v5762 = vunpack.c.l.b16 %v3405
    %v5763 = vunpack.c.l.b16 %v3406
    %v5764 = vunpack.c.l.b16 %v3407
    %v5765 = vunpack.c.l.b16 %v3408
    %v5766 = vunpack.c.l.b16 %v3409
    %v5767 = vunpack.c.l.b16 %v3410
    %v5768 = vunpack.c.l.b16 %v3411
    %v5769 = vunpack.c.l.b16 %v3412
    %v5770 = vunpack.c.l.b16 %v3413
    %v5771 = vunpack.c.l.b16 %v3414
    %v5772 = vunpack.c.l.b16 %v3415
    %v5773 = vunpack.c.l.b16 %v3416
    %v5774 = vunpack.c.l.b16 %v3417
    %v5775 = vunpack.c.l.b16 %v3418
    %v5776 = vunpack.c.l.b16 %v3419
    %v5777 = vunpack.c.l.b16 %v3420
    %v5778 = vunpack.c.l.b16 %v3421
    %v5779 = vunpack.c.l.b16 %v3422
    %v5780 = vunpack.c.l.b16 %v3423
    %v5781 = vunpack.c.l.b16 %v3424
    %v5782 = vunpack.c.l.b16 %v3425
    %v5783 = vunpack.c.l.b16 %v3426
    %v5784 = vunpack.c.l.b16 %v3427
    %v5785 = vunpack.c.l.b16 %v3428
    %v5786 = vunpack.c.l.b16 %v3429
    %v5787 = vunpack.c.l.b16 %v3430
    %v5788 = vunpack.c.l.b16 %v3431
    %v5789 = vunpack.c.l.b16 %v3432
    %v5790 = vunpack.c.l.b16 %v3433
    %v5791 = vunpack.c.l.b16 %v3434
    %v5792 = vunpack.c.l.b16 %v3435
    %v5793 = vunpack.c.l.b16 %v3436
    %v5794 = vunpack.c.l.b16 %v3437
    %v5795 = vunpack.c.l.b16 %v3438
    %v5796 = vunpack.c.l.b16 %v3439
    %v5797 = vunpack.c.l.b16 %v3440
    %v5798 = vunpack.c.l.b16 %v3441
    %v5799 = vunpack.c.l.b16 %v3442
    %v5800 = vunpack.c.l.b16 %v3443
    %v5801 = vunpack.c.l.b16 %v3444
    %v5802 = vunpack.c.l.b16 %v3445
    %v5803 = vunpack.c.l.b16 %v3446
    %v5804 = vunpack.c.l.b16 %v3447
    %v5805 = vunpack.c.l.b16 %v3448
    %v5806 = vunpack.c.l.b16 %v3449
    %v5807 = vunpack.c.l.b16 %v3450
    %v5808 = vunpack.c.l.b16 %v3451
    %v5809 = vunpack.c.l.b16 %v3452
    %v5810 = vunpack.c.l.b16 %v3453
    %v5811 = vunpack.c.l.b16 %v3454
    %v5812 = vunpack.c.l.b16 %v3455
    %v5813 = vunpack.c.l.b16 %v3456
    %v5814 = vunpack.c.l.b16 %v3457
    %v5815 = vunpack.c.l.b16 %v3458
    %v5816 = vunpack.c.l.b16 %v3459
    %v5817 = vunpack.c.l.b16 %v3460
    %v5818 = vunpack.c.l.b16 %v3461
    %v5819 = vunpack.c.l.b16 %v3462
    %v5820 = vunpack.c.l.b16 %v3463
    %v5821 = vunpack.c.l.b16 %v3464
    %v5822 = vunpack.c.l.b16 %v3465
    %v5823 = vunpack.c.l.b16 %v3466
    %v5824 = vunpack.c.l.b16 %v3467
    %v5825 = vunpack.c.l.b16 %v3468
    %v5826 = vunpack.c.l.b16 %v3469
    %v5827 = vunpack.c.l.b16 %v3470
    %v5828 = vunpack.c.l.b16 %v3471
    %v5829 = vunpack.c.l.b16 %v3472
    %v5830 = vunpack.c.l.b16 %v3473
    %v5831 = vunpack.c.l.b16 %v3474
    %v5832 = vunpack.c.l.b16 %v3475
    %v5833 = vunpack.c.l.b16 %v3476
    %v5834 = vunpack.c.l.b16 %v3477
    %v5835 = vunpack.c.l.b16 %v3478
    %v5836 = vunpack.c.l.b16 %v3479
    %v5837 = vunpack.c.l.b16 %v3480
    %v5838 = vunpack.c.l.b16 %v3481
    %v5839 = vunpack.c.l.b16 %v3482
    %v5840 = vunpack.c.l.b16 %v3483
    %v5841 = vunpack.c.l.b16 %v3484
    %v5842 = vunpack.c.l.b16 %v3485
    %v5843 = vunpack.c.l.b16 %v3486
    %v5844 = vunpack.c.l.b16 %v3487
    %v5845 = vunpack.c.l.b16 %v3488
    %v5846 = vunpack.c.l.b16 %v3489
    %v5847 = vunpack.c.l.b16 %v3490
    %v5848 = vunpack.c.l.b16 %v3491
    %v5849 = vunpack.c.l.b16 %v3492
    %v5850 = vunpack.c.l.b16 %v3493
    %v5851 = vunpack.c.l.b16 %v3494
    %v5852 = vunpack.c.l.b16 %v3495
    %v5853 = vunpack.c.l.b16 %v3496
    %v5854 = vunpack.c.l.b16 %v3497
    %v5855 = vunpack.c.l.b16 %v3498
    %v5856 = vunpack.c.l.b16 %v3499
    %v5857 = vunpack.c.l.b16 %v3500
    %v5858 = vunpack.c.l.b16 %v3501
    %v5859 = vunpack.c.l.b16 %v3502
    %v5860 = vunpack.c.l.b16 %v3503
    %v5861 = vunpack.c.l.b16 %v3504
    %v5862 = vunpack.c.l.b16 %v3505
    %v5863 = vunpack.c.l.b16 %v3506
    %v5864 = vunpack.c.l.b16 %v3507
    %v5865 = vunpack.c.l.b16 %v3508
    %v5866 = vunpack.c.l.b16 %v3509
    %v5867 = vunpack.c.l.b16 %v3510
    %v5868 = vunpack.c.l.b16 %v3511
    %v5869 = vunpack.c.l.b16 %v3512
    %v5870 = vunpack.c.l.b16 %v3513
    %v5871 = vunpack.c.l.b16 %v3514
    %v5872 = vunpack.c.l.b16 %v3515
    %v5873 = vunpack.c.l.b16 %v3516
    %v5874 = vunpack.c.l.b16 %v3517
    %v5875 = vunpack.c.l.b16 %v3518
    %v5876 = vunpack.c.l.b16 %v3519
    %v5877 = vunpack.c.l.b16 %v3520
    %v5878 = vunpack.c.l.b16 %v3521
    %v5879 = vunpack.c.l.b16 %v3522
    %v5880 = vunpack.c.l.b16 %v3523
    %v5881 = vunpack.c.l.b16 %v3524
    %v5882 = vunpack.c.l.b16 %v3525
    %v5883 = vunpack.c.l.b16 %v3526
    %v5884 = vunpack.c.l.b16 %v3527
    %v5885 = vunpack.c.l.b16 %v3528
    %v5886 = vunpack.c.l.b16 %v3529
    %v5887 = vunpack.c.l.b16 %v3530
    %v5888 = vunpack.c.l.b16 %v3531
    %v5889 = vunpack.c.l.b16 %v3532
    %v5890 = vunpack.c.l.b16 %v3533
    %v5891 = vunpack.c.l.b16 %v3534
    %v5892 = vunpack.c.l.b16 %v3535
    %v5893 = vunpack.c.l.b16 %v3536
    %v5894 = vunpack.c.l.b16 %v3537
    %v5895 = vunpack.c.l.b16 %v3538
    %v5896 = vunpack.c.l.b16 %v3539
    %v5897 = vunpack.c.l.b16 %v3540
    %v5898 = vunpack.c.l.b16 %v3541
    %v5899 = vunpack.c.l.b16 %v3542
    %v5900 = vunpack.c.l.b16 %v3543
    %v5901 = vunpack.c.l.b16 %v3544
    %v5902 = vunpack.c.l.b16 %v3545
    %v5903 = vunpack.c.l.b16 %v3546
    %v5904 = vunpack.c.l.b16 %v3547
    %v5905 = vunpack.c.l.b16 %v3548
    %v5906 = vunpack.c.l.b16 %v3549
    %v5907 = vunpack.c.l.b16 %v3550
    %v5908 = vunpack.c.l.b16 %v3551
    %v5909 = vunpack.c.l.b16 %v3552
    %v5910 = vunpack.c.l.b16 %v3553
    %v5911 = vunpack.c.l.b16 %v3554
    %v5912 = vunpack.c.l.b16 %v3555
    %v5913 = vunpack.c.l.b16 %v3556
    %v5914 = vunpack.c.l.b16 %v3557
    %v5915 = vunpack.c.l.b16 %v3558
    %v5916 = vunpack.c.l.b16 %v3559
    %v5917 = vunpack.c.l.b16 %v3560
    %v5918 = vunpack.c.l.b16 %v3561
    %v5919 = vunpack.c.l.b16 %v3562
    %v5920 = vunpack.c.l.b16 %v3563
    %v5921 = vunpack.c.l.b16 %v3564
    %v5922 = vunpack.c.l.b16 %v3565
    %v5923 = vunpack.c.l.b16 %v3566
    %v5924 = vunpack.c.l.b16 %v3567
    %v5925 = vunpack.c.l.b16 %v3568
    %v5926 = vunpack.c.l.b16 %v3569
    %v5927 = vunpack.c.l.b16 %v3570
    %v5928 = vunpack.c.l.b16 %v3571
    %v5929 = vunpack.c.l.b16 %v3572
    %v5930 = vunpack.c.l.b16 %v3573
    %v5931 = vunpack.c.l.b16 %v3574
    %v5932 = vunpack.c.l.b16 %v3575
    %v5933 = vunpack.c.l.b16 %v3576
    %v5934 = vunpack.c.l.b16 %v3577
    %v5935 = vunpack.c.l.b16 %v3578
    %v5936 = vunpack.c.l.b16 %v3579
    %v5937 = vunpack.c.l.b16 %v3580
    %v5938 = vunpack.c.l.b16 %v3581
    %v5939 = vunpack.c.l.b16 %v3582
    %v5940 = vunpack.c.l.b16 %v3583
    %v5941 = vunpack.c.l.b16 %v3584
    %v5942 = vunpack.c.l.b16 %v3585
    %v5943 = vunpack.c.l.b16 %v3586
    %v5944 = vunpack.c.l.b16 %v3587
    %v5945 = vunpack.c.l.b16 %v3588
    %v5946 = vunpack.c.l.b16 %v3589
    %v5947 = vunpack.c.l.b16 %v3590
    %v5948 = vunpack.c.l.b16 %v3591
    %v5949 = vunpack.c.l.b16 %v3592
    %v5950 = vunpack.c.l.b16 %v3593
    %v5951 = vunpack.c.l.b16 %v3594
    %v5952 = vunpack.c.l.b16 %v3595
    %v5953 = vunpack.c.l.b16 %v3596
    %v5954 = vunpack.c.l.b16 %v3597
    %v5955 = vunpack.c.l.b16 %v3598
    %v5956 = vunpack.c.l.b16 %v3599
    %v5957 = vunpack.c.l.b16 %v3600
    %v5958 = vunpack.c.l.b16 %v3601
    %v5959 = vunpack.c.l.b16 %v3602
    %v5960 = vunpack.c.l.b16 %v3603
    %v5961 = vunpack.c.l.b16 %v3604
    %v5962 = vpack.c.b16 %v5707, %v5706
    %v5963 = vpack.c.b16 %v5709, %v5708
    %v5964 = vpack.c.b16 %v5711, %v5710
    %v5965 = vpack.c.b16 %v5713, %v5712
    %v5966 = vpack.c.b16 %v5715, %v5714
    %v5967 = vpack.c.b16 %v5717, %v5716
    %v5968 = vpack.c.b16 %v5719, %v5718
    %v5969 = vpack.c.b16 %v5721, %v5720
    %v5970 = vpack.c.b16 %v5723, %v5722
    %v5971 = vpack.c.b16 %v5725, %v5724
    %v5972 = vpack.c.b16 %v5727, %v5726
    %v5973 = vpack.c.b16 %v5729, %v5728
    %v5974 = vpack.c.b16 %v5731, %v5730
    %v5975 = vpack.c.b16 %v5733, %v5732
    %v5976 = vpack.c.b16 %v5735, %v5734
    %v5977 = vpack.c.b16 %v5737, %v5736
    %v5978 = vpack.c.b16 %v5739, %v5738
    %v5979 = vpack.c.b16 %v5741, %v5740
    %v5980 = vpack.c.b16 %v5743, %v5742
    %v5981 = vpack.c.b16 %v5745, %v5744
    %v5982 = vpack.c.b16 %v5747, %v5746
    %v5983 = vpack.c.b16 %v5749, %v5748
    %v5984 = vpack.c.b16 %v5751, %v5750
    %v5985 = vpack.c.b16 %v5753, %v5752
    %v5986 = vpack.c.b16 %v5755, %v5754
    %v5987 = vpack.c.b16 %v5757, %v5756
    %v5988 = vpack.c.b16 %v5759, %v5758
    %v5989 = vpack.c.b16 %v5761, %v5760
    %v5990 = vpack.c.b16 %v5763, %v5762
    %v5991 = vpack.c.b16 %v5765, %v5764
    %v5992 = vpack.c.b16 %v5767, %v5766
    %v5993 = vpack.c.b16 %v5769, %v5768
    %v5994 = vpack.c.b16 %v5771, %v5770
    %v5995 = vpack.c.b16 %v5773, %v5772
    %v5996 = vpack.c.b16 %v5775, %v5774
    %v5997 = vpack.c.b16 %v5777, %v5776
    %v5998 = vpack.c.b16 %v5779, %v5778
    %v5999 = vpack.c.b16 %v5781, %v5780
    %v6000 = vpack.c.b16 %v5783, %v5782
    %v6001 = vpack.c.b16 %v5785, %v5784
    %v6002 = vpack.c.b16 %v5787, %v5786
    %v6003 = vpack.c.b16 %v5789, %v5788
    %v6004 = vpack.c.b16 %v5791, %v5790
    %v6005 = vpack.c.b16 %v5793, %v5792
    %v6006 = vpack.c.b16 %v5795, %v5794
    %v6007 = vpack.c.b16 %v5797, %v5796
    %v6008 = vpack.c.b16 %v5799, %v5798
    %v6009 = vpack.c.b16 %v5801, %v5800
    %v6010 = vpack.c.b16 %v5803, %v5802
    %v6011 = vpack.c.b16 %v5805, %v5804
    %v6012 = vpack.c.b16 %v5807, %v5806
    %v6013 = vpack.c.b16 %v5809, %v5808
    %v6014 = vpack.c.b16 %v5811, %v5810
    %v6015 = vpack.c.b16 %v5813, %v5812
    %v6016 = vpack.c.b16 %v5815, %v5814
    %v6017 = vpack.c.b16 %v5817, %v5816
    %v6018 = vpack.c.b16 %v5819, %v5818
    %v6019 = vpack.c.b16 %v5821, %v5820
    %v6020 = vpack.c.b16 %v5823, %v5822
    %v6021 = vpack.c.b16 %v5825, %v5824
    %v6022 = vpack.c.b16 %v5827, %v5826
    %v6023 = vpack.c.b16 %v5829, %v5828
    %v6024 = vpack.c.b16 %v5831, %v5830
    %v6025 = vpack.c.b16 %v5833, %v5832
    %v6026 = vpack.c.b16 %v5835, %v5834
    %v6027 = vpack.c.b16 %v5837, %v5836
    %v6028 = vpack.c.b16 %v5839, %v5838
    %v6029 = vpack.c.b16 %v5841, %v5840
    %v6030 = vpack.c.b16 %v5843, %v5842
    %v6031 = vpack.c.b16 %v5845, %v5844
    %v6032 = vpack.c.b16 %v5847, %v5846
    %v6033 = vpack.c.b16 %v5849, %v5848
    %v6034 = vpack.c.b16 %v5851, %v5850
    %v6035 = vpack.c.b16 %v5853, %v5852
    %v6036 = vpack.c.b16 %v5855, %v5854
    %v6037 = vpack.c.b16 %v5857, %v5856
    %v6038 = vpack.c.b16 %v5859, %v5858
    %v6039 = vpack.c.b16 %v5861, %v5860
    %v6040 = vpack.c.b16 %v5863, %v5862
    %v6041 = vpack.c.b16 %v5865, %v5864
    %v6042 = vpack.c.b16 %v5867, %v5866
    %v6043 = vpack.c.b16 %v5869, %v5868
    %v6044 = vpack.c.b16 %v5871, %v5870
    %v6045 = vpack.c.b16 %v5873, %v5872
    %v6046 = vpack.c.b16 %v5875, %v5874
    %v6047 = vpack.c.b16 %v5877, %v5876
    %v6048 = vpack.c.b16 %v5879, %v5878
    %v6049 = vpack.c.b16 %v5881, %v5880
    %v6050 = vpack.c.b16 %v5883, %v5882
    %v6051 = vpack.c.b16 %v5885, %v5884
    %v6052 = vpack.c.b16 %v5887, %v5886
    %v6053 = vpack.c.b16 %v5889, %v5888
    %v6054 = vpack.c.b16 %v5891, %v5890
    %v6055 = vpack.c.b16 %v5893, %v5892
    %v6056 = vpack.c.b16 %v5895, %v5894
    %v6057 = vpack.c.b16 %v5897, %v5896
    %v6058 = vpack.c.b16 %v5899, %v5898
    %v6059 = vpack.c.b16 %v5901, %v5900
    %v6060 = vpack.c.b16 %v5903, %v5902
    %v6061 = vpack.c.b16 %v5905, %v5904
    %v6062 = vpack.c.b16 %v5907, %v5906
    %v6063 = vpack.c.b16 %v5909, %v5908
    %v6064 = vpack.c.b16 %v5911, %v5910
    %v6065 = vpack.c.b16 %v5913, %v5912
    %v6066 = vpack.c.b16 %v5915, %v5914
    %v6067 = vpack.c.b16 %v5917, %v5916
    %v6068 = vpack.c.b16 %v5919, %v5918
    %v6069 = vpack.c.b16 %v5921, %v5920
    %v6070 = vpack.c.b16 %v5923, %v5922
    %v6071 = vpack.c.b16 %v5925, %v5924
    %v6072 = vpack.c.b16 %v5927, %v5926
    %v6073 = vpack.c.b16 %v5929, %v5928
    %v6074 = vpack.c.b16 %v5931, %v5930
    %v6075 = vpack.c.b16 %v5933, %v5932
    %v6076 = vpack.c.b16 %v5935, %v5934
    %v6077 = vpack.c.b16 %v5937, %v5936
    %v6078 = vpack.c.b16 %v5939, %v5938
    %v6079 = vpack.c.b16 %v5941, %v5940
    %v6080 = vpack.c.b16 %v5943, %v5942
    %v6081 = vpack.c.b16 %v5945, %v5944
    %v6082 = vpack.c.b16 %v5947, %v5946
    %v6083 = vpack.c.b16 %v5949, %v5948
    %v6084 = vpack.c.b16 %v5951, %v5950
    %v6085 = vpack.c.b16 %v5953, %v5952
    %v6086 = vpack.c.b16 %v5955, %v5954
    %v6087 = vpack.c.b16 %v5957, %v5956
    %v6088 = vpack.c.b16 %v5959, %v5958
    %v6089 = vpack.c.b16 %v5961, %v5960
    %6218 = vmatpush.bf16.msra.mxu0 %v5969
    %6219 = vmatpush.bf16.msra.mxu0 %v5968
    %6220 = vmatpush.bf16.msra.mxu0 %v5967
    %6221 = vmatpush.bf16.msra.mxu0 %v5966
    %6222 = vmatpush.bf16.msra.mxu0 %v5965
    %6223 = vmatpush.bf16.msra.mxu0 %v5964
    %6224 = vmatpush.bf16.msra.mxu0 %v5963
    %6225 = vmatpush.bf16.msra.mxu0 %v5962
    %6226 = vmatmul.bf16.gmra.mxu0 %v5418
    %v6227 = vpop.f32.mrf.mxu0
    %v6228 = vadd.f32 %v3607, %v6227
    %v6229 = vpop.f32.mrf.mxu0
    %6230 = vdwg.mxu0
    %6231 = vmatpush.bf16.msra.mxu0 %v5977
    %6232 = vmatpush.bf16.msra.mxu0 %v5976
    %6233 = vmatpush.bf16.msra.mxu0 %v5975
    %6234 = vmatpush.bf16.msra.mxu0 %v5974
    %6235 = vmatpush.bf16.msra.mxu0 %v5973
    %6236 = vmatpush.bf16.msra.mxu0 %v5972
    %6237 = vmatpush.bf16.msra.mxu0 %v5971
    %6238 = vmatpush.bf16.msra.mxu0 %v5970
    %6239 = vmatmul.bf16.gmra.mxu0 %v5419
    %v6240 = vpop.f32.mrf.mxu0
    %v6241 = vadd.f32 %v6228, %v6240
    %v6242 = vpop.f32.mrf.mxu0
    %6243 = vdwg.mxu0
    %6244 = vmatpush.bf16.msra.mxu0 %v5985
    %6245 = vmatpush.bf16.msra.mxu0 %v5984
    %6246 = vmatpush.bf16.msra.mxu0 %v5983
    %6247 = vmatpush.bf16.msra.mxu0 %v5982
    %6248 = vmatpush.bf16.msra.mxu0 %v5981
    %6249 = vmatpush.bf16.msra.mxu0 %v5980
    %6250 = vmatpush.bf16.msra.mxu0 %v5979
    %6251 = vmatpush.bf16.msra.mxu0 %v5978
    %6252 = vmatmul.bf16.gmra.mxu0 %v5420
    %v6253 = vpop.f32.mrf.mxu0
    %v6254 = vadd.f32 %v6241, %v6253
    %v6255 = vpop.f32.mrf.mxu0
    %6256 = vdwg.mxu0
    %6257 = vmatpush.bf16.msra.mxu0 %v5993
    %6258 = vmatpush.bf16.msra.mxu0 %v5992
    %6259 = vmatpush.bf16.msra.mxu0 %v5991
    %6260 = vmatpush.bf16.msra.mxu0 %v5990
    %6261 = vmatpush.bf16.msra.mxu0 %v5989
    %6262 = vmatpush.bf16.msra.mxu0 %v5988
    %6263 = vmatpush.bf16.msra.mxu0 %v5987
    %6264 = vmatpush.bf16.msra.mxu0 %v5986
    %6265 = vmatmul.bf16.gmra.mxu0 %v5421
    %v6266 = vpop.f32.mrf.mxu0
    %v6267 = vadd.f32 %v6254, %v6266
    %v6268 = vpop.f32.mrf.mxu0
    %6269 = vdwg.mxu0
    %6270 = vmatpush.bf16.msra.mxu0 %v6001
    %6271 = vmatpush.bf16.msra.mxu0 %v6000
    %6272 = vmatpush.bf16.msra.mxu0 %v5999
    %6273 = vmatpush.bf16.msra.mxu0 %v5998
    %6274 = vmatpush.bf16.msra.mxu0 %v5997
    %6275 = vmatpush.bf16.msra.mxu0 %v5996
    %6276 = vmatpush.bf16.msra.mxu0 %v5995
    %6277 = vmatpush.bf16.msra.mxu0 %v5994
    %6278 = vmatmul.bf16.gmra.mxu0 %v5422
    %v6279 = vpop.f32.mrf.mxu0
    %v6280 = vadd.f32 %v6267, %v6279
    %v6281 = vpop.f32.mrf.mxu0
    %6282 = vdwg.mxu0
    %6283 = vmatpush.bf16.msra.mxu0 %v6009
    %6284 = vmatpush.bf16.msra.mxu0 %v6008
    %6285 = vmatpush.bf16.msra.mxu0 %v6007
    %6286 = vmatpush.bf16.msra.mxu0 %v6006
    %6287 = vmatpush.bf16.msra.mxu0 %v6005
    %6288 = vmatpush.bf16.msra.mxu0 %v6004
    %6289 = vmatpush.bf16.msra.mxu0 %v6003
    %6290 = vmatpush.bf16.msra.mxu0 %v6002
    %6291 = vmatmul.bf16.gmra.mxu0 %v5423
    %v6292 = vpop.f32.mrf.mxu0
    %v6293 = vadd.f32 %v6280, %v6292
    %v6294 = vpop.f32.mrf.mxu0
    %6295 = vdwg.mxu0
    %6296 = vmatpush.bf16.msra.mxu0 %v6017
    %6297 = vmatpush.bf16.msra.mxu0 %v6016
    %6298 = vmatpush.bf16.msra.mxu0 %v6015
    %6299 = vmatpush.bf16.msra.mxu0 %v6014
    %6300 = vmatpush.bf16.msra.mxu0 %v6013
    %6301 = vmatpush.bf16.msra.mxu0 %v6012
    %6302 = vmatpush.bf16.msra.mxu0 %v6011
    %6303 = vmatpush.bf16.msra.mxu0 %v6010
    %6304 = vmatmul.bf16.gmra.mxu0 %v5424
    %v6305 = vpop.f32.mrf.mxu0
    %v6306 = vadd.f32 %v6293, %v6305
    %v6307 = vpop.f32.mrf.mxu0
    %6308 = vdwg.mxu0
    %6309 = vmatpush.bf16.msra.mxu0 %v6025
    %6310 = vmatpush.bf16.msra.mxu0 %v6024
    %6311 = vmatpush.bf16.msra.mxu0 %v6023
    %6312 = vmatpush.bf16.msra.mxu0 %v6022
    %6313 = vmatpush.bf16.msra.mxu0 %v6021
    %6314 = vmatpush.bf16.msra.mxu0 %v6020
    %6315 = vmatpush.bf16.msra.mxu0 %v6019
    %6316 = vmatpush.bf16.msra.mxu0 %v6018
    %6317 = vmatmul.bf16.gmra.mxu0 %v5425
    %v6318 = vpop.f32.mrf.mxu0
    %v6319 = vadd.f32 %v6306, %v6318
    %v6320 = vpop.f32.mrf.mxu0
    %6321 = vdwg.mxu0
    %6322 = vmatpush.bf16.msra.mxu0 %v6033
    %6323 = vmatpush.bf16.msra.mxu0 %v6032
    %6324 = vmatpush.bf16.msra.mxu0 %v6031
    %6325 = vmatpush.bf16.msra.mxu0 %v6030
    %6326 = vmatpush.bf16.msra.mxu0 %v6029
    %6327 = vmatpush.bf16.msra.mxu0 %v6028
    %6328 = vmatpush.bf16.msra.mxu0 %v6027
    %6329 = vmatpush.bf16.msra.mxu0 %v6026
    %6330 = vmatmul.bf16.gmra.mxu0 %v5426
    %v6331 = vpop.f32.mrf.mxu0
    %v6332 = vadd.f32 %v6319, %v6331
    %v6333 = vpop.f32.mrf.mxu0
    %6334 = vdwg.mxu0
    %6335 = vmatpush.bf16.msra.mxu0 %v6041
    %6336 = vmatpush.bf16.msra.mxu0 %v6040
    %6337 = vmatpush.bf16.msra.mxu0 %v6039
    %6338 = vmatpush.bf16.msra.mxu0 %v6038
    %6339 = vmatpush.bf16.msra.mxu0 %v6037
    %6340 = vmatpush.bf16.msra.mxu0 %v6036
    %6341 = vmatpush.bf16.msra.mxu0 %v6035
    %6342 = vmatpush.bf16.msra.mxu0 %v6034
    %6343 = vmatmul.bf16.gmra.mxu0 %v5427
    %v6344 = vpop.f32.mrf.mxu0
    %v6345 = vadd.f32 %v6332, %v6344
    %v6346 = vpop.f32.mrf.mxu0
    %6347 = vdwg.mxu0
    %6348 = vmatpush.bf16.msra.mxu0 %v6049
    %6349 = vmatpush.bf16.msra.mxu0 %v6048
    %6350 = vmatpush.bf16.msra.mxu0 %v6047
    %6351 = vmatpush.bf16.msra.mxu0 %v6046
    %6352 = vmatpush.bf16.msra.mxu0 %v6045
    %6353 = vmatpush.bf16.msra.mxu0 %v6044
    %6354 = vmatpush.bf16.msra.mxu0 %v6043
    %6355 = vmatpush.bf16.msra.mxu0 %v6042
    %6356 = vmatmul.bf16.gmra.mxu0 %v5428
    %v6357 = vpop.f32.mrf.mxu0
    %v6358 = vadd.f32 %v6345, %v6357
    %v6359 = vpop.f32.mrf.mxu0
    %6360 = vdwg.mxu0
    %6361 = vmatpush.bf16.msra.mxu0 %v6057
    %6362 = vmatpush.bf16.msra.mxu0 %v6056
    %6363 = vmatpush.bf16.msra.mxu0 %v6055
    %6364 = vmatpush.bf16.msra.mxu0 %v6054
    %6365 = vmatpush.bf16.msra.mxu0 %v6053
    %6366 = vmatpush.bf16.msra.mxu0 %v6052
    %6367 = vmatpush.bf16.msra.mxu0 %v6051
    %6368 = vmatpush.bf16.msra.mxu0 %v6050
    %6369 = vmatmul.bf16.gmra.mxu0 %v5429
    %v6370 = vpop.f32.mrf.mxu0
    %v6371 = vadd.f32 %v6358, %v6370
    %v6372 = vpop.f32.mrf.mxu0
    %6373 = vdwg.mxu0
    %6374 = vmatpush.bf16.msra.mxu0 %v6065
    %6375 = vmatpush.bf16.msra.mxu0 %v6064
    %6376 = vmatpush.bf16.msra.mxu0 %v6063
    %6377 = vmatpush.bf16.msra.mxu0 %v6062
    %6378 = vmatpush.bf16.msra.mxu0 %v6061
    %6379 = vmatpush.bf16.msra.mxu0 %v6060
    %6380 = vmatpush.bf16.msra.mxu0 %v6059
    %6381 = vmatpush.bf16.msra.mxu0 %v6058
    %6382 = vmatmul.bf16.gmra.mxu0 %v5430
    %v6383 = vpop.f32.mrf.mxu0
    %v6384 = vadd.f32 %v6371, %v6383
    %v6385 = vpop.f32.mrf.mxu0
    %6386 = vdwg.mxu0
    %6387 = vmatpush.bf16.msra.mxu0 %v6073
    %6388 = vmatpush.bf16.msra.mxu0 %v6072
    %6389 = vmatpush.bf16.msra.mxu0 %v6071
    %6390 = vmatpush.bf16.msra.mxu0 %v6070
    %6391 = vmatpush.bf16.msra.mxu0 %v6069
    %6392 = vmatpush.bf16.msra.mxu0 %v6068
    %6393 = vmatpush.bf16.msra.mxu0 %v6067
    %6394 = vmatpush.bf16.msra.mxu0 %v6066
    %6395 = vmatmul.bf16.gmra.mxu0 %v5431
    %v6396 = vpop.f32.mrf.mxu0
    %v6397 = vadd.f32 %v6384, %v6396
    %v6398 = vpop.f32.mrf.mxu0
    %6399 = vdwg.mxu0
    %6400 = vmatpush.bf16.msra.mxu0 %v6081
    %6401 = vmatpush.bf16.msra.mxu0 %v6080
    %6402 = vmatpush.bf16.msra.mxu0 %v6079
    %6403 = vmatpush.bf16.msra.mxu0 %v6078
    %6404 = vmatpush.bf16.msra.mxu0 %v6077
    %6405 = vmatpush.bf16.msra.mxu0 %v6076
    %6406 = vmatpush.bf16.msra.mxu0 %v6075
    %6407 = vmatpush.bf16.msra.mxu0 %v6074
    %6408 = vmatmul.bf16.gmra.mxu0 %v5432
    %v6409 = vpop.f32.mrf.mxu0
    %v6410 = vadd.f32 %v6397, %v6409
    %v6411 = vpop.f32.mrf.mxu0
    %6412 = vdwg.mxu0
    %6413 = vmatpush.bf16.msra.mxu0 %v6089
    %6414 = vmatpush.bf16.msra.mxu0 %v6088
    %6415 = vmatpush.bf16.msra.mxu0 %v6087
    %6416 = vmatpush.bf16.msra.mxu0 %v6086
    %6417 = vmatpush.bf16.msra.mxu0 %v6085
    %6418 = vmatpush.bf16.msra.mxu0 %v6084
    %6419 = vmatpush.bf16.msra.mxu0 %v6083
    %6420 = vmatpush.bf16.msra.mxu0 %v6082
    %6421 = vmatmul.bf16.gmra.mxu0 %v5433
    %v6422 = vpop.f32.mrf.mxu0
    %v6423 = vadd.f32 %v6410, %v6422
    %v6424 = vpop.f32.mrf.mxu0
    %6425 = vdwg.mxu0
    %v6426 = vpack.c.bf16 %v6423, %v6423
    %6427 = vst [vmem:[#allocation2] sm:$0x1] %v6426
    %vm6428 = vcmp.lt.s32.totalorder %v4378, 46
    %v6429 = vsel %vm6428, %v6423, -1e+30
    %vm6430 = vcmask 1041408
    %v6431 = vsel %vm6430, %v6429, -inf
    %6432 = vmax.xlane.f32.xlu0 %v6431
    %v6433 = vpop.xlane.xlu0 %6432
    %v6434 = vsub.f32 %v6429, %v6433
    %v6435 = vmul.f32 %v6434, 1.442695
    %v6436 = vpow.pop %v6435
    %v6437 = vsel %vm6430, %v6436, 0.0
    %6438 = vadd.xlane.f32.xlu0 %v6437
    %v6439 = vpop.xlane.xlu0 %6438
    %v6440 = vlog2.pop %v6439
    %v6441 = vmul.f32 %v6440, 0.6931472
    %v6442 = vadd.f32 %v6433, %v6441
    %v6443 = vld [vmem:[%s3] sm:$0x3]
    %6444 = vset.pattern.permute.xlu0 0
    %6445 = vperm.xlu0 %6444, %v6443
    %v6446 = vpop.permute.xlu0 %6445
    %vm6447 = vcmp.eq.s32.totalorder %v4378, %v6446
    %v6448 = vsel %vm6447, %v6423, 0.0
    %v6449 = vsel %vm6430, %v6448, 0.0
    %6450 = vadd.xlane.f32.xlu0 %v6449
    %v6451 = vpop.xlane.xlu0 %6450
    %v6452 = vsub.f32 %v6442, %v6451
    %vm6453 = vcmask 1024
    %6454 = vst.msk [vmem:[%s5] sm:$0x3] %vm6453, %v6452
    // Predicated region
    $region18: #{tpu_custom_call.1} parent=1 // pred_check
      _
    $region19: #{tpu_custom_call.1} parent=1 // pred_check_branch
      %6456 = sbr.rel (0) target = $region21
    $region20: #{tpu_custom_call.1} parent=1 // pred_region
      %6458 = vsyncadd [#allocation3], 0
      %s6460 = sshll.u32 [#allocation2], 4
      %s6461 = int_to_ptr.vmem [resolvable:$true] %s6460
      %s6462 = sshll.u32 %s4, 4
      %s6463 = int_to_ptr.hbm [resolvable:$true] %s6462
      %6465 = dma.vmem_to_hbm [thread:$0]  %s6461, 16, %s6463, [#allocation3]
    $region21: #{tpu_custom_call.1} parent=1 // pred_fallthru
      _
    // Predicated region
    $region22: #{tpu_custom_call.1} parent=1 // pred_check
      _
    $region23: #{tpu_custom_call.1} parent=1 // pred_check_branch
      %6467 = sbr.rel (0) target = $region25
    $region24: #{tpu_custom_call.1} parent=1 // pred_region
      _
    $region25: #{tpu_custom_call.1} parent=1 // pred_fallthru
      _
    // Predicated region
    $region26: #{tpu_custom_call.1} parent=1 // pred_check
      _
    $region27: #{tpu_custom_call.1} parent=1 // pred_check_branch
      %6469 = sbr.rel (0) target = $region29
    $region28: #{tpu_custom_call.1} parent=1 // pred_region
      %6471 = dma.done [#allocation3], 16
    $region29: #{tpu_custom_call.1} parent=1 // pred_fallthru
      _
    // Predicated region
    $region30: #{tpu_custom_call.1} parent=1 // pred_check
      _
    $region31: #{tpu_custom_call.1} parent=1 // pred_check_branch
      %6473 = sbr.rel (0) target = $region33
    $region32: #{tpu_custom_call.1} parent=1 // pred_region
      _
    $region33: #{tpu_custom_call.1} parent=1 // pred_fallthru
      _
    %6474 = vsyncpa [#allocation3], 1

</llo_original>
